<compile_context>
chip_gen: v7x
topology: tpu7x:2x2x1
jax: 0.10.0
libtpu: 0.0.40
codegen_flags: <defaults>
</compile_context>

<pallas_src>
import functools

import jax
import jax.numpy as jnp
from jax import lax
from jax.experimental import pallas as pl
from jax.experimental.pallas import tpu as pltpu

EPS = 1e-5


# ---------------------------------------------------------------------------
# Fused kernel
# ---------------------------------------------------------------------------
def convnet_kernel(xrow_ref,
                   w1_ref, t1_ref,
                   w2_ref, t2_ref,
                   w3_ref, t3_ref,
                   w4_ref, t4_ref,
                   wf1_hbm, tf1_ref,
                   wf2_ref, tf2_ref,
                   wf3_ref, tf3_ref,
                   o_ref,
                   halo_ref, wf1_vmem, wf1_sem,
                   *, NP, L):
    """Whole forward pass.  Activation rows r = l*NP + n (l-major, batch padded
    to NP=8); channels sit on lanes so every layer is an MXU matmul."""
    R = L * NP

    # fc1's big weight stays in HBM; stream it now and hide the DMA behind the
    # conv layers.  Waited on right before the fc1 contraction.
    wf1_cp = pltpu.make_async_copy(wf1_hbm, wf1_vmem, wf1_sem)
    wf1_cp.start()

    # Shared zero-halo activation scratch: rows [0:NP] and [R+NP:R+2NP] are
    # zeroed once and double as the conv 'same' padding for every layer.
    zrows = jnp.zeros((NP, halo_ref.shape[1]), jnp.float32)
    halo_ref[0:NP, :] = zrows
    halo_ref[R + NP:R + 2 * NP, :] = zrows

    def bn_relu(acc, t_ref):
        # BN scale is folded into the weights at repack time -> add + ReLU.
        return jnp.maximum(acc + t_ref[...], 0.0)

    def conv_bn_relu(h, w_ref, t_ref):
        # 'same' conv1d (k=3): store this layer's input into the halo'd
        # scratch once, read x[l-1]/x[l+1] as 8-row-aligned ref slices.
        cin = h.shape[1]
        cdtype = w_ref.dtype
        halo_ref[NP:NP + R, :cin] = h
        h_m1 = halo_ref[0:R, :cin].astype(cdtype)                 # x[l-1]
        h_p1 = halo_ref[2 * NP:2 * NP + R, :cin].astype(cdtype)   # x[l+1]
        acc = jnp.dot(h_m1, w_ref[0], preferred_element_type=jnp.float32)
        acc = acc + jnp.dot(h.astype(cdtype), w_ref[1],
                            preferred_element_type=jnp.float32)
        acc = acc + jnp.dot(h_p1, w_ref[2], preferred_element_type=jnp.float32)
        return bn_relu(acc, t_ref)

    # conv1 (Cin=1): three broadcasted VPU FMAs — no MXU pass, no host im2col.
    x = xrow_ref[...]                                  # (R, 1) f32
    halo_ref[NP:NP + R, 0:1] = x
    x_m1 = halo_ref[0:R, 0:1]
    x_p1 = halo_ref[2 * NP:2 * NP + R, 0:1]
    acc1 = x_m1 * w1_ref[0] + x * w1_ref[1] + x_p1 * w1_ref[2]
    h = bn_relu(acc1, t1_ref)                          # (R, 8)

    h = conv_bn_relu(h, w2_ref, t2_ref)                # (R, 32)
    h = conv_bn_relu(h, w3_ref, t3_ref)                # (R, 64)
    h = conv_bn_relu(h, w4_ref, t4_ref)                # (R, 128)

    # fc1: PyTorch flatten order (c*L + l) is folded into the pre-permuted
    # weight wf1[l, c, :].  Independent partial accumulators keep MXU pushes
    # back-to-back instead of serializing behind the accumulate adds.
    wf1_cp.wait()
    Hd = wf1_vmem.shape[2]
    n_acc = min(4, L)
    accs = [jnp.zeros((NP, Hd), jnp.float32) for _ in range(n_acc)]
    for l in range(L):                                 # static unroll; 8-row aligned slices
        a = h[l * NP:(l + 1) * NP, :].astype(wf1_vmem.dtype)
        accs[l % n_acc] = accs[l % n_acc] + jnp.dot(
            a, wf1_vmem[l], preferred_element_type=jnp.float32)
    acc = accs[0]
    for part in accs[1:]:
        acc = acc + part
    y = bn_relu(acc, tf1_ref)

    # fc2 + BN + ReLU   (dropout p=0.0 is identity)
    y = bn_relu(jnp.dot(y.astype(wf2_ref.dtype), wf2_ref[...],
                        preferred_element_type=jnp.float32), tf2_ref)

    # output layer + final ReLU (small, kept f32; shift = bias)
    y = bn_relu(jnp.dot(y, wf3_ref[...], preferred_element_type=jnp.float32),
                tf3_ref)

    # Store every padded batch row (unmasked sublanes); wrapper slices [:N].
    o_ref[...] = y.astype(o_ref.dtype)


# ---------------------------------------------------------------------------
# Host-side one-time parameter repacking and per-call input formatting
# ---------------------------------------------------------------------------
def fold_bn(bias, gamma, beta, mean, var):
    s = gamma / jnp.sqrt(var + EPS)
    return s, (bias - mean) * s + beta


def prepare_params(params, L):
    """One-time repack of PyTorch-layout params into the fused-kernel layout.

    BN scale is folded into the weight output-columns; large weights go to
    bf16 (the kernel is weight-DMA bound); fc1 is pre-permuted to wf1[l, c, :]
    so the flatten order needs no runtime transpose of the activation.
    """
    prep = []

    # conv1 (Cin=1): per-tap (1, 8) rows used as VPU broadcast FMAs (f32).
    p = params["conv"][0]
    s, t = fold_bn(p["b"], p["gamma"], p["beta"], p["mean"], p["var"])
    w = jnp.transpose(p["w"], (2, 1, 0)) * s                  # (3, 1, 8)
    prep += [w, t.reshape(1, -1)]

    # conv2 (tiny, keep f32) and conv3/conv4 (bf16): per-tap (3, Cin, Cout);
    # tap k multiplies x[l + k - 1].
    for li, p in enumerate(params["conv"][1:]):
        s, t = fold_bn(p["b"], p["gamma"], p["beta"], p["mean"], p["var"])
        w = jnp.transpose(p["w"], (2, 1, 0)) * s              # (3, Cin, Cout)
        if li > 0:                                            # conv3, conv4
            w = w.astype(jnp.bfloat16)
        prep += [w, t.reshape(1, -1)]

    # fc1: (L, 128, H) bf16, columns permuted (c*L + l) -> [l, c].
    p = params["fc"][0]
    s, t = fold_bn(p["b"], p["gamma"], p["beta"], p["mean"], p["var"])
    dout, din = p["w"].shape
    c = din // L
    w = (p["w"] * s[:, None]).reshape(dout, c, L)
    w = jnp.transpose(w, (2, 1, 0)).astype(jnp.bfloat16)      # (L, C, dout)
    prep += [w, t.reshape(1, -1)]

    # fc2: (H, H) bf16.
    p = params["fc"][1]
    s, t = fold_bn(p["b"], p["gamma"], p["beta"], p["mean"], p["var"])
    prep += [(jnp.transpose(p["w"]) * s).astype(jnp.bfloat16), t.reshape(1, -1)]

    # output layer: identity BN -> scale 1, shift = bias; small, keep f32.
    p = params["fc"][2]
    s, t = fold_bn(p["b"], p["gamma"], p["beta"], p["mean"], p["var"])
    prep += [jnp.transpose(p["w"]) * s, t.reshape(1, -1)]

    return tuple(prep)


def make_input_rows(x_ncl, NP):
    """(N,1,L) -> (L*NP, 1): rows r = l*NP + n (l-major), batch zero-padded.

    No host-side im2col / 'same' padding: the 3 conv taps and boundary zeros
    are produced inside the kernel by the zero-halo scratch."""
    N, _, L = x_ncl.shape
    xt = jnp.transpose(x_ncl.reshape(N, L))          # (L, N)
    xt = jnp.pad(xt, ((0, 0), (0, NP - N)))          # (L, NP)
    return xt.reshape(L * NP, 1)


@jax.jit
def pallas_forward(x_ncl, prep):
    N, _, L = x_ncl.shape
    NP = 8 * pl.cdiv(N, 8)            # batch padded to a sublane multiple
    R = L * NP
    H = prep[8].shape[2]              # fc1 hidden width (16 * dim_mod1)
    dim_out = prep[13].shape[1]       # output width (shift of the last layer)
    xrow = make_input_rows(x_ncl, NP)

    kernel = functools.partial(convnet_kernel, NP=NP, L=L)
    vspec = pl.BlockSpec(memory_space=pltpu.MemorySpace.VMEM)

    out = pl.pallas_call(
        kernel,
        out_shape=jax.ShapeDtypeStruct((NP, dim_out), jnp.float32),
        in_specs=([vspec] * 9                              # xrow + conv params
                  + [pl.BlockSpec(memory_space=pl.ANY)]    # wf1 stays in HBM
                  + [vspec] * 5),                          # tf1, wf2, tf2, wf3, tf3
        out_specs=vspec,
        scratch_shapes=[
            pltpu.VMEM((R + 2 * NP, 128), jnp.float32),    # zero-halo activations
            pltpu.VMEM((L, 128, H), jnp.bfloat16),         # fc1 weight landing buf
            pltpu.SemaphoreType.DMA(()),
        ],
        compiler_params=pltpu.CompilerParams(vmem_limit_bytes=32 * 1024 * 1024),
    )(xrow, *prep)
    # TODO(synk): for large batches add a batch grid axis with
    # dimension_semantics=("parallel",) (needed to use both v7x TensorCores)
    # and size the batch tile from v7x's 64 MiB VMEM, not v5e/v6e's 128 MiB.
    return out[:N]


# ---------------------------------------------------------------------------
# Parameter construction (deterministic, synthetic) and pure-JAX reference
# ---------------------------------------------------------------------------
def make_params(dim_mod1, dim_mod2, key):
    conv_dims = [(1, 8), (8, 32), (32, 64), (64, 128)]
    params = {"conv": [], "fc": []}
    for (cin, cout) in conv_dims:
        key, k1, k2, k3, k4, k5, k6 = jax.random.split(key, 7)
        w = 0.1 * jax.random.normal(k1, (cout, cin, 3), jnp.float32)   # PyTorch OIW
        b = 0.1 * jax.random.normal(k2, (cout,), jnp.float32)
        gamma = 1.0 + 0.1 * jax.random.normal(k3, (cout,), jnp.float32)
        beta = 0.1 * jax.random.normal(k4, (cout,), jnp.float32)
        mean = 0.1 * jax.random.normal(k5, (cout,), jnp.float32)
        var = 0.5 + jnp.abs(0.1 * jax.random.normal(k6, (cout,), jnp.float32))
        params["conv"].append(dict(w=w, b=b, gamma=gamma, beta=beta, mean=mean, var=var))

    hid = 16 * dim_mod1
    fc_dims = [(128 * dim_mod1, hid, True), (hid, hid, True), (hid, dim_mod2, False)]
    for (din, dout, has_bn) in fc_dims:
        key, k1, k2, k3, k4, k5, k6 = jax.random.split(key, 7)
        w = 0.05 * jax.random.normal(k1, (dout, din), jnp.float32)     # PyTorch (out, in)
        b = 0.1 * jax.random.normal(k2, (dout,), jnp.float32)
        if has_bn:
            gamma = 1.0 + 0.1 * jax.random.normal(k3, (dout,), jnp.float32)
            beta = 0.1 * jax.random.normal(k4, (dout,), jnp.float32)
            mean = 0.1 * jax.random.normal(k5, (dout,), jnp.float32)
            var = 0.5 + jnp.abs(0.1 * jax.random.normal(k6, (dout,), jnp.float32))
        else:
            gamma = jnp.ones((dout,), jnp.float32)
            beta = jnp.zeros((dout,), jnp.float32)
            mean = jnp.zeros((dout,), jnp.float32)
            var = jnp.ones((dout,), jnp.float32) - EPS  # -> scale 1, shift = bias
        params["fc"].append(dict(w=w, b=b, gamma=gamma, beta=beta, mean=mean, var=var))
    return params


def reference_forward(x_ncl, params):
    """Pure-JAX f32 reference mirroring the PyTorch module (eval-mode BN)."""
    h = x_ncl
    for p in params["conv"]:
        h = lax.conv_general_dilated(
            h, p["w"], window_strides=(1,), padding="SAME",
            dimension_numbers=("NCH", "OIH", "NCH"))
        h = h + p["b"][None, :, None]
        h = (h - p["mean"][None, :, None]) / jnp.sqrt(p["var"][None, :, None] + EPS)
        h = h * p["gamma"][None, :, None] + p["beta"][None, :, None]
        h = jnp.maximum(h, 0.0)
    h = h.reshape(h.shape[0], -1)
    for p in params["fc"]:
        h = h @ p["w"].T + p["b"]
        h = (h - p["mean"]) / jnp.sqrt(p["var"] + EPS) * p["gamma"] + p["beta"]
        h = jnp.maximum(h, 0.0)
    return h


# ---------------------------------------------------------------------------
if __name__ == "__main__":
    dim_mod1 = 16   # input sequence length L
    dim_mod2 = 8    # output dimension
    batch = 2

    key = jax.random.PRNGKey(0)
    key, kx = jax.random.split(key)
    x = jax.random.normal(kx, (batch, 1, dim_mod1), jnp.float32)  # NCW like PyTorch

    params = make_params(dim_mod1, dim_mod2, key)
    prep = prepare_params(params, dim_mod1)     # one-time weight repacking

    out = jax.block_until_ready(pallas_forward(x, prep))
    ref = reference_forward(x, params)

    assert out.shape == (batch, dim_mod2), out.shape
    max_err = jnp.max(jnp.abs(out - ref))
    # bf16 weights/activation operands -> loosened tolerance (f32 accumulate).
    assert jnp.allclose(out, ref, atol=3e-2, rtol=3e-2), f"max abs err {max_err}"

    print("KERNEL_OK")
</pallas_src>

<mosaic_0001>
module attributes {stable_mosaic.version = 11 : i64} {
  func.func @convnet_kernel(%arg0: memref<128x1xf32, #tpu.memory_space<vmem>>, %arg1: memref<3x1x8xf32, #tpu.memory_space<vmem>>, %arg2: memref<1x8xf32, #tpu.memory_space<vmem>>, %arg3: memref<3x8x32xf32, #tpu.memory_space<vmem>>, %arg4: memref<1x32xf32, #tpu.memory_space<vmem>>, %arg5: memref<3x32x64xbf16, #tpu.memory_space<vmem>>, %arg6: memref<1x64xf32, #tpu.memory_space<vmem>>, %arg7: memref<3x64x128xbf16, #tpu.memory_space<vmem>>, %arg8: memref<1x128xf32, #tpu.memory_space<vmem>>, %arg9: memref<16x128x256xbf16, #tpu.memory_space<any>>, %arg10: memref<1x256xf32, #tpu.memory_space<vmem>>, %arg11: memref<256x256xbf16, #tpu.memory_space<vmem>>, %arg12: memref<1x256xf32, #tpu.memory_space<vmem>>, %arg13: memref<256x8xf32, #tpu.memory_space<vmem>>, %arg14: memref<1x8xf32, #tpu.memory_space<vmem>>, %arg15: memref<8x8xf32, #tpu.memory_space<vmem>>, %arg16: memref<144x128xf32, #tpu.memory_space<vmem>>, %arg17: memref<16x128x256xbf16, #tpu.memory_space<vmem>>, %arg18: memref<!tpu.dma_semaphore, #tpu.memory_space<semaphore_mem>>) attributes {dimension_semantics = [], scalar_prefetch = 0 : i64, scratch_operands = 3 : i64, tpu.core_type = #tpu.core_type<tc>} {
    tpu.enqueue_dma source(%arg9 : memref<16x128x256xbf16, #tpu.memory_space<any>>) target(%arg17 : memref<16x128x256xbf16, #tpu.memory_space<vmem>>) target_semaphore(%arg18 : memref<!tpu.dma_semaphore, #tpu.memory_space<semaphore_mem>>)
    %cst = arith.constant 0.000000e+00 : f32
    %0 = vector.broadcast %cst : f32 to vector<8x128xf32>
    %c0 = arith.constant 0 : index
    %c0_0 = arith.constant 0 : index
    %1 = vector.load %arg16[%c0, %c0_0] : memref<144x128xf32, #tpu.memory_space<vmem>>, vector<8x128xf32>
    tpu.vector_store %arg16[%c0, %c0_0], %0 {strides = array<i32>} : memref<144x128xf32, #tpu.memory_space<vmem>>, vector<8x128xf32>,
    %c136 = arith.constant 136 : index
    %c0_1 = arith.constant 0 : index
    %2 = vector.load %arg16[%c136, %c0_1] : memref<144x128xf32, #tpu.memory_space<vmem>>, vector<8x128xf32>
    tpu.vector_store %arg16[%c136, %c0_1], %0 {strides = array<i32>} : memref<144x128xf32, #tpu.memory_space<vmem>>, vector<8x128xf32>,
    %c0_2 = arith.constant 0 : index
    %c0_3 = arith.constant 0 : index
    %3 = vector.load %arg0[%c0_2, %c0_3] : memref<128x1xf32, #tpu.memory_space<vmem>>, vector<128x1xf32>
    %c8 = arith.constant 8 : index
    %c0_4 = arith.constant 0 : index
    %4 = vector.load %arg16[%c8, %c0_4] : memref<144x128xf32, #tpu.memory_space<vmem>>, vector<128x1xf32>
    tpu.vector_store %arg16[%c8, %c0_4], %3 {strides = array<i32>} : memref<144x128xf32, #tpu.memory_space<vmem>>, vector<128x1xf32>,
    %c0_5 = arith.constant 0 : index
    %c0_6 = arith.constant 0 : index
    %5 = vector.load %arg16[%c0_5, %c0_6] : memref<144x128xf32, #tpu.memory_space<vmem>>, vector<128x1xf32>
    %c16 = arith.constant 16 : index
    %c0_7 = arith.constant 0 : index
    %6 = vector.load %arg16[%c16, %c0_7] : memref<144x128xf32, #tpu.memory_space<vmem>>, vector<128x1xf32>
    %c0_8 = arith.constant 0 : index
    %c0_9 = arith.constant 0 : index
    %c0_10 = arith.constant 0 : index
    %7 = vector.load %arg1[%c0_8, %c0_9, %c0_10] : memref<3x1x8xf32, #tpu.memory_space<vmem>>, vector<1x1x8xf32>
    %8 = vector.shape_cast %7 : vector<1x1x8xf32> to vector<1x8xf32>
    %9 = vector.broadcast %5 : vector<128x1xf32> to vector<128x8xf32>
    %10 = vector.broadcast %8 : vector<1x8xf32> to vector<128x8xf32>
    %11 = arith.mulf %9, %10 : vector<128x8xf32>
    %c1 = arith.constant 1 : index
    %c0_11 = arith.constant 0 : index
    %c0_12 = arith.constant 0 : index
    %12 = vector.load %arg1[%c1, %c0_11, %c0_12] : memref<3x1x8xf32, #tpu.memory_space<vmem>>, vector<1x1x8xf32>
    %13 = vector.shape_cast %12 : vector<1x1x8xf32> to vector<1x8xf32>
    %14 = vector.broadcast %3 : vector<128x1xf32> to vector<128x8xf32>
    %15 = vector.broadcast %13 : vector<1x8xf32> to vector<128x8xf32>
    %16 = arith.mulf %14, %15 : vector<128x8xf32>
    %17 = arith.addf %11, %16 : vector<128x8xf32>
    %c2 = arith.constant 2 : index
    %c0_13 = arith.constant 0 : index
    %c0_14 = arith.constant 0 : index
    %18 = vector.load %arg1[%c2, %c0_13, %c0_14] : memref<3x1x8xf32, #tpu.memory_space<vmem>>, vector<1x1x8xf32>
    %19 = vector.shape_cast %18 : vector<1x1x8xf32> to vector<1x8xf32>
    %20 = vector.broadcast %6 : vector<128x1xf32> to vector<128x8xf32>
    %21 = vector.broadcast %19 : vector<1x8xf32> to vector<128x8xf32>
    %22 = arith.mulf %20, %21 : vector<128x8xf32>
    %23 = arith.addf %17, %22 : vector<128x8xf32>
    %c0_15 = arith.constant 0 : index
    %c0_16 = arith.constant 0 : index
    %24 = vector.load %arg2[%c0_15, %c0_16] : memref<1x8xf32, #tpu.memory_space<vmem>>, vector<1x8xf32>
    %25 = vector.broadcast %24 : vector<1x8xf32> to vector<128x8xf32>
    %26 = arith.addf %23, %25 : vector<128x8xf32>
    %cst_17 = arith.constant 0.000000e+00 : f32
    %27 = vector.broadcast %cst_17 : f32 to vector<128x8xf32>
    %28 = arith.maximumf %26, %27 : vector<128x8xf32>
    %c8_18 = arith.constant 8 : index
    %c0_19 = arith.constant 0 : index
    %29 = vector.load %arg16[%c8_18, %c0_19] : memref<144x128xf32, #tpu.memory_space<vmem>>, vector<128x8xf32>
    tpu.vector_store %arg16[%c8_18, %c0_19], %28 {strides = array<i32>} : memref<144x128xf32, #tpu.memory_space<vmem>>, vector<128x8xf32>,
    %c0_20 = arith.constant 0 : index
    %c0_21 = arith.constant 0 : index
    %30 = vector.load %arg16[%c0_20, %c0_21] : memref<144x128xf32, #tpu.memory_space<vmem>>, vector<128x8xf32>
    %c16_22 = arith.constant 16 : index
    %c0_23 = arith.constant 0 : index
    %31 = vector.load %arg16[%c16_22, %c0_23] : memref<144x128xf32, #tpu.memory_space<vmem>>, vector<128x8xf32>
    %c0_24 = arith.constant 0 : index
    %c0_25 = arith.constant 0 : index
    %c0_26 = arith.constant 0 : index
    %32 = vector.load %arg3[%c0_24, %c0_25, %c0_26] : memref<3x8x32xf32, #tpu.memory_space<vmem>>, vector<1x8x32xf32>
    %33 = vector.shape_cast %32 : vector<1x8x32xf32> to vector<8x32xf32>
    %cst_27 = arith.constant dense<0.000000e+00> : vector<128x32xf32>
    %34 = tpu.matmul %30, %33, %cst_27 {dimension_numbers = #tpu.dot_dimension_numbers<[1], [0], [0], [1], [0, 0, 1, 1], [], []>} : vector<128x8xf32>, vector<8x32xf32>, vector<128x32xf32> -> vector<128x32xf32>
    %c1_28 = arith.constant 1 : index
    %c0_29 = arith.constant 0 : index
    %c0_30 = arith.constant 0 : index
    %35 = vector.load %arg3[%c1_28, %c0_29, %c0_30] : memref<3x8x32xf32, #tpu.memory_space<vmem>>, vector<1x8x32xf32>
    %36 = vector.shape_cast %35 : vector<1x8x32xf32> to vector<8x32xf32>
    %cst_31 = arith.constant dense<0.000000e+00> : vector<128x32xf32>
    %37 = tpu.matmul %28, %36, %cst_31 {dimension_numbers = #tpu.dot_dimension_numbers<[1], [0], [0], [1], [0, 0, 1, 1], [], []>} : vector<128x8xf32>, vector<8x32xf32>, vector<128x32xf32> -> vector<128x32xf32>
    %38 = arith.addf %34, %37 : vector<128x32xf32>
    %c2_32 = arith.constant 2 : index
    %c0_33 = arith.constant 0 : index
    %c0_34 = arith.constant 0 : index
    %39 = vector.load %arg3[%c2_32, %c0_33, %c0_34] : memref<3x8x32xf32, #tpu.memory_space<vmem>>, vector<1x8x32xf32>
    %40 = vector.shape_cast %39 : vector<1x8x32xf32> to vector<8x32xf32>
    %cst_35 = arith.constant dense<0.000000e+00> : vector<128x32xf32>
    %41 = tpu.matmul %31, %40, %cst_35 {dimension_numbers = #tpu.dot_dimension_numbers<[1], [0], [0], [1], [0, 0, 1, 1], [], []>} : vector<128x8xf32>, vector<8x32xf32>, vector<128x32xf32> -> vector<128x32xf32>
    %42 = arith.addf %38, %41 : vector<128x32xf32>
    %c0_36 = arith.constant 0 : index
    %c0_37 = arith.constant 0 : index
    %43 = vector.load %arg4[%c0_36, %c0_37] : memref<1x32xf32, #tpu.memory_space<vmem>>, vector<1x32xf32>
    %44 = vector.broadcast %43 : vector<1x32xf32> to vector<128x32xf32>
    %45 = arith.addf %42, %44 : vector<128x32xf32>
    %cst_38 = arith.constant 0.000000e+00 : f32
    %46 = vector.broadcast %cst_38 : f32 to vector<128x32xf32>
    %47 = arith.maximumf %45, %46 : vector<128x32xf32>
    %c8_39 = arith.constant 8 : index
    %c0_40 = arith.constant 0 : index
    %48 = vector.load %arg16[%c8_39, %c0_40] : memref<144x128xf32, #tpu.memory_space<vmem>>, vector<128x32xf32>
    tpu.vector_store %arg16[%c8_39, %c0_40], %47 {strides = array<i32>} : memref<144x128xf32, #tpu.memory_space<vmem>>, vector<128x32xf32>,
    %c0_41 = arith.constant 0 : index
    %c0_42 = arith.constant 0 : index
    %49 = vector.load %arg16[%c0_41, %c0_42] : memref<144x128xf32, #tpu.memory_space<vmem>>, vector<128x32xf32>
    %50 = arith.truncf %49 : vector<128x32xf32> to vector<128x32xbf16>
    %c16_43 = arith.constant 16 : index
    %c0_44 = arith.constant 0 : index
    %51 = vector.load %arg16[%c16_43, %c0_44] : memref<144x128xf32, #tpu.memory_space<vmem>>, vector<128x32xf32>
    %52 = arith.truncf %51 : vector<128x32xf32> to vector<128x32xbf16>
    %c0_45 = arith.constant 0 : index
    %c0_46 = arith.constant 0 : index
    %c0_47 = arith.constant 0 : index
    %53 = vector.load %arg5[%c0_45, %c0_46, %c0_47] : memref<3x32x64xbf16, #tpu.memory_space<vmem>>, vector<1x32x64xbf16>
    %54 = vector.shape_cast %53 : vector<1x32x64xbf16> to vector<32x64xbf16>
    %cst_48 = arith.constant dense<0.000000e+00> : vector<128x64xf32>
    %55 = tpu.matmul %50, %54, %cst_48 {dimension_numbers = #tpu.dot_dimension_numbers<[1], [0], [0], [1], [0, 0, 1, 1], [], []>} : vector<128x32xbf16>, vector<32x64xbf16>, vector<128x64xf32> -> vector<128x64xf32>
    %56 = arith.truncf %47 : vector<128x32xf32> to vector<128x32xbf16>
    %c1_49 = arith.constant 1 : index
    %c0_50 = arith.constant 0 : index
    %c0_51 = arith.constant 0 : index
    %57 = vector.load %arg5[%c1_49, %c0_50, %c0_51] : memref<3x32x64xbf16, #tpu.memory_space<vmem>>, vector<1x32x64xbf16>
    %58 = vector.shape_cast %57 : vector<1x32x64xbf16> to vector<32x64xbf16>
    %cst_52 = arith.constant dense<0.000000e+00> : vector<128x64xf32>
    %59 = tpu.matmul %56, %58, %cst_52 {dimension_numbers = #tpu.dot_dimension_numbers<[1], [0], [0], [1], [0, 0, 1, 1], [], []>} : vector<128x32xbf16>, vector<32x64xbf16>, vector<128x64xf32> -> vector<128x64xf32>
    %60 = arith.addf %55, %59 : vector<128x64xf32>
    %c2_53 = arith.constant 2 : index
    %c0_54 = arith.constant 0 : index
    %c0_55 = arith.constant 0 : index
    %61 = vector.load %arg5[%c2_53, %c0_54, %c0_55] : memref<3x32x64xbf16, #tpu.memory_space<vmem>>, vector<1x32x64xbf16>
    %62 = vector.shape_cast %61 : vector<1x32x64xbf16> to vector<32x64xbf16>
    %cst_56 = arith.constant dense<0.000000e+00> : vector<128x64xf32>
    %63 = tpu.matmul %52, %62, %cst_56 {dimension_numbers = #tpu.dot_dimension_numbers<[1], [0], [0], [1], [0, 0, 1, 1], [], []>} : vector<128x32xbf16>, vector<32x64xbf16>, vector<128x64xf32> -> vector<128x64xf32>
    %64 = arith.addf %60, %63 : vector<128x64xf32>
    %c0_57 = arith.constant 0 : index
    %c0_58 = arith.constant 0 : index
    %65 = vector.load %arg6[%c0_57, %c0_58] : memref<1x64xf32, #tpu.memory_space<vmem>>, vector<1x64xf32>
    %66 = vector.broadcast %65 : vector<1x64xf32> to vector<128x64xf32>
    %67 = arith.addf %64, %66 : vector<128x64xf32>
    %cst_59 = arith.constant 0.000000e+00 : f32
    %68 = vector.broadcast %cst_59 : f32 to vector<128x64xf32>
    %69 = arith.maximumf %67, %68 : vector<128x64xf32>
    %c8_60 = arith.constant 8 : index
    %c0_61 = arith.constant 0 : index
    %70 = vector.load %arg16[%c8_60, %c0_61] : memref<144x128xf32, #tpu.memory_space<vmem>>, vector<128x64xf32>
    tpu.vector_store %arg16[%c8_60, %c0_61], %69 {strides = array<i32>} : memref<144x128xf32, #tpu.memory_space<vmem>>, vector<128x64xf32>,
    %c0_62 = arith.constant 0 : index
    %c0_63 = arith.constant 0 : index
    %71 = vector.load %arg16[%c0_62, %c0_63] : memref<144x128xf32, #tpu.memory_space<vmem>>, vector<128x64xf32>
    %72 = arith.truncf %71 : vector<128x64xf32> to vector<128x64xbf16>
    %c16_64 = arith.constant 16 : index
    %c0_65 = arith.constant 0 : index
    %73 = vector.load %arg16[%c16_64, %c0_65] : memref<144x128xf32, #tpu.memory_space<vmem>>, vector<128x64xf32>
    %74 = arith.truncf %73 : vector<128x64xf32> to vector<128x64xbf16>
    %c0_66 = arith.constant 0 : index
    %c0_67 = arith.constant 0 : index
    %c0_68 = arith.constant 0 : index
    %75 = vector.load %arg7[%c0_66, %c0_67, %c0_68] : memref<3x64x128xbf16, #tpu.memory_space<vmem>>, vector<1x64x128xbf16>
    %76 = vector.shape_cast %75 : vector<1x64x128xbf16> to vector<64x128xbf16>
    %cst_69 = arith.constant dense<0.000000e+00> : vector<128x128xf32>
    %77 = tpu.matmul %72, %76, %cst_69 {dimension_numbers = #tpu.dot_dimension_numbers<[1], [0], [0], [1], [0, 0, 1, 1], [], []>} : vector<128x64xbf16>, vector<64x128xbf16>, vector<128x128xf32> -> vector<128x128xf32>
    %78 = arith.truncf %69 : vector<128x64xf32> to vector<128x64xbf16>
    %c1_70 = arith.constant 1 : index
    %c0_71 = arith.constant 0 : index
    %c0_72 = arith.constant 0 : index
    %79 = vector.load %arg7[%c1_70, %c0_71, %c0_72] : memref<3x64x128xbf16, #tpu.memory_space<vmem>>, vector<1x64x128xbf16>
    %80 = vector.shape_cast %79 : vector<1x64x128xbf16> to vector<64x128xbf16>
    %cst_73 = arith.constant dense<0.000000e+00> : vector<128x128xf32>
    %81 = tpu.matmul %78, %80, %cst_73 {dimension_numbers = #tpu.dot_dimension_numbers<[1], [0], [0], [1], [0, 0, 1, 1], [], []>} : vector<128x64xbf16>, vector<64x128xbf16>, vector<128x128xf32> -> vector<128x128xf32>
    %82 = arith.addf %77, %81 : vector<128x128xf32>
    %c2_74 = arith.constant 2 : index
    %c0_75 = arith.constant 0 : index
    %c0_76 = arith.constant 0 : index
    %83 = vector.load %arg7[%c2_74, %c0_75, %c0_76] : memref<3x64x128xbf16, #tpu.memory_space<vmem>>, vector<1x64x128xbf16>
    %84 = vector.shape_cast %83 : vector<1x64x128xbf16> to vector<64x128xbf16>
    %cst_77 = arith.constant dense<0.000000e+00> : vector<128x128xf32>
    %85 = tpu.matmul %74, %84, %cst_77 {dimension_numbers = #tpu.dot_dimension_numbers<[1], [0], [0], [1], [0, 0, 1, 1], [], []>} : vector<128x64xbf16>, vector<64x128xbf16>, vector<128x128xf32> -> vector<128x128xf32>
    %86 = arith.addf %82, %85 : vector<128x128xf32>
    %c0_78 = arith.constant 0 : index
    %c0_79 = arith.constant 0 : index
    %87 = vector.load %arg8[%c0_78, %c0_79] : memref<1x128xf32, #tpu.memory_space<vmem>>, vector<1x128xf32>
    %88 = vector.broadcast %87 : vector<1x128xf32> to vector<128x128xf32>
    %89 = arith.addf %86, %88 : vector<128x128xf32>
    %cst_80 = arith.constant 0.000000e+00 : f32
    %90 = vector.broadcast %cst_80 : f32 to vector<128x128xf32>
    %91 = arith.maximumf %89, %90 : vector<128x128xf32>
    tpu.wait_dma2 semaphore(%arg18 : memref<!tpu.dma_semaphore, #tpu.memory_space<semaphore_mem>>) src(%arg9 : memref<16x128x256xbf16, #tpu.memory_space<any>>) dst(%arg17 : memref<16x128x256xbf16, #tpu.memory_space<vmem>>)
    %cst_81 = arith.constant 0.000000e+00 : f32
    %92 = vector.broadcast %cst_81 : f32 to vector<8x256xf32>
    %cst_82 = arith.constant 0.000000e+00 : f32
    %93 = vector.broadcast %cst_82 : f32 to vector<8x256xf32>
    %cst_83 = arith.constant 0.000000e+00 : f32
    %94 = vector.broadcast %cst_83 : f32 to vector<8x256xf32>
    %cst_84 = arith.constant 0.000000e+00 : f32
    %95 = vector.broadcast %cst_84 : f32 to vector<8x256xf32>
    %96 = vector.extract_strided_slice %91 {offsets = [0, 0], sizes = [8, 128], strides = [1, 1]} : vector<128x128xf32> to vector<8x128xf32>
    %97 = arith.truncf %96 : vector<8x128xf32> to vector<8x128xbf16>
    %c0_85 = arith.constant 0 : index
    %c0_86 = arith.constant 0 : index
    %c0_87 = arith.constant 0 : index
    %98 = vector.load %arg17[%c0_85, %c0_86, %c0_87] : memref<16x128x256xbf16, #tpu.memory_space<vmem>>, vector<1x128x256xbf16>
    %99 = vector.shape_cast %98 : vector<1x128x256xbf16> to vector<128x256xbf16>
    %cst_88 = arith.constant dense<0.000000e+00> : vector<8x256xf32>
    %100 = tpu.matmul %97, %99, %cst_88 {dimension_numbers = #tpu.dot_dimension_numbers<[1], [0], [0], [1], [0, 0, 1, 1], [], []>} : vector<8x128xbf16>, vector<128x256xbf16>, vector<8x256xf32> -> vector<8x256xf32>
    %101 = arith.addf %92, %100 : vector<8x256xf32>
    %102 = vector.extract_strided_slice %91 {offsets = [8, 0], sizes = [8, 128], strides = [1, 1]} : vector<128x128xf32> to vector<8x128xf32>
    %103 = arith.truncf %102 : vector<8x128xf32> to vector<8x128xbf16>
    %c1_89 = arith.constant 1 : index
    %c0_90 = arith.constant 0 : index
    %c0_91 = arith.constant 0 : index
    %104 = vector.load %arg17[%c1_89, %c0_90, %c0_91] : memref<16x128x256xbf16, #tpu.memory_space<vmem>>, vector<1x128x256xbf16>
    %105 = vector.shape_cast %104 : vector<1x128x256xbf16> to vector<128x256xbf16>
    %cst_92 = arith.constant dense<0.000000e+00> : vector<8x256xf32>
    %106 = tpu.matmul %103, %105, %cst_92 {dimension_numbers = #tpu.dot_dimension_numbers<[1], [0], [0], [1], [0, 0, 1, 1], [], []>} : vector<8x128xbf16>, vector<128x256xbf16>, vector<8x256xf32> -> vector<8x256xf32>
    %107 = arith.addf %93, %106 : vector<8x256xf32>
    %108 = vector.extract_strided_slice %91 {offsets = [16, 0], sizes = [8, 128], strides = [1, 1]} : vector<128x128xf32> to vector<8x128xf32>
    %109 = arith.truncf %108 : vector<8x128xf32> to vector<8x128xbf16>
    %c2_93 = arith.constant 2 : index
    %c0_94 = arith.constant 0 : index
    %c0_95 = arith.constant 0 : index
    %110 = vector.load %arg17[%c2_93, %c0_94, %c0_95] : memref<16x128x256xbf16, #tpu.memory_space<vmem>>, vector<1x128x256xbf16>
    %111 = vector.shape_cast %110 : vector<1x128x256xbf16> to vector<128x256xbf16>
    %cst_96 = arith.constant dense<0.000000e+00> : vector<8x256xf32>
    %112 = tpu.matmul %109, %111, %cst_96 {dimension_numbers = #tpu.dot_dimension_numbers<[1], [0], [0], [1], [0, 0, 1, 1], [], []>} : vector<8x128xbf16>, vector<128x256xbf16>, vector<8x256xf32> -> vector<8x256xf32>
    %113 = arith.addf %94, %112 : vector<8x256xf32>
    %114 = vector.extract_strided_slice %91 {offsets = [24, 0], sizes = [8, 128], strides = [1, 1]} : vector<128x128xf32> to vector<8x128xf32>
    %115 = arith.truncf %114 : vector<8x128xf32> to vector<8x128xbf16>
    %c3 = arith.constant 3 : index
    %c0_97 = arith.constant 0 : index
    %c0_98 = arith.constant 0 : index
    %116 = vector.load %arg17[%c3, %c0_97, %c0_98] : memref<16x128x256xbf16, #tpu.memory_space<vmem>>, vector<1x128x256xbf16>
    %117 = vector.shape_cast %116 : vector<1x128x256xbf16> to vector<128x256xbf16>
    %cst_99 = arith.constant dense<0.000000e+00> : vector<8x256xf32>
    %118 = tpu.matmul %115, %117, %cst_99 {dimension_numbers = #tpu.dot_dimension_numbers<[1], [0], [0], [1], [0, 0, 1, 1], [], []>} : vector<8x128xbf16>, vector<128x256xbf16>, vector<8x256xf32> -> vector<8x256xf32>
    %119 = arith.addf %95, %118 : vector<8x256xf32>
    %120 = vector.extract_strided_slice %91 {offsets = [32, 0], sizes = [8, 128], strides = [1, 1]} : vector<128x128xf32> to vector<8x128xf32>
    %121 = arith.truncf %120 : vector<8x128xf32> to vector<8x128xbf16>
    %c4 = arith.constant 4 : index
    %c0_100 = arith.constant 0 : index
    %c0_101 = arith.constant 0 : index
    %122 = vector.load %arg17[%c4, %c0_100, %c0_101] : memref<16x128x256xbf16, #tpu.memory_space<vmem>>, vector<1x128x256xbf16>
    %123 = vector.shape_cast %122 : vector<1x128x256xbf16> to vector<128x256xbf16>
    %cst_102 = arith.constant dense<0.000000e+00> : vector<8x256xf32>
    %124 = tpu.matmul %121, %123, %cst_102 {dimension_numbers = #tpu.dot_dimension_numbers<[1], [0], [0], [1], [0, 0, 1, 1], [], []>} : vector<8x128xbf16>, vector<128x256xbf16>, vector<8x256xf32> -> vector<8x256xf32>
    %125 = arith.addf %101, %124 : vector<8x256xf32>
    %126 = vector.extract_strided_slice %91 {offsets = [40, 0], sizes = [8, 128], strides = [1, 1]} : vector<128x128xf32> to vector<8x128xf32>
    %127 = arith.truncf %126 : vector<8x128xf32> to vector<8x128xbf16>
    %c5 = arith.constant 5 : index
    %c0_103 = arith.constant 0 : index
    %c0_104 = arith.constant 0 : index
    %128 = vector.load %arg17[%c5, %c0_103, %c0_104] : memref<16x128x256xbf16, #tpu.memory_space<vmem>>, vector<1x128x256xbf16>
    %129 = vector.shape_cast %128 : vector<1x128x256xbf16> to vector<128x256xbf16>
    %cst_105 = arith.constant dense<0.000000e+00> : vector<8x256xf32>
    %130 = tpu.matmul %127, %129, %cst_105 {dimension_numbers = #tpu.dot_dimension_numbers<[1], [0], [0], [1], [0, 0, 1, 1], [], []>} : vector<8x128xbf16>, vector<128x256xbf16>, vector<8x256xf32> -> vector<8x256xf32>
    %131 = arith.addf %107, %130 : vector<8x256xf32>
    %132 = vector.extract_strided_slice %91 {offsets = [48, 0], sizes = [8, 128], strides = [1, 1]} : vector<128x128xf32> to vector<8x128xf32>
    %133 = arith.truncf %132 : vector<8x128xf32> to vector<8x128xbf16>
    %c6 = arith.constant 6 : index
    %c0_106 = arith.constant 0 : index
    %c0_107 = arith.constant 0 : index
    %134 = vector.load %arg17[%c6, %c0_106, %c0_107] : memref<16x128x256xbf16, #tpu.memory_space<vmem>>, vector<1x128x256xbf16>
    %135 = vector.shape_cast %134 : vector<1x128x256xbf16> to vector<128x256xbf16>
    %cst_108 = arith.constant dense<0.000000e+00> : vector<8x256xf32>
    %136 = tpu.matmul %133, %135, %cst_108 {dimension_numbers = #tpu.dot_dimension_numbers<[1], [0], [0], [1], [0, 0, 1, 1], [], []>} : vector<8x128xbf16>, vector<128x256xbf16>, vector<8x256xf32> -> vector<8x256xf32>
    %137 = arith.addf %113, %136 : vector<8x256xf32>
    %138 = vector.extract_strided_slice %91 {offsets = [56, 0], sizes = [8, 128], strides = [1, 1]} : vector<128x128xf32> to vector<8x128xf32>
    %139 = arith.truncf %138 : vector<8x128xf32> to vector<8x128xbf16>
    %c7 = arith.constant 7 : index
    %c0_109 = arith.constant 0 : index
    %c0_110 = arith.constant 0 : index
    %140 = vector.load %arg17[%c7, %c0_109, %c0_110] : memref<16x128x256xbf16, #tpu.memory_space<vmem>>, vector<1x128x256xbf16>
    %141 = vector.shape_cast %140 : vector<1x128x256xbf16> to vector<128x256xbf16>
    %cst_111 = arith.constant dense<0.000000e+00> : vector<8x256xf32>
    %142 = tpu.matmul %139, %141, %cst_111 {dimension_numbers = #tpu.dot_dimension_numbers<[1], [0], [0], [1], [0, 0, 1, 1], [], []>} : vector<8x128xbf16>, vector<128x256xbf16>, vector<8x256xf32> -> vector<8x256xf32>
    %143 = arith.addf %119, %142 : vector<8x256xf32>
    %144 = vector.extract_strided_slice %91 {offsets = [64, 0], sizes = [8, 128], strides = [1, 1]} : vector<128x128xf32> to vector<8x128xf32>
    %145 = arith.truncf %144 : vector<8x128xf32> to vector<8x128xbf16>
    %c8_112 = arith.constant 8 : index
    %c0_113 = arith.constant 0 : index
    %c0_114 = arith.constant 0 : index
    %146 = vector.load %arg17[%c8_112, %c0_113, %c0_114] : memref<16x128x256xbf16, #tpu.memory_space<vmem>>, vector<1x128x256xbf16>
    %147 = vector.shape_cast %146 : vector<1x128x256xbf16> to vector<128x256xbf16>
    %cst_115 = arith.constant dense<0.000000e+00> : vector<8x256xf32>
    %148 = tpu.matmul %145, %147, %cst_115 {dimension_numbers = #tpu.dot_dimension_numbers<[1], [0], [0], [1], [0, 0, 1, 1], [], []>} : vector<8x128xbf16>, vector<128x256xbf16>, vector<8x256xf32> -> vector<8x256xf32>
    %149 = arith.addf %125, %148 : vector<8x256xf32>
    %150 = vector.extract_strided_slice %91 {offsets = [72, 0], sizes = [8, 128], strides = [1, 1]} : vector<128x128xf32> to vector<8x128xf32>
    %151 = arith.truncf %150 : vector<8x128xf32> to vector<8x128xbf16>
    %c9 = arith.constant 9 : index
    %c0_116 = arith.constant 0 : index
    %c0_117 = arith.constant 0 : index
    %152 = vector.load %arg17[%c9, %c0_116, %c0_117] : memref<16x128x256xbf16, #tpu.memory_space<vmem>>, vector<1x128x256xbf16>
    %153 = vector.shape_cast %152 : vector<1x128x256xbf16> to vector<128x256xbf16>
    %cst_118 = arith.constant dense<0.000000e+00> : vector<8x256xf32>
    %154 = tpu.matmul %151, %153, %cst_118 {dimension_numbers = #tpu.dot_dimension_numbers<[1], [0], [0], [1], [0, 0, 1, 1], [], []>} : vector<8x128xbf16>, vector<128x256xbf16>, vector<8x256xf32> -> vector<8x256xf32>
    %155 = arith.addf %131, %154 : vector<8x256xf32>
    %156 = vector.extract_strided_slice %91 {offsets = [80, 0], sizes = [8, 128], strides = [1, 1]} : vector<128x128xf32> to vector<8x128xf32>
    %157 = arith.truncf %156 : vector<8x128xf32> to vector<8x128xbf16>
    %c10 = arith.constant 10 : index
    %c0_119 = arith.constant 0 : index
    %c0_120 = arith.constant 0 : index
    %158 = vector.load %arg17[%c10, %c0_119, %c0_120] : memref<16x128x256xbf16, #tpu.memory_space<vmem>>, vector<1x128x256xbf16>
    %159 = vector.shape_cast %158 : vector<1x128x256xbf16> to vector<128x256xbf16>
    %cst_121 = arith.constant dense<0.000000e+00> : vector<8x256xf32>
    %160 = tpu.matmul %157, %159, %cst_121 {dimension_numbers = #tpu.dot_dimension_numbers<[1], [0], [0], [1], [0, 0, 1, 1], [], []>} : vector<8x128xbf16>, vector<128x256xbf16>, vector<8x256xf32> -> vector<8x256xf32>
    %161 = arith.addf %137, %160 : vector<8x256xf32>
    %162 = vector.extract_strided_slice %91 {offsets = [88, 0], sizes = [8, 128], strides = [1, 1]} : vector<128x128xf32> to vector<8x128xf32>
    %163 = arith.truncf %162 : vector<8x128xf32> to vector<8x128xbf16>
    %c11 = arith.constant 11 : index
    %c0_122 = arith.constant 0 : index
    %c0_123 = arith.constant 0 : index
    %164 = vector.load %arg17[%c11, %c0_122, %c0_123] : memref<16x128x256xbf16, #tpu.memory_space<vmem>>, vector<1x128x256xbf16>
    %165 = vector.shape_cast %164 : vector<1x128x256xbf16> to vector<128x256xbf16>
    %cst_124 = arith.constant dense<0.000000e+00> : vector<8x256xf32>
    %166 = tpu.matmul %163, %165, %cst_124 {dimension_numbers = #tpu.dot_dimension_numbers<[1], [0], [0], [1], [0, 0, 1, 1], [], []>} : vector<8x128xbf16>, vector<128x256xbf16>, vector<8x256xf32> -> vector<8x256xf32>
    %167 = arith.addf %143, %166 : vector<8x256xf32>
    %168 = vector.extract_strided_slice %91 {offsets = [96, 0], sizes = [8, 128], strides = [1, 1]} : vector<128x128xf32> to vector<8x128xf32>
    %169 = arith.truncf %168 : vector<8x128xf32> to vector<8x128xbf16>
    %c12 = arith.constant 12 : index
    %c0_125 = arith.constant 0 : index
    %c0_126 = arith.constant 0 : index
    %170 = vector.load %arg17[%c12, %c0_125, %c0_126] : memref<16x128x256xbf16, #tpu.memory_space<vmem>>, vector<1x128x256xbf16>
    %171 = vector.shape_cast %170 : vector<1x128x256xbf16> to vector<128x256xbf16>
    %cst_127 = arith.constant dense<0.000000e+00> : vector<8x256xf32>
    %172 = tpu.matmul %169, %171, %cst_127 {dimension_numbers = #tpu.dot_dimension_numbers<[1], [0], [0], [1], [0, 0, 1, 1], [], []>} : vector<8x128xbf16>, vector<128x256xbf16>, vector<8x256xf32> -> vector<8x256xf32>
    %173 = arith.addf %149, %172 : vector<8x256xf32>
    %174 = vector.extract_strided_slice %91 {offsets = [104, 0], sizes = [8, 128], strides = [1, 1]} : vector<128x128xf32> to vector<8x128xf32>
    %175 = arith.truncf %174 : vector<8x128xf32> to vector<8x128xbf16>
    %c13 = arith.constant 13 : index
    %c0_128 = arith.constant 0 : index
    %c0_129 = arith.constant 0 : index
    %176 = vector.load %arg17[%c13, %c0_128, %c0_129] : memref<16x128x256xbf16, #tpu.memory_space<vmem>>, vector<1x128x256xbf16>
    %177 = vector.shape_cast %176 : vector<1x128x256xbf16> to vector<128x256xbf16>
    %cst_130 = arith.constant dense<0.000000e+00> : vector<8x256xf32>
    %178 = tpu.matmul %175, %177, %cst_130 {dimension_numbers = #tpu.dot_dimension_numbers<[1], [0], [0], [1], [0, 0, 1, 1], [], []>} : vector<8x128xbf16>, vector<128x256xbf16>, vector<8x256xf32> -> vector<8x256xf32>
    %179 = arith.addf %155, %178 : vector<8x256xf32>
    %180 = vector.extract_strided_slice %91 {offsets = [112, 0], sizes = [8, 128], strides = [1, 1]} : vector<128x128xf32> to vector<8x128xf32>
    %181 = arith.truncf %180 : vector<8x128xf32> to vector<8x128xbf16>
    %c14 = arith.constant 14 : index
    %c0_131 = arith.constant 0 : index
    %c0_132 = arith.constant 0 : index
    %182 = vector.load %arg17[%c14, %c0_131, %c0_132] : memref<16x128x256xbf16, #tpu.memory_space<vmem>>, vector<1x128x256xbf16>
    %183 = vector.shape_cast %182 : vector<1x128x256xbf16> to vector<128x256xbf16>
    %cst_133 = arith.constant dense<0.000000e+00> : vector<8x256xf32>
    %184 = tpu.matmul %181, %183, %cst_133 {dimension_numbers = #tpu.dot_dimension_numbers<[1], [0], [0], [1], [0, 0, 1, 1], [], []>} : vector<8x128xbf16>, vector<128x256xbf16>, vector<8x256xf32> -> vector<8x256xf32>
    %185 = arith.addf %161, %184 : vector<8x256xf32>
    %186 = vector.extract_strided_slice %91 {offsets = [120, 0], sizes = [8, 128], strides = [1, 1]} : vector<128x128xf32> to vector<8x128xf32>
    %187 = arith.truncf %186 : vector<8x128xf32> to vector<8x128xbf16>
    %c15 = arith.constant 15 : index
    %c0_134 = arith.constant 0 : index
    %c0_135 = arith.constant 0 : index
    %188 = vector.load %arg17[%c15, %c0_134, %c0_135] : memref<16x128x256xbf16, #tpu.memory_space<vmem>>, vector<1x128x256xbf16>
    %189 = vector.shape_cast %188 : vector<1x128x256xbf16> to vector<128x256xbf16>
    %cst_136 = arith.constant dense<0.000000e+00> : vector<8x256xf32>
    %190 = tpu.matmul %187, %189, %cst_136 {dimension_numbers = #tpu.dot_dimension_numbers<[1], [0], [0], [1], [0, 0, 1, 1], [], []>} : vector<8x128xbf16>, vector<128x256xbf16>, vector<8x256xf32> -> vector<8x256xf32>
    %191 = arith.addf %167, %190 : vector<8x256xf32>
    %192 = arith.addf %173, %179 : vector<8x256xf32>
    %193 = arith.addf %192, %185 : vector<8x256xf32>
    %194 = arith.addf %193, %191 : vector<8x256xf32>
    %c0_137 = arith.constant 0 : index
    %c0_138 = arith.constant 0 : index
    %195 = vector.load %arg10[%c0_137, %c0_138] : memref<1x256xf32, #tpu.memory_space<vmem>>, vector<1x256xf32>
    %196 = vector.broadcast %195 : vector<1x256xf32> to vector<8x256xf32>
    %197 = arith.addf %194, %196 : vector<8x256xf32>
    %cst_139 = arith.constant 0.000000e+00 : f32
    %198 = vector.broadcast %cst_139 : f32 to vector<8x256xf32>
    %199 = arith.maximumf %197, %198 : vector<8x256xf32>
    %200 = arith.truncf %199 : vector<8x256xf32> to vector<8x256xbf16>
    %c0_140 = arith.constant 0 : index
    %c0_141 = arith.constant 0 : index
    %201 = vector.load %arg11[%c0_140, %c0_141] : memref<256x256xbf16, #tpu.memory_space<vmem>>, vector<256x256xbf16>
    %cst_142 = arith.constant dense<0.000000e+00> : vector<8x256xf32>
    %202 = tpu.matmul %200, %201, %cst_142 {dimension_numbers = #tpu.dot_dimension_numbers<[1], [0], [0], [1], [0, 0, 1, 1], [], []>} : vector<8x256xbf16>, vector<256x256xbf16>, vector<8x256xf32> -> vector<8x256xf32>
    %c0_143 = arith.constant 0 : index
    %c0_144 = arith.constant 0 : index
    %203 = vector.load %arg12[%c0_143, %c0_144] : memref<1x256xf32, #tpu.memory_space<vmem>>, vector<1x256xf32>
    %204 = vector.broadcast %203 : vector<1x256xf32> to vector<8x256xf32>
    %205 = arith.addf %202, %204 : vector<8x256xf32>
    %cst_145 = arith.constant 0.000000e+00 : f32
    %206 = vector.broadcast %cst_145 : f32 to vector<8x256xf32>
    %207 = arith.maximumf %205, %206 : vector<8x256xf32>
    %c0_146 = arith.constant 0 : index
    %c0_147 = arith.constant 0 : index
    %208 = vector.load %arg13[%c0_146, %c0_147] : memref<256x8xf32, #tpu.memory_space<vmem>>, vector<256x8xf32>
    %cst_148 = arith.constant dense<0.000000e+00> : vector<8x8xf32>
    %209 = tpu.matmul %207, %208, %cst_148 {dimension_numbers = #tpu.dot_dimension_numbers<[1], [0], [0], [1], [0, 0, 1, 1], [], []>} : vector<8x256xf32>, vector<256x8xf32>, vector<8x8xf32> -> vector<8x8xf32>
    %c0_149 = arith.constant 0 : index
    %c0_150 = arith.constant 0 : index
    %210 = vector.load %arg14[%c0_149, %c0_150] : memref<1x8xf32, #tpu.memory_space<vmem>>, vector<1x8xf32>
    %211 = vector.broadcast %210 : vector<1x8xf32> to vector<8x8xf32>
    %212 = arith.addf %209, %211 : vector<8x8xf32>
    %cst_151 = arith.constant 0.000000e+00 : f32
    %213 = vector.broadcast %cst_151 : f32 to vector<8x8xf32>
    %214 = arith.maximumf %212, %213 : vector<8x8xf32>
    %c0_152 = arith.constant 0 : index
    %c0_153 = arith.constant 0 : index
    %215 = vector.load %arg15[%c0_152, %c0_153] : memref<8x8xf32, #tpu.memory_space<vmem>>, vector<8x8xf32>
    tpu.vector_store %arg15[%c0_152, %c0_153], %214 {strides = array<i32>} : memref<8x8xf32, #tpu.memory_space<vmem>>, vector<8x8xf32>,
    return
  }
}

</mosaic_0001>

<llo_original>
// kernel: pallas_forward.1
$region0: #{pallas_forward.1}
  #allocation0 [shape = 'u32[]', space=smem, size = 0x4, offset = 0x4, fixed_abs, tag = 'smem constant byte address 0x4 - core index']
  #allocation1 [shape = 'u32[144,128]{1,0:T(1,128)}', space=vmem, size = 0x12000, scoped, tag = 'internal scratch']
  #allocation2 [shape = 'f32[144,128]{1,0:T(8,128)}', space=vmem, size = 0x12000, scoped, tag = 'scratch operand']
  #allocation3 [shape = 'bf16[16,128,256]{2,1,0:T(16,128)(2,1)}', space=vmem, size = 0x100000, scoped, tag = 'scratch operand']
  #allocation4 [shape = 's32[1]{0}', space=sflag, size = 0x4, scoped, tag = 'scratch operand']
  #allocation5 [shape = 's32[]', space=sflag, size = 0x4, offset = 0, fixed_abs, tag = 'sflag constant byte address 0x0 - dummy sync flag']
  %s0 = inlined_call_operand.vmem [shape: f32[128,1], index: 0, kind: input, shape index: {}]
  %s1 = inlined_call_operand.vmem [shape: f32[3,1,8], index: 1, kind: input, shape index: {}]
  %s2 = inlined_call_operand.vmem [shape: f32[1,8], index: 2, kind: input, shape index: {}]
  %s3 = inlined_call_operand.vmem [shape: f32[3,8,32], index: 3, kind: input, shape index: {}]
  %s4 = inlined_call_operand.vmem [shape: f32[1,32], index: 4, kind: input, shape index: {}]
  %s5 = inlined_call_operand.vmem [shape: bf16[3,32,64], index: 5, kind: input, shape index: {}]
  %s6 = inlined_call_operand.vmem [shape: f32[1,64], index: 6, kind: input, shape index: {}]
  %s7 = inlined_call_operand.vmem [shape: bf16[3,64,128], index: 7, kind: input, shape index: {}]
  %s8 = inlined_call_operand.vmem [shape: f32[1,128], index: 8, kind: input, shape index: {}]
  %s9 = inlined_call_operand.hbm [shape: bf16[16,128,256], index: 9, kind: input, shape index: {}]
  %s10 = inlined_call_operand.vmem [shape: f32[1,256], index: 10, kind: input, shape index: {}]
  %s11 = inlined_call_operand.vmem [shape: bf16[256,256], index: 11, kind: input, shape index: {}]
  %s12 = inlined_call_operand.vmem [shape: f32[1,256], index: 12, kind: input, shape index: {}]
  %s13 = inlined_call_operand.vmem [shape: f32[256,8], index: 13, kind: input, shape index: {}]
  %s14 = inlined_call_operand.vmem [shape: f32[1,8], index: 14, kind: input, shape index: {}]
  %s15 = inlined_call_operand.vmem [shape: f32[8,8], index: 15, kind: output, shape index: {}]
  %s16 = sld [smem:[#allocation0]]
  $region66: #{pallas_forward.1} parent=0
    _
  %s18 = ssub.s32 1, %s16
  %s19 = scalar_select 0, %s18, %s16
  $region1: #{pallas_forward.1} parent=0
    #allocation6 [shape = 'u32[9]{0}', space=smem, size = 0x24, scoped, tag = 'DMA stride descriptor']
    // Predicated region
    $region2: #{pallas_forward.1} parent=1 // pred_check
      _
    $region3: #{pallas_forward.1} parent=1 // pred_check_branch
      %21 = sbr.rel (0) target = $region5
    $region4: #{pallas_forward.1} parent=1 // pred_region
      _
    $region5: #{pallas_forward.1} parent=1 // pred_fallthru
      _
    // Predicated region
    $region6: #{pallas_forward.1} parent=1 // pred_check
      _
    $region7: #{pallas_forward.1} parent=1 // pred_check_branch
      %23 = sbr.rel (0) target = $region9
    $region8: #{pallas_forward.1} parent=1 // pred_region
      _
    $region9: #{pallas_forward.1} parent=1 // pred_fallthru
      _
    // Predicated region
    $region10: #{pallas_forward.1} parent=1 // pred_check
      _
    $region11: #{pallas_forward.1} parent=1 // pred_check_branch
      %25 = sbr.rel (0) target = $region13
    $region12: #{pallas_forward.1} parent=1 // pred_region
      _
    $region13: #{pallas_forward.1} parent=1 // pred_fallthru
      _
    // Predicated region
    $region14: #{pallas_forward.1} parent=1 // pred_check
      _
    $region15: #{pallas_forward.1} parent=1 // pred_check_branch
      %27 = sbr.rel (0) target = $region17
    $region16: #{pallas_forward.1} parent=1 // pred_region
      _
    $region17: #{pallas_forward.1} parent=1 // pred_fallthru
      _
    // Predicated region
    $region18: #{pallas_forward.1} parent=1 // pred_check
      _
    $region19: #{pallas_forward.1} parent=1 // pred_check_branch
      %29 = sbr.rel (0) target = $region21
    $region20: #{pallas_forward.1} parent=1 // pred_region
      _
    $region21: #{pallas_forward.1} parent=1 // pred_fallthru
      _
    // Predicated region
    $region22: #{pallas_forward.1} parent=1 // pred_check
      _
    $region23: #{pallas_forward.1} parent=1 // pred_check_branch
      %31 = sbr.rel (0) target = $region25
    $region24: #{pallas_forward.1} parent=1 // pred_region
      _
    $region25: #{pallas_forward.1} parent=1 // pred_fallthru
      _
    // Predicated region
    $region26: #{pallas_forward.1} parent=1 // pred_check
      _
    $region27: #{pallas_forward.1} parent=1 // pred_check_branch
      %33 = sbr.rel (0) target = $region29
    $region28: #{pallas_forward.1} parent=1 // pred_region
      _
    $region29: #{pallas_forward.1} parent=1 // pred_fallthru
      _
    // Predicated region
    $region30: #{pallas_forward.1} parent=1 // pred_check
      _
    $region31: #{pallas_forward.1} parent=1 // pred_check_branch
      %35 = sbr.rel (0) target = $region33
    $region32: #{pallas_forward.1} parent=1 // pred_region
      _
    $region33: #{pallas_forward.1} parent=1 // pred_fallthru
      _
    // Predicated region
    $region34: #{pallas_forward.1} parent=1 // pred_check
      _
    $region35: #{pallas_forward.1} parent=1 // pred_check_branch
      %37 = sbr.rel (0) target = $region37
    $region36: #{pallas_forward.1} parent=1 // pred_region
      _
    $region37: #{pallas_forward.1} parent=1 // pred_fallthru
      _
    // Predicated region
    $region38: #{pallas_forward.1} parent=1 // pred_check
      _
    $region39: #{pallas_forward.1} parent=1 // pred_check_branch
      %39 = sbr.rel (0) target = $region41
    $region40: #{pallas_forward.1} parent=1 // pred_region
      _
    $region41: #{pallas_forward.1} parent=1 // pred_fallthru
      _
    // Predicated region
    $region42: #{pallas_forward.1} parent=1 // pred_check
      _
    $region43: #{pallas_forward.1} parent=1 // pred_check_branch
      %41 = sbr.rel (0) target = $region45
    $region44: #{pallas_forward.1} parent=1 // pred_region
      _
    $region45: #{pallas_forward.1} parent=1 // pred_fallthru
      _
    // Predicated region
    $region46: #{pallas_forward.1} parent=1 // pred_check
      _
    $region47: #{pallas_forward.1} parent=1 // pred_check_branch
      %43 = sbr.rel (0) target = $region49
    $region48: #{pallas_forward.1} parent=1 // pred_region
      _
    $region49: #{pallas_forward.1} parent=1 // pred_fallthru
      _
    // Predicated region
    $region50: #{pallas_forward.1} parent=1 // pred_check
      _
    $region51: #{pallas_forward.1} parent=1 // pred_check_branch
      %45 = sbr.rel (0) target = $region53
    $region52: #{pallas_forward.1} parent=1 // pred_region
      _
    $region53: #{pallas_forward.1} parent=1 // pred_fallthru
      _
    // Predicated region
    $region54: #{pallas_forward.1} parent=1 // pred_check
      _
    $region55: #{pallas_forward.1} parent=1 // pred_check_branch
      %47 = sbr.rel (0) target = $region57
    $region56: #{pallas_forward.1} parent=1 // pred_region
      _
    $region57: #{pallas_forward.1} parent=1 // pred_fallthru
      _
    %s50 = sshll.u32 1, 14
    %s51 = sxor.u32 4294967295, %s50
    %s53 = sld [smem:[#allocation0]]
    %s54 = sadd.s32 2, %s53
    %s56 = sshll.u32 7, 26
    %s57 = sxor.u32 4294967295, %s56
    %s58 = sand.u32 0, %s57
    %s59 = sshll.u32 %s54, 26
    %s60 = sor.u32 %s58, %s59
    %s61 = sshll.u32 [#allocation3], 4
    %s62 = int_to_ptr.vmem [resolvable:$true] %s61
    %65 = sst [smem:[#allocation6]] 256
    %s66 = scalar_lea.smem [#allocation6], 1
    %67 = sst [smem:[%s66]] 256
    %s68 = scalar_lea.smem [#allocation6], 2
    %69 = sst [smem:[%s68]] 2
    %s70 = scalar_lea.smem [#allocation6], 3
    %71 = sst [smem:[%s70]] 64
    %s72 = scalar_lea.smem [#allocation6], 4
    %73 = sst [smem:[%s72]] 128
    %s74 = scalar_lea.smem [#allocation6], 5
    %75 = sst [smem:[%s74]] 2
    %s76 = scalar_lea.smem [#allocation6], 6
    %77 = sst [smem:[%s76]] 128
    %s78 = scalar_lea.smem [#allocation6], 7
    %79 = sst [smem:[%s78]] 64
    %s80 = scalar_lea.smem [#allocation6], 8
    %81 = sst [smem:[%s80]] 4
    %83 = dma.general %s9, 32768, %s62, [#allocation4], [#allocation5], [#allocation6], %s60, 0
    %84 = vst [vmem:[#allocation2] sm:$0xff] 0.0
    %85 = vst [vmem:[#allocation2 + $0x88] sm:$0xff] 0.0
    %v86 = vld [vmem:[%s0] sm:$0xff]
    %v87 = vld [vmem:[%s0 + $0x8] sm:$0xff]
    %v88 = vld [vmem:[%s0 + $0x10] sm:$0xff]
    %v89 = vld [vmem:[%s0 + $0x18] sm:$0xff]
    %v90 = vld [vmem:[%s0 + $0x20] sm:$0xff]
    %v91 = vld [vmem:[%s0 + $0x28] sm:$0xff]
    %v92 = vld [vmem:[%s0 + $0x30] sm:$0xff]
    %v93 = vld [vmem:[%s0 + $0x38] sm:$0xff]
    %v94 = vld [vmem:[%s0 + $0x40] sm:$0xff]
    %v95 = vld [vmem:[%s0 + $0x48] sm:$0xff]
    %v96 = vld [vmem:[%s0 + $0x50] sm:$0xff]
    %v97 = vld [vmem:[%s0 + $0x58] sm:$0xff]
    %v98 = vld [vmem:[%s0 + $0x60] sm:$0xff]
    %v99 = vld [vmem:[%s0 + $0x68] sm:$0xff]
    %v100 = vld [vmem:[%s0 + $0x70] sm:$0xff]
    %v101 = vld [vmem:[%s0 + $0x78] sm:$0xff]
    %vm102 = vcmask 7168
    %103 = vst.msk [vmem:[#allocation2 + $0x8] sm:$0xff] %vm102, %v86
    %104 = vst.msk [vmem:[#allocation2 + $0x10] sm:$0xff] %vm102, %v87
    %105 = vst.msk [vmem:[#allocation2 + $0x18] sm:$0xff] %vm102, %v88
    %106 = vst.msk [vmem:[#allocation2 + $0x20] sm:$0xff] %vm102, %v89
    %107 = vst.msk [vmem:[#allocation2 + $0x28] sm:$0xff] %vm102, %v90
    %108 = vst.msk [vmem:[#allocation2 + $0x30] sm:$0xff] %vm102, %v91
    %109 = vst.msk [vmem:[#allocation2 + $0x38] sm:$0xff] %vm102, %v92
    %110 = vst.msk [vmem:[#allocation2 + $0x40] sm:$0xff] %vm102, %v93
    %111 = vst.msk [vmem:[#allocation2 + $0x48] sm:$0xff] %vm102, %v94
    %112 = vst.msk [vmem:[#allocation2 + $0x50] sm:$0xff] %vm102, %v95
    %113 = vst.msk [vmem:[#allocation2 + $0x58] sm:$0xff] %vm102, %v96
    %114 = vst.msk [vmem:[#allocation2 + $0x60] sm:$0xff] %vm102, %v97
    %115 = vst.msk [vmem:[#allocation2 + $0x68] sm:$0xff] %vm102, %v98
    %116 = vst.msk [vmem:[#allocation2 + $0x70] sm:$0xff] %vm102, %v99
    %117 = vst.msk [vmem:[#allocation2 + $0x78] sm:$0xff] %vm102, %v100
    %118 = vst.msk [vmem:[#allocation2 + $0x80] sm:$0xff] %vm102, %v101
    %v119 = vld [vmem:[#allocation2] sm:$0xff]
    %v120 = vld [vmem:[#allocation2 + $0x8] sm:$0xff]
    %v121 = vld [vmem:[#allocation2 + $0x10] sm:$0xff]
    %v122 = vld [vmem:[#allocation2 + $0x18] sm:$0xff]
    %v123 = vld [vmem:[#allocation2 + $0x20] sm:$0xff]
    %v124 = vld [vmem:[#allocation2 + $0x28] sm:$0xff]
    %v125 = vld [vmem:[#allocation2 + $0x30] sm:$0xff]
    %v126 = vld [vmem:[#allocation2 + $0x38] sm:$0xff]
    %v127 = vld [vmem:[#allocation2 + $0x40] sm:$0xff]
    %v128 = vld [vmem:[#allocation2 + $0x48] sm:$0xff]
    %v129 = vld [vmem:[#allocation2 + $0x50] sm:$0xff]
    %v130 = vld [vmem:[#allocation2 + $0x58] sm:$0xff]
    %v131 = vld [vmem:[#allocation2 + $0x60] sm:$0xff]
    %v132 = vld [vmem:[#allocation2 + $0x68] sm:$0xff]
    %v133 = vld [vmem:[#allocation2 + $0x70] sm:$0xff]
    %v134 = vld [vmem:[#allocation2 + $0x78] sm:$0xff]
    %v135 = vld [vmem:[#allocation2 + $0x10] sm:$0xff]
    %v136 = vld [vmem:[#allocation2 + $0x18] sm:$0xff]
    %v137 = vld [vmem:[#allocation2 + $0x20] sm:$0xff]
    %v138 = vld [vmem:[#allocation2 + $0x28] sm:$0xff]
    %v139 = vld [vmem:[#allocation2 + $0x30] sm:$0xff]
    %v140 = vld [vmem:[#allocation2 + $0x38] sm:$0xff]
    %v141 = vld [vmem:[#allocation2 + $0x40] sm:$0xff]
    %v142 = vld [vmem:[#allocation2 + $0x48] sm:$0xff]
    %v143 = vld [vmem:[#allocation2 + $0x50] sm:$0xff]
    %v144 = vld [vmem:[#allocation2 + $0x58] sm:$0xff]
    %v145 = vld [vmem:[#allocation2 + $0x60] sm:$0xff]
    %v146 = vld [vmem:[#allocation2 + $0x68] sm:$0xff]
    %v147 = vld [vmem:[#allocation2 + $0x70] sm:$0xff]
    %v148 = vld [vmem:[#allocation2 + $0x78] sm:$0xff]
    %v149 = vld [vmem:[#allocation2 + $0x80] sm:$0xff]
    %v150 = vld [vmem:[#allocation2 + $0x88] sm:$0xff]
    %v151 = vld [vmem:[%s1] sm:$0x1]
    %153 = vset.pattern.permute.xlu0 0
    %154 = vperm.xlu0 %153, %v119
    %v155 = vpop.permute.xlu0 %154
    %158 = vset.pattern.permute.xlu0 0
    %159 = vperm.xlu0 %158, %v120
    %v160 = vpop.permute.xlu0 %159
    %163 = vset.pattern.permute.xlu0 0
    %164 = vperm.xlu0 %163, %v121
    %v165 = vpop.permute.xlu0 %164
    %168 = vset.pattern.permute.xlu0 0
    %169 = vperm.xlu0 %168, %v122
    %v170 = vpop.permute.xlu0 %169
    %173 = vset.pattern.permute.xlu0 0
    %174 = vperm.xlu0 %173, %v123
    %v175 = vpop.permute.xlu0 %174
    %178 = vset.pattern.permute.xlu0 0
    %179 = vperm.xlu0 %178, %v124
    %v180 = vpop.permute.xlu0 %179
    %183 = vset.pattern.permute.xlu0 0
    %184 = vperm.xlu0 %183, %v125
    %v185 = vpop.permute.xlu0 %184
    %188 = vset.pattern.permute.xlu0 0
    %189 = vperm.xlu0 %188, %v126
    %v190 = vpop.permute.xlu0 %189
    %193 = vset.pattern.permute.xlu0 0
    %194 = vperm.xlu0 %193, %v127
    %v195 = vpop.permute.xlu0 %194
    %198 = vset.pattern.permute.xlu0 0
    %199 = vperm.xlu0 %198, %v128
    %v200 = vpop.permute.xlu0 %199
    %203 = vset.pattern.permute.xlu0 0
    %204 = vperm.xlu0 %203, %v129
    %v205 = vpop.permute.xlu0 %204
    %208 = vset.pattern.permute.xlu0 0
    %209 = vperm.xlu0 %208, %v130
    %v210 = vpop.permute.xlu0 %209
    %213 = vset.pattern.permute.xlu0 0
    %214 = vperm.xlu0 %213, %v131
    %v215 = vpop.permute.xlu0 %214
    %218 = vset.pattern.permute.xlu0 0
    %219 = vperm.xlu0 %218, %v132
    %v220 = vpop.permute.xlu0 %219
    %223 = vset.pattern.permute.xlu0 0
    %224 = vperm.xlu0 %223, %v133
    %v225 = vpop.permute.xlu0 %224
    %228 = vset.pattern.permute.xlu0 0
    %229 = vperm.xlu0 %228, %v134
    %v230 = vpop.permute.xlu0 %229
    %v233 = vlaneseq
    %v234 = vshrl.u32 %v233, 7
    %v235 = vsub.s32 0, %v234
    %v236 = vrot.slane %v151, %v235
    %v238 = vmul.f32 %v155, %v236
    %v239 = vmul.f32 %v160, %v236
    %v240 = vmul.f32 %v165, %v236
    %v241 = vmul.f32 %v170, %v236
    %v242 = vmul.f32 %v175, %v236
    %v243 = vmul.f32 %v180, %v236
    %v244 = vmul.f32 %v185, %v236
    %v245 = vmul.f32 %v190, %v236
    %v246 = vmul.f32 %v195, %v236
    %v247 = vmul.f32 %v200, %v236
    %v248 = vmul.f32 %v205, %v236
    %v249 = vmul.f32 %v210, %v236
    %v250 = vmul.f32 %v215, %v236
    %v251 = vmul.f32 %v220, %v236
    %v252 = vmul.f32 %v225, %v236
    %v253 = vmul.f32 %v230, %v236
    %s254 = scalar_lea.vmem %s1, 1
    %v255 = vld [vmem:[%s254] sm:$0x1]
    %257 = vset.pattern.permute.xlu0 0
    %258 = vperm.xlu0 %257, %v86
    %v259 = vpop.permute.xlu0 %258
    %262 = vset.pattern.permute.xlu0 0
    %263 = vperm.xlu0 %262, %v87
    %v264 = vpop.permute.xlu0 %263
    %267 = vset.pattern.permute.xlu0 0
    %268 = vperm.xlu0 %267, %v88
    %v269 = vpop.permute.xlu0 %268
    %272 = vset.pattern.permute.xlu0 0
    %273 = vperm.xlu0 %272, %v89
    %v274 = vpop.permute.xlu0 %273
    %277 = vset.pattern.permute.xlu0 0
    %278 = vperm.xlu0 %277, %v90
    %v279 = vpop.permute.xlu0 %278
    %282 = vset.pattern.permute.xlu0 0
    %283 = vperm.xlu0 %282, %v91
    %v284 = vpop.permute.xlu0 %283
    %287 = vset.pattern.permute.xlu0 0
    %288 = vperm.xlu0 %287, %v92
    %v289 = vpop.permute.xlu0 %288
    %292 = vset.pattern.permute.xlu0 0
    %293 = vperm.xlu0 %292, %v93
    %v294 = vpop.permute.xlu0 %293
    %297 = vset.pattern.permute.xlu0 0
    %298 = vperm.xlu0 %297, %v94
    %v299 = vpop.permute.xlu0 %298
    %302 = vset.pattern.permute.xlu0 0
    %303 = vperm.xlu0 %302, %v95
    %v304 = vpop.permute.xlu0 %303
    %307 = vset.pattern.permute.xlu0 0
    %308 = vperm.xlu0 %307, %v96
    %v309 = vpop.permute.xlu0 %308
    %312 = vset.pattern.permute.xlu0 0
    %313 = vperm.xlu0 %312, %v97
    %v314 = vpop.permute.xlu0 %313
    %317 = vset.pattern.permute.xlu0 0
    %318 = vperm.xlu0 %317, %v98
    %v319 = vpop.permute.xlu0 %318
    %322 = vset.pattern.permute.xlu0 0
    %323 = vperm.xlu0 %322, %v99
    %v324 = vpop.permute.xlu0 %323
    %327 = vset.pattern.permute.xlu0 0
    %328 = vperm.xlu0 %327, %v100
    %v329 = vpop.permute.xlu0 %328
    %332 = vset.pattern.permute.xlu0 0
    %333 = vperm.xlu0 %332, %v101
    %v334 = vpop.permute.xlu0 %333
    %v337 = vlaneseq
    %v338 = vshrl.u32 %v337, 7
    %v339 = vsub.s32 0, %v338
    %v340 = vrot.slane %v255, %v339
    %v342 = vmul.f32 %v259, %v340
    %v343 = vmul.f32 %v264, %v340
    %v344 = vmul.f32 %v269, %v340
    %v345 = vmul.f32 %v274, %v340
    %v346 = vmul.f32 %v279, %v340
    %v347 = vmul.f32 %v284, %v340
    %v348 = vmul.f32 %v289, %v340
    %v349 = vmul.f32 %v294, %v340
    %v350 = vmul.f32 %v299, %v340
    %v351 = vmul.f32 %v304, %v340
    %v352 = vmul.f32 %v309, %v340
    %v353 = vmul.f32 %v314, %v340
    %v354 = vmul.f32 %v319, %v340
    %v355 = vmul.f32 %v324, %v340
    %v356 = vmul.f32 %v329, %v340
    %v357 = vmul.f32 %v334, %v340
    %v358 = vadd.f32 %v238, %v342
    %v359 = vadd.f32 %v239, %v343
    %v360 = vadd.f32 %v240, %v344
    %v361 = vadd.f32 %v241, %v345
    %v362 = vadd.f32 %v242, %v346
    %v363 = vadd.f32 %v243, %v347
    %v364 = vadd.f32 %v244, %v348
    %v365 = vadd.f32 %v245, %v349
    %v366 = vadd.f32 %v246, %v350
    %v367 = vadd.f32 %v247, %v351
    %v368 = vadd.f32 %v248, %v352
    %v369 = vadd.f32 %v249, %v353
    %v370 = vadd.f32 %v250, %v354
    %v371 = vadd.f32 %v251, %v355
    %v372 = vadd.f32 %v252, %v356
    %v373 = vadd.f32 %v253, %v357
    %s374 = scalar_lea.vmem %s1, 2
    %v375 = vld [vmem:[%s374] sm:$0x1]
    %377 = vset.pattern.permute.xlu0 0
    %378 = vperm.xlu0 %377, %v135
    %v379 = vpop.permute.xlu0 %378
    %382 = vset.pattern.permute.xlu0 0
    %383 = vperm.xlu0 %382, %v136
    %v384 = vpop.permute.xlu0 %383
    %387 = vset.pattern.permute.xlu0 0
    %388 = vperm.xlu0 %387, %v137
    %v389 = vpop.permute.xlu0 %388
    %392 = vset.pattern.permute.xlu0 0
    %393 = vperm.xlu0 %392, %v138
    %v394 = vpop.permute.xlu0 %393
    %397 = vset.pattern.permute.xlu0 0
    %398 = vperm.xlu0 %397, %v139
    %v399 = vpop.permute.xlu0 %398
    %402 = vset.pattern.permute.xlu0 0
    %403 = vperm.xlu0 %402, %v140
    %v404 = vpop.permute.xlu0 %403
    %407 = vset.pattern.permute.xlu0 0
    %408 = vperm.xlu0 %407, %v141
    %v409 = vpop.permute.xlu0 %408
    %412 = vset.pattern.permute.xlu0 0
    %413 = vperm.xlu0 %412, %v142
    %v414 = vpop.permute.xlu0 %413
    %417 = vset.pattern.permute.xlu0 0
    %418 = vperm.xlu0 %417, %v143
    %v419 = vpop.permute.xlu0 %418
    %422 = vset.pattern.permute.xlu0 0
    %423 = vperm.xlu0 %422, %v144
    %v424 = vpop.permute.xlu0 %423
    %427 = vset.pattern.permute.xlu0 0
    %428 = vperm.xlu0 %427, %v145
    %v429 = vpop.permute.xlu0 %428
    %432 = vset.pattern.permute.xlu0 0
    %433 = vperm.xlu0 %432, %v146
    %v434 = vpop.permute.xlu0 %433
    %437 = vset.pattern.permute.xlu0 0
    %438 = vperm.xlu0 %437, %v147
    %v439 = vpop.permute.xlu0 %438
    %442 = vset.pattern.permute.xlu0 0
    %443 = vperm.xlu0 %442, %v148
    %v444 = vpop.permute.xlu0 %443
    %447 = vset.pattern.permute.xlu0 0
    %448 = vperm.xlu0 %447, %v149
    %v449 = vpop.permute.xlu0 %448
    %452 = vset.pattern.permute.xlu0 0
    %453 = vperm.xlu0 %452, %v150
    %v454 = vpop.permute.xlu0 %453
    %v457 = vlaneseq
    %v458 = vshrl.u32 %v457, 7
    %v459 = vsub.s32 0, %v458
    %v460 = vrot.slane %v375, %v459
    %v462 = vmul.f32 %v379, %v460
    %v463 = vmul.f32 %v384, %v460
    %v464 = vmul.f32 %v389, %v460
    %v465 = vmul.f32 %v394, %v460
    %v466 = vmul.f32 %v399, %v460
    %v467 = vmul.f32 %v404, %v460
    %v468 = vmul.f32 %v409, %v460
    %v469 = vmul.f32 %v414, %v460
    %v470 = vmul.f32 %v419, %v460
    %v471 = vmul.f32 %v424, %v460
    %v472 = vmul.f32 %v429, %v460
    %v473 = vmul.f32 %v434, %v460
    %v474 = vmul.f32 %v439, %v460
    %v475 = vmul.f32 %v444, %v460
    %v476 = vmul.f32 %v449, %v460
    %v477 = vmul.f32 %v454, %v460
    %v478 = vadd.f32 %v358, %v462
    %v479 = vadd.f32 %v359, %v463
    %v480 = vadd.f32 %v360, %v464
    %v481 = vadd.f32 %v361, %v465
    %v482 = vadd.f32 %v362, %v466
    %v483 = vadd.f32 %v363, %v467
    %v484 = vadd.f32 %v364, %v468
    %v485 = vadd.f32 %v365, %v469
    %v486 = vadd.f32 %v366, %v470
    %v487 = vadd.f32 %v367, %v471
    %v488 = vadd.f32 %v368, %v472
    %v489 = vadd.f32 %v369, %v473
    %v490 = vadd.f32 %v370, %v474
    %v491 = vadd.f32 %v371, %v475
    %v492 = vadd.f32 %v372, %v476
    %v493 = vadd.f32 %v373, %v477
    %v494 = vld [vmem:[%s2] sm:$0x1]
    %v496 = vlaneseq
    %v497 = vshrl.u32 %v496, 7
    %v498 = vsub.s32 0, %v497
    %v499 = vrot.slane %v494, %v498
    %v501 = vadd.f32 %v478, %v499
    %v502 = vadd.f32 %v479, %v499
    %v503 = vadd.f32 %v480, %v499
    %v504 = vadd.f32 %v481, %v499
    %v505 = vadd.f32 %v482, %v499
    %v506 = vadd.f32 %v483, %v499
    %v507 = vadd.f32 %v484, %v499
    %v508 = vadd.f32 %v485, %v499
    %v509 = vadd.f32 %v486, %v499
    %v510 = vadd.f32 %v487, %v499
    %v511 = vadd.f32 %v488, %v499
    %v512 = vadd.f32 %v489, %v499
    %v513 = vadd.f32 %v490, %v499
    %v514 = vadd.f32 %v491, %v499
    %v515 = vadd.f32 %v492, %v499
    %v516 = vadd.f32 %v493, %v499
    %v517 = vmax.f32 %v501, 0.0
    %v518 = vmax.f32 %v502, 0.0
    %v519 = vmax.f32 %v503, 0.0
    %v520 = vmax.f32 %v504, 0.0
    %v521 = vmax.f32 %v505, 0.0
    %v522 = vmax.f32 %v506, 0.0
    %v523 = vmax.f32 %v507, 0.0
    %v524 = vmax.f32 %v508, 0.0
    %v525 = vmax.f32 %v509, 0.0
    %v526 = vmax.f32 %v510, 0.0
    %v527 = vmax.f32 %v511, 0.0
    %v528 = vmax.f32 %v512, 0.0
    %v529 = vmax.f32 %v513, 0.0
    %v530 = vmax.f32 %v514, 0.0
    %v531 = vmax.f32 %v515, 0.0
    %v532 = vmax.f32 %v516, 0.0
    %vm533 = vcmask 64512
    %534 = vst.msk [vmem:[#allocation2 + $0x8] sm:$0xff] %vm533, %v517
    %535 = vst.msk [vmem:[#allocation2 + $0x10] sm:$0xff] %vm533, %v518
    %536 = vst.msk [vmem:[#allocation2 + $0x18] sm:$0xff] %vm533, %v519
    %537 = vst.msk [vmem:[#allocation2 + $0x20] sm:$0xff] %vm533, %v520
    %538 = vst.msk [vmem:[#allocation2 + $0x28] sm:$0xff] %vm533, %v521
    %539 = vst.msk [vmem:[#allocation2 + $0x30] sm:$0xff] %vm533, %v522
    %540 = vst.msk [vmem:[#allocation2 + $0x38] sm:$0xff] %vm533, %v523
    %541 = vst.msk [vmem:[#allocation2 + $0x40] sm:$0xff] %vm533, %v524
    %542 = vst.msk [vmem:[#allocation2 + $0x48] sm:$0xff] %vm533, %v525
    %543 = vst.msk [vmem:[#allocation2 + $0x50] sm:$0xff] %vm533, %v526
    %544 = vst.msk [vmem:[#allocation2 + $0x58] sm:$0xff] %vm533, %v527
    %545 = vst.msk [vmem:[#allocation2 + $0x60] sm:$0xff] %vm533, %v528
    %546 = vst.msk [vmem:[#allocation2 + $0x68] sm:$0xff] %vm533, %v529
    %547 = vst.msk [vmem:[#allocation2 + $0x70] sm:$0xff] %vm533, %v530
    %548 = vst.msk [vmem:[#allocation2 + $0x78] sm:$0xff] %vm533, %v531
    %549 = vst.msk [vmem:[#allocation2 + $0x80] sm:$0xff] %vm533, %v532
    %v550 = vld [vmem:[#allocation2] sm:$0xff]
    %v551 = vld [vmem:[#allocation2 + $0x8] sm:$0xff]
    %v552 = vld [vmem:[#allocation2 + $0x10] sm:$0xff]
    %v553 = vld [vmem:[#allocation2 + $0x18] sm:$0xff]
    %v554 = vld [vmem:[#allocation2 + $0x20] sm:$0xff]
    %v555 = vld [vmem:[#allocation2 + $0x28] sm:$0xff]
    %v556 = vld [vmem:[#allocation2 + $0x30] sm:$0xff]
    %v557 = vld [vmem:[#allocation2 + $0x38] sm:$0xff]
    %v558 = vld [vmem:[#allocation2 + $0x40] sm:$0xff]
    %v559 = vld [vmem:[#allocation2 + $0x48] sm:$0xff]
    %v560 = vld [vmem:[#allocation2 + $0x50] sm:$0xff]
    %v561 = vld [vmem:[#allocation2 + $0x58] sm:$0xff]
    %v562 = vld [vmem:[#allocation2 + $0x60] sm:$0xff]
    %v563 = vld [vmem:[#allocation2 + $0x68] sm:$0xff]
    %v564 = vld [vmem:[#allocation2 + $0x70] sm:$0xff]
    %v565 = vld [vmem:[#allocation2 + $0x78] sm:$0xff]
    %v566 = vld [vmem:[#allocation2 + $0x10] sm:$0xff]
    %v567 = vld [vmem:[#allocation2 + $0x18] sm:$0xff]
    %v568 = vld [vmem:[#allocation2 + $0x20] sm:$0xff]
    %v569 = vld [vmem:[#allocation2 + $0x28] sm:$0xff]
    %v570 = vld [vmem:[#allocation2 + $0x30] sm:$0xff]
    %v571 = vld [vmem:[#allocation2 + $0x38] sm:$0xff]
    %v572 = vld [vmem:[#allocation2 + $0x40] sm:$0xff]
    %v573 = vld [vmem:[#allocation2 + $0x48] sm:$0xff]
    %v574 = vld [vmem:[#allocation2 + $0x50] sm:$0xff]
    %v575 = vld [vmem:[#allocation2 + $0x58] sm:$0xff]
    %v576 = vld [vmem:[#allocation2 + $0x60] sm:$0xff]
    %v577 = vld [vmem:[#allocation2 + $0x68] sm:$0xff]
    %v578 = vld [vmem:[#allocation2 + $0x70] sm:$0xff]
    %v579 = vld [vmem:[#allocation2 + $0x78] sm:$0xff]
    %v580 = vld [vmem:[#allocation2 + $0x80] sm:$0xff]
    %v581 = vld [vmem:[#allocation2 + $0x88] sm:$0xff]
    %v582 = vld [vmem:[%s3] sm:$0xff]
    %s583 = scalar_lea.vmem %s3, 8
    %v584 = vld [vmem:[%s583] sm:$0xff]
    %v586 = vsel %vm533, %v517, 0
    %v589 = vsel %vm533, %v518, 0
    %v592 = vsel %vm533, %v519, 0
    %v595 = vsel %vm533, %v520, 0
    %v598 = vsel %vm533, %v521, 0
    %v601 = vsel %vm533, %v522, 0
    %v604 = vsel %vm533, %v523, 0
    %v607 = vsel %vm533, %v524, 0
    %v610 = vsel %vm533, %v525, 0
    %v613 = vsel %vm533, %v526, 0
    %v616 = vsel %vm533, %v527, 0
    %v619 = vsel %vm533, %v528, 0
    %v622 = vsel %vm533, %v529, 0
    %v625 = vsel %vm533, %v530, 0
    %v628 = vsel %vm533, %v531, 0
    %v631 = vsel %vm533, %v532, 0
    %633 = vmatprep.subr.mxu0 0.0
    %634 = vmatpush1.msra.mxu0 %v584
    %635 = vmatprep.subr.mxu0 0.0
    %636 = vmatpush1.msra.mxu0 0.0
    %637 = vmatprep.subr.mxu0 0.0
    %638 = vmatpush1.msra.mxu0 0.0
    %639 = vmatprep.subr.mxu0 0.0
    %640 = vmatpush1.msra.mxu0 0.0
    %641 = vmatprep.subr.mxu0 0.0
    %642 = vmatpush1.msra.mxu0 0.0
    %643 = vmatprep.subr.mxu0 0.0
    %644 = vmatpush1.msra.mxu0 0.0
    %645 = vmatprep.subr.mxu0 0.0
    %646 = vmatpush1.msra.mxu0 0.0
    %647 = vmatprep.subr.mxu0 0.0
    %648 = vmatpush1.msra.mxu0 0.0
    %649 = vmatprep.subr.mxu0 0.0
    %650 = vmatpush1.msra.mxu0 0.0
    %651 = vmatprep.subr.mxu0 0.0
    %652 = vmatpush1.msra.mxu0 0.0
    %653 = vmatprep.subr.mxu0 0.0
    %654 = vmatpush1.msra.mxu0 0.0
    %655 = vmatprep.subr.mxu0 0.0
    %656 = vmatpush1.msra.mxu0 0.0
    %657 = vmatprep.subr.mxu0 0.0
    %658 = vmatpush1.msra.mxu0 0.0
    %659 = vmatprep.subr.mxu0 0.0
    %660 = vmatpush1.msra.mxu0 0.0
    %661 = vmatprep.subr.mxu0 0.0
    %662 = vmatpush1.msra.mxu0 0.0
    %663 = vmatprep.subr.mxu0 0.0
    %664 = vmatpush1.msra.mxu0 0.0
    %665 = vmatprep.subr.mxu0 0.0
    %666 = vmatpush1.msra.mxu0 0.0
    %667 = vmatprep.subr.mxu0 0.0
    %668 = vmatpush1.msra.mxu0 0.0
    %669 = vmatprep.subr.mxu0 0.0
    %670 = vmatpush1.msra.mxu0 0.0
    %671 = vmatprep.subr.mxu0 0.0
    %672 = vmatpush1.msra.mxu0 0.0
    %673 = vmatprep.subr.mxu0 0.0
    %674 = vmatpush1.msra.mxu0 0.0
    %675 = vmatprep.subr.mxu0 0.0
    %676 = vmatpush1.msra.mxu0 0.0
    %677 = vmatprep.subr.mxu0 0.0
    %678 = vmatpush1.msra.mxu0 0.0
    %679 = vmatprep.subr.mxu0 0.0
    %680 = vmatpush1.msra.mxu0 0.0
    %681 = vmatprep.subr.mxu0 0.0
    %682 = vmatpush1.msra.mxu0 0.0
    %683 = vmatprep.subr.mxu0 0.0
    %684 = vmatpush1.msra.mxu0 0.0
    %685 = vmatprep.subr.mxu0 0.0
    %686 = vmatpush1.msra.mxu0 0.0
    %687 = vmatprep.subr.mxu0 0.0
    %688 = vmatpush1.msra.mxu0 0.0
    %689 = vmatprep.subr.mxu0 0.0
    %690 = vmatpush1.msra.mxu0 0.0
    %691 = vmatprep.subr.mxu0 0.0
    %692 = vmatpush1.msra.mxu0 0.0
    %693 = vmatprep.subr.mxu0 0.0
    %694 = vmatpush1.msra.mxu0 0.0
    %695 = vmatprep.subr.mxu0 0.0
    %696 = vmatpush1.msra.mxu0 0.0
    %697 = vmatprep.mubr.f32.mxu0 0.0
    %698 = vmatmul.mubr.f32.gmra.mrb[0].mxu0 %v586
    %v699 = vpop.f32.mrb[0].mxu0
    %v700 = vadd.f32 0.0, %v699
    %v701 = vpop.f32.mrb[0].mxu0
    %702 = vmatprep.mubr.f32.mxu0 0.0
    %703 = vmatmul.mubr.f32.gmra.mrb[0].mxu0 %v589
    %v704 = vpop.f32.mrb[0].mxu0
    %v705 = vadd.f32 0.0, %v704
    %v706 = vpop.f32.mrb[0].mxu0
    %707 = vmatprep.mubr.f32.mxu0 0.0
    %708 = vmatmul.mubr.f32.gmra.mrb[0].mxu0 %v592
    %v709 = vpop.f32.mrb[0].mxu0
    %v710 = vadd.f32 0.0, %v709
    %v711 = vpop.f32.mrb[0].mxu0
    %712 = vmatprep.mubr.f32.mxu0 0.0
    %713 = vmatmul.mubr.f32.gmra.mrb[0].mxu0 %v595
    %v714 = vpop.f32.mrb[0].mxu0
    %v715 = vadd.f32 0.0, %v714
    %v716 = vpop.f32.mrb[0].mxu0
    %717 = vmatprep.mubr.f32.mxu0 0.0
    %718 = vmatmul.mubr.f32.gmra.mrb[0].mxu0 %v598
    %v719 = vpop.f32.mrb[0].mxu0
    %v720 = vadd.f32 0.0, %v719
    %v721 = vpop.f32.mrb[0].mxu0
    %722 = vmatprep.mubr.f32.mxu0 0.0
    %723 = vmatmul.mubr.f32.gmra.mrb[0].mxu0 %v601
    %v724 = vpop.f32.mrb[0].mxu0
    %v725 = vadd.f32 0.0, %v724
    %v726 = vpop.f32.mrb[0].mxu0
    %727 = vmatprep.mubr.f32.mxu0 0.0
    %728 = vmatmul.mubr.f32.gmra.mrb[0].mxu0 %v604
    %v729 = vpop.f32.mrb[0].mxu0
    %v730 = vadd.f32 0.0, %v729
    %v731 = vpop.f32.mrb[0].mxu0
    %732 = vmatprep.mubr.f32.mxu0 0.0
    %733 = vmatmul.mubr.f32.gmra.mrb[0].mxu0 %v607
    %v734 = vpop.f32.mrb[0].mxu0
    %v735 = vadd.f32 0.0, %v734
    %v736 = vpop.f32.mrb[0].mxu0
    %737 = vmatprep.mubr.f32.mxu0 0.0
    %738 = vmatmul.mubr.f32.gmra.mrb[0].mxu0 %v610
    %v739 = vpop.f32.mrb[0].mxu0
    %v740 = vadd.f32 0.0, %v739
    %v741 = vpop.f32.mrb[0].mxu0
    %742 = vmatprep.mubr.f32.mxu0 0.0
    %743 = vmatmul.mubr.f32.gmra.mrb[0].mxu0 %v613
    %v744 = vpop.f32.mrb[0].mxu0
    %v745 = vadd.f32 0.0, %v744
    %v746 = vpop.f32.mrb[0].mxu0
    %747 = vmatprep.mubr.f32.mxu0 0.0
    %748 = vmatmul.mubr.f32.gmra.mrb[0].mxu0 %v616
    %v749 = vpop.f32.mrb[0].mxu0
    %v750 = vadd.f32 0.0, %v749
    %v751 = vpop.f32.mrb[0].mxu0
    %752 = vmatprep.mubr.f32.mxu0 0.0
    %753 = vmatmul.mubr.f32.gmra.mrb[0].mxu0 %v619
    %v754 = vpop.f32.mrb[0].mxu0
    %v755 = vadd.f32 0.0, %v754
    %v756 = vpop.f32.mrb[0].mxu0
    %757 = vmatprep.mubr.f32.mxu0 0.0
    %758 = vmatmul.mubr.f32.gmra.mrb[0].mxu0 %v622
    %v759 = vpop.f32.mrb[0].mxu0
    %v760 = vadd.f32 0.0, %v759
    %v761 = vpop.f32.mrb[0].mxu0
    %762 = vmatprep.mubr.f32.mxu0 0.0
    %763 = vmatmul.mubr.f32.gmra.mrb[0].mxu0 %v625
    %v764 = vpop.f32.mrb[0].mxu0
    %v765 = vadd.f32 0.0, %v764
    %v766 = vpop.f32.mrb[0].mxu0
    %767 = vmatprep.mubr.f32.mxu0 0.0
    %768 = vmatmul.mubr.f32.gmra.mrb[0].mxu0 %v628
    %v769 = vpop.f32.mrb[0].mxu0
    %v770 = vadd.f32 0.0, %v769
    %v771 = vpop.f32.mrb[0].mxu0
    %772 = vmatprep.mubr.f32.mxu0 0.0
    %773 = vmatmul.mubr.f32.gmra.mrb[0].mxu0 %v631
    %v774 = vpop.f32.mrb[0].mxu0
    %v775 = vadd.f32 0.0, %v774
    %v776 = vpop.f32.mrb[0].mxu0
    %777 = vdwg.mxu0
    %v779 = vsel %vm533, %v550, 0
    %v782 = vsel %vm533, %v551, 0
    %v785 = vsel %vm533, %v552, 0
    %v788 = vsel %vm533, %v553, 0
    %v791 = vsel %vm533, %v554, 0
    %v794 = vsel %vm533, %v555, 0
    %v797 = vsel %vm533, %v556, 0
    %v800 = vsel %vm533, %v557, 0
    %v803 = vsel %vm533, %v558, 0
    %v806 = vsel %vm533, %v559, 0
    %v809 = vsel %vm533, %v560, 0
    %v812 = vsel %vm533, %v561, 0
    %v815 = vsel %vm533, %v562, 0
    %v818 = vsel %vm533, %v563, 0
    %v821 = vsel %vm533, %v564, 0
    %v824 = vsel %vm533, %v565, 0
    %826 = vmatprep.subr.mxu0 0.0
    %827 = vmatpush1.msra.mxu0 %v582
    %828 = vmatprep.subr.mxu0 0.0
    %829 = vmatpush1.msra.mxu0 0.0
    %830 = vmatprep.subr.mxu0 0.0
    %831 = vmatpush1.msra.mxu0 0.0
    %832 = vmatprep.subr.mxu0 0.0
    %833 = vmatpush1.msra.mxu0 0.0
    %834 = vmatprep.subr.mxu0 0.0
    %835 = vmatpush1.msra.mxu0 0.0
    %836 = vmatprep.subr.mxu0 0.0
    %837 = vmatpush1.msra.mxu0 0.0
    %838 = vmatprep.subr.mxu0 0.0
    %839 = vmatpush1.msra.mxu0 0.0
    %840 = vmatprep.subr.mxu0 0.0
    %841 = vmatpush1.msra.mxu0 0.0
    %842 = vmatprep.subr.mxu0 0.0
    %843 = vmatpush1.msra.mxu0 0.0
    %844 = vmatprep.subr.mxu0 0.0
    %845 = vmatpush1.msra.mxu0 0.0
    %846 = vmatprep.subr.mxu0 0.0
    %847 = vmatpush1.msra.mxu0 0.0
    %848 = vmatprep.subr.mxu0 0.0
    %849 = vmatpush1.msra.mxu0 0.0
    %850 = vmatprep.subr.mxu0 0.0
    %851 = vmatpush1.msra.mxu0 0.0
    %852 = vmatprep.subr.mxu0 0.0
    %853 = vmatpush1.msra.mxu0 0.0
    %854 = vmatprep.subr.mxu0 0.0
    %855 = vmatpush1.msra.mxu0 0.0
    %856 = vmatprep.subr.mxu0 0.0
    %857 = vmatpush1.msra.mxu0 0.0
    %858 = vmatprep.subr.mxu0 0.0
    %859 = vmatpush1.msra.mxu0 0.0
    %860 = vmatprep.subr.mxu0 0.0
    %861 = vmatpush1.msra.mxu0 0.0
    %862 = vmatprep.subr.mxu0 0.0
    %863 = vmatpush1.msra.mxu0 0.0
    %864 = vmatprep.subr.mxu0 0.0
    %865 = vmatpush1.msra.mxu0 0.0
    %866 = vmatprep.subr.mxu0 0.0
    %867 = vmatpush1.msra.mxu0 0.0
    %868 = vmatprep.subr.mxu0 0.0
    %869 = vmatpush1.msra.mxu0 0.0
    %870 = vmatprep.subr.mxu0 0.0
    %871 = vmatpush1.msra.mxu0 0.0
    %872 = vmatprep.subr.mxu0 0.0
    %873 = vmatpush1.msra.mxu0 0.0
    %874 = vmatprep.subr.mxu0 0.0
    %875 = vmatpush1.msra.mxu0 0.0
    %876 = vmatprep.subr.mxu0 0.0
    %877 = vmatpush1.msra.mxu0 0.0
    %878 = vmatprep.subr.mxu0 0.0
    %879 = vmatpush1.msra.mxu0 0.0
    %880 = vmatprep.subr.mxu0 0.0
    %881 = vmatpush1.msra.mxu0 0.0
    %882 = vmatprep.subr.mxu0 0.0
    %883 = vmatpush1.msra.mxu0 0.0
    %884 = vmatprep.subr.mxu0 0.0
    %885 = vmatpush1.msra.mxu0 0.0
    %886 = vmatprep.subr.mxu0 0.0
    %887 = vmatpush1.msra.mxu0 0.0
    %888 = vmatprep.subr.mxu0 0.0
    %889 = vmatpush1.msra.mxu0 0.0
    %890 = vmatprep.mubr.f32.mxu0 0.0
    %891 = vmatmul.mubr.f32.gmra.mrb[0].mxu0 %v779
    %v892 = vpop.f32.mrb[0].mxu0
    %v893 = vadd.f32 %v700, %v892
    %v894 = vpop.f32.mrb[0].mxu0
    %895 = vmatprep.mubr.f32.mxu0 0.0
    %896 = vmatmul.mubr.f32.gmra.mrb[0].mxu0 %v782
    %v897 = vpop.f32.mrb[0].mxu0
    %v898 = vadd.f32 %v705, %v897
    %v899 = vpop.f32.mrb[0].mxu0
    %900 = vmatprep.mubr.f32.mxu0 0.0
    %901 = vmatmul.mubr.f32.gmra.mrb[0].mxu0 %v785
    %v902 = vpop.f32.mrb[0].mxu0
    %v903 = vadd.f32 %v710, %v902
    %v904 = vpop.f32.mrb[0].mxu0
    %905 = vmatprep.mubr.f32.mxu0 0.0
    %906 = vmatmul.mubr.f32.gmra.mrb[0].mxu0 %v788
    %v907 = vpop.f32.mrb[0].mxu0
    %v908 = vadd.f32 %v715, %v907
    %v909 = vpop.f32.mrb[0].mxu0
    %910 = vmatprep.mubr.f32.mxu0 0.0
    %911 = vmatmul.mubr.f32.gmra.mrb[0].mxu0 %v791
    %v912 = vpop.f32.mrb[0].mxu0
    %v913 = vadd.f32 %v720, %v912
    %v914 = vpop.f32.mrb[0].mxu0
    %915 = vmatprep.mubr.f32.mxu0 0.0
    %916 = vmatmul.mubr.f32.gmra.mrb[0].mxu0 %v794
    %v917 = vpop.f32.mrb[0].mxu0
    %v918 = vadd.f32 %v725, %v917
    %v919 = vpop.f32.mrb[0].mxu0
    %920 = vmatprep.mubr.f32.mxu0 0.0
    %921 = vmatmul.mubr.f32.gmra.mrb[0].mxu0 %v797
    %v922 = vpop.f32.mrb[0].mxu0
    %v923 = vadd.f32 %v730, %v922
    %v924 = vpop.f32.mrb[0].mxu0
    %925 = vmatprep.mubr.f32.mxu0 0.0
    %926 = vmatmul.mubr.f32.gmra.mrb[0].mxu0 %v800
    %v927 = vpop.f32.mrb[0].mxu0
    %v928 = vadd.f32 %v735, %v927
    %v929 = vpop.f32.mrb[0].mxu0
    %930 = vmatprep.mubr.f32.mxu0 0.0
    %931 = vmatmul.mubr.f32.gmra.mrb[0].mxu0 %v803
    %v932 = vpop.f32.mrb[0].mxu0
    %v933 = vadd.f32 %v740, %v932
    %v934 = vpop.f32.mrb[0].mxu0
    %935 = vmatprep.mubr.f32.mxu0 0.0
    %936 = vmatmul.mubr.f32.gmra.mrb[0].mxu0 %v806
    %v937 = vpop.f32.mrb[0].mxu0
    %v938 = vadd.f32 %v745, %v937
    %v939 = vpop.f32.mrb[0].mxu0
    %940 = vmatprep.mubr.f32.mxu0 0.0
    %941 = vmatmul.mubr.f32.gmra.mrb[0].mxu0 %v809
    %v942 = vpop.f32.mrb[0].mxu0
    %v943 = vadd.f32 %v750, %v942
    %v944 = vpop.f32.mrb[0].mxu0
    %945 = vmatprep.mubr.f32.mxu0 0.0
    %946 = vmatmul.mubr.f32.gmra.mrb[0].mxu0 %v812
    %v947 = vpop.f32.mrb[0].mxu0
    %v948 = vadd.f32 %v755, %v947
    %v949 = vpop.f32.mrb[0].mxu0
    %950 = vmatprep.mubr.f32.mxu0 0.0
    %951 = vmatmul.mubr.f32.gmra.mrb[0].mxu0 %v815
    %v952 = vpop.f32.mrb[0].mxu0
    %v953 = vadd.f32 %v760, %v952
    %v954 = vpop.f32.mrb[0].mxu0
    %955 = vmatprep.mubr.f32.mxu0 0.0
    %956 = vmatmul.mubr.f32.gmra.mrb[0].mxu0 %v818
    %v957 = vpop.f32.mrb[0].mxu0
    %v958 = vadd.f32 %v765, %v957
    %v959 = vpop.f32.mrb[0].mxu0
    %960 = vmatprep.mubr.f32.mxu0 0.0
    %961 = vmatmul.mubr.f32.gmra.mrb[0].mxu0 %v821
    %v962 = vpop.f32.mrb[0].mxu0
    %v963 = vadd.f32 %v770, %v962
    %v964 = vpop.f32.mrb[0].mxu0
    %965 = vmatprep.mubr.f32.mxu0 0.0
    %966 = vmatmul.mubr.f32.gmra.mrb[0].mxu0 %v824
    %v967 = vpop.f32.mrb[0].mxu0
    %v968 = vadd.f32 %v775, %v967
    %v969 = vpop.f32.mrb[0].mxu0
    %970 = vdwg.mxu0
    %s971 = scalar_lea.vmem %s3, 16
    %v972 = vld [vmem:[%s971] sm:$0xff]
    %v974 = vsel %vm533, %v566, 0
    %v977 = vsel %vm533, %v567, 0
    %v980 = vsel %vm533, %v568, 0
    %v983 = vsel %vm533, %v569, 0
    %v986 = vsel %vm533, %v570, 0
    %v989 = vsel %vm533, %v571, 0
    %v992 = vsel %vm533, %v572, 0
    %v995 = vsel %vm533, %v573, 0
    %v998 = vsel %vm533, %v574, 0
    %v1001 = vsel %vm533, %v575, 0
    %v1004 = vsel %vm533, %v576, 0
    %v1007 = vsel %vm533, %v577, 0
    %v1010 = vsel %vm533, %v578, 0
    %v1013 = vsel %vm533, %v579, 0
    %v1016 = vsel %vm533, %v580, 0
    %v1019 = vsel %vm533, %v581, 0
    %1021 = vmatprep.subr.mxu0 0.0
    %1022 = vmatpush1.msra.mxu0 %v972
    %1023 = vmatprep.subr.mxu0 0.0
    %1024 = vmatpush1.msra.mxu0 0.0
    %1025 = vmatprep.subr.mxu0 0.0
    %1026 = vmatpush1.msra.mxu0 0.0
    %1027 = vmatprep.subr.mxu0 0.0
    %1028 = vmatpush1.msra.mxu0 0.0
    %1029 = vmatprep.subr.mxu0 0.0
    %1030 = vmatpush1.msra.mxu0 0.0
    %1031 = vmatprep.subr.mxu0 0.0
    %1032 = vmatpush1.msra.mxu0 0.0
    %1033 = vmatprep.subr.mxu0 0.0
    %1034 = vmatpush1.msra.mxu0 0.0
    %1035 = vmatprep.subr.mxu0 0.0
    %1036 = vmatpush1.msra.mxu0 0.0
    %1037 = vmatprep.subr.mxu0 0.0
    %1038 = vmatpush1.msra.mxu0 0.0
    %1039 = vmatprep.subr.mxu0 0.0
    %1040 = vmatpush1.msra.mxu0 0.0
    %1041 = vmatprep.subr.mxu0 0.0
    %1042 = vmatpush1.msra.mxu0 0.0
    %1043 = vmatprep.subr.mxu0 0.0
    %1044 = vmatpush1.msra.mxu0 0.0
    %1045 = vmatprep.subr.mxu0 0.0
    %1046 = vmatpush1.msra.mxu0 0.0
    %1047 = vmatprep.subr.mxu0 0.0
    %1048 = vmatpush1.msra.mxu0 0.0
    %1049 = vmatprep.subr.mxu0 0.0
    %1050 = vmatpush1.msra.mxu0 0.0
    %1051 = vmatprep.subr.mxu0 0.0
    %1052 = vmatpush1.msra.mxu0 0.0
    %1053 = vmatprep.subr.mxu0 0.0
    %1054 = vmatpush1.msra.mxu0 0.0
    %1055 = vmatprep.subr.mxu0 0.0
    %1056 = vmatpush1.msra.mxu0 0.0
    %1057 = vmatprep.subr.mxu0 0.0
    %1058 = vmatpush1.msra.mxu0 0.0
    %1059 = vmatprep.subr.mxu0 0.0
    %1060 = vmatpush1.msra.mxu0 0.0
    %1061 = vmatprep.subr.mxu0 0.0
    %1062 = vmatpush1.msra.mxu0 0.0
    %1063 = vmatprep.subr.mxu0 0.0
    %1064 = vmatpush1.msra.mxu0 0.0
    %1065 = vmatprep.subr.mxu0 0.0
    %1066 = vmatpush1.msra.mxu0 0.0
    %1067 = vmatprep.subr.mxu0 0.0
    %1068 = vmatpush1.msra.mxu0 0.0
    %1069 = vmatprep.subr.mxu0 0.0
    %1070 = vmatpush1.msra.mxu0 0.0
    %1071 = vmatprep.subr.mxu0 0.0
    %1072 = vmatpush1.msra.mxu0 0.0
    %1073 = vmatprep.subr.mxu0 0.0
    %1074 = vmatpush1.msra.mxu0 0.0
    %1075 = vmatprep.subr.mxu0 0.0
    %1076 = vmatpush1.msra.mxu0 0.0
    %1077 = vmatprep.subr.mxu0 0.0
    %1078 = vmatpush1.msra.mxu0 0.0
    %1079 = vmatprep.subr.mxu0 0.0
    %1080 = vmatpush1.msra.mxu0 0.0
    %1081 = vmatprep.subr.mxu0 0.0
    %1082 = vmatpush1.msra.mxu0 0.0
    %1083 = vmatprep.subr.mxu0 0.0
    %1084 = vmatpush1.msra.mxu0 0.0
    %1085 = vmatprep.mubr.f32.mxu0 0.0
    %1086 = vmatmul.mubr.f32.gmra.mrb[0].mxu0 %v974
    %v1087 = vpop.f32.mrb[0].mxu0
    %v1088 = vadd.f32 0.0, %v1087
    %v1089 = vpop.f32.mrb[0].mxu0
    %1090 = vmatprep.mubr.f32.mxu0 0.0
    %1091 = vmatmul.mubr.f32.gmra.mrb[0].mxu0 %v977
    %v1092 = vpop.f32.mrb[0].mxu0
    %v1093 = vadd.f32 0.0, %v1092
    %v1094 = vpop.f32.mrb[0].mxu0
    %1095 = vmatprep.mubr.f32.mxu0 0.0
    %1096 = vmatmul.mubr.f32.gmra.mrb[0].mxu0 %v980
    %v1097 = vpop.f32.mrb[0].mxu0
    %v1098 = vadd.f32 0.0, %v1097
    %v1099 = vpop.f32.mrb[0].mxu0
    %1100 = vmatprep.mubr.f32.mxu0 0.0
    %1101 = vmatmul.mubr.f32.gmra.mrb[0].mxu0 %v983
    %v1102 = vpop.f32.mrb[0].mxu0
    %v1103 = vadd.f32 0.0, %v1102
    %v1104 = vpop.f32.mrb[0].mxu0
    %1105 = vmatprep.mubr.f32.mxu0 0.0
    %1106 = vmatmul.mubr.f32.gmra.mrb[0].mxu0 %v986
    %v1107 = vpop.f32.mrb[0].mxu0
    %v1108 = vadd.f32 0.0, %v1107
    %v1109 = vpop.f32.mrb[0].mxu0
    %1110 = vmatprep.mubr.f32.mxu0 0.0
    %1111 = vmatmul.mubr.f32.gmra.mrb[0].mxu0 %v989
    %v1112 = vpop.f32.mrb[0].mxu0
    %v1113 = vadd.f32 0.0, %v1112
    %v1114 = vpop.f32.mrb[0].mxu0
    %1115 = vmatprep.mubr.f32.mxu0 0.0
    %1116 = vmatmul.mubr.f32.gmra.mrb[0].mxu0 %v992
    %v1117 = vpop.f32.mrb[0].mxu0
    %v1118 = vadd.f32 0.0, %v1117
    %v1119 = vpop.f32.mrb[0].mxu0
    %1120 = vmatprep.mubr.f32.mxu0 0.0
    %1121 = vmatmul.mubr.f32.gmra.mrb[0].mxu0 %v995
    %v1122 = vpop.f32.mrb[0].mxu0
    %v1123 = vadd.f32 0.0, %v1122
    %v1124 = vpop.f32.mrb[0].mxu0
    %1125 = vmatprep.mubr.f32.mxu0 0.0
    %1126 = vmatmul.mubr.f32.gmra.mrb[0].mxu0 %v998
    %v1127 = vpop.f32.mrb[0].mxu0
    %v1128 = vadd.f32 0.0, %v1127
    %v1129 = vpop.f32.mrb[0].mxu0
    %1130 = vmatprep.mubr.f32.mxu0 0.0
    %1131 = vmatmul.mubr.f32.gmra.mrb[0].mxu0 %v1001
    %v1132 = vpop.f32.mrb[0].mxu0
    %v1133 = vadd.f32 0.0, %v1132
    %v1134 = vpop.f32.mrb[0].mxu0
    %1135 = vmatprep.mubr.f32.mxu0 0.0
    %1136 = vmatmul.mubr.f32.gmra.mrb[0].mxu0 %v1004
    %v1137 = vpop.f32.mrb[0].mxu0
    %v1138 = vadd.f32 0.0, %v1137
    %v1139 = vpop.f32.mrb[0].mxu0
    %1140 = vmatprep.mubr.f32.mxu0 0.0
    %1141 = vmatmul.mubr.f32.gmra.mrb[0].mxu0 %v1007
    %v1142 = vpop.f32.mrb[0].mxu0
    %v1143 = vadd.f32 0.0, %v1142
    %v1144 = vpop.f32.mrb[0].mxu0
    %1145 = vmatprep.mubr.f32.mxu0 0.0
    %1146 = vmatmul.mubr.f32.gmra.mrb[0].mxu0 %v1010
    %v1147 = vpop.f32.mrb[0].mxu0
    %v1148 = vadd.f32 0.0, %v1147
    %v1149 = vpop.f32.mrb[0].mxu0
    %1150 = vmatprep.mubr.f32.mxu0 0.0
    %1151 = vmatmul.mubr.f32.gmra.mrb[0].mxu0 %v1013
    %v1152 = vpop.f32.mrb[0].mxu0
    %v1153 = vadd.f32 0.0, %v1152
    %v1154 = vpop.f32.mrb[0].mxu0
    %1155 = vmatprep.mubr.f32.mxu0 0.0
    %1156 = vmatmul.mubr.f32.gmra.mrb[0].mxu0 %v1016
    %v1157 = vpop.f32.mrb[0].mxu0
    %v1158 = vadd.f32 0.0, %v1157
    %v1159 = vpop.f32.mrb[0].mxu0
    %1160 = vmatprep.mubr.f32.mxu0 0.0
    %1161 = vmatmul.mubr.f32.gmra.mrb[0].mxu0 %v1019
    %v1162 = vpop.f32.mrb[0].mxu0
    %v1163 = vadd.f32 0.0, %v1162
    %v1164 = vpop.f32.mrb[0].mxu0
    %1165 = vdwg.mxu0
    %v1166 = vadd.f32 %v893, %v1088
    %v1167 = vadd.f32 %v898, %v1093
    %v1168 = vadd.f32 %v903, %v1098
    %v1169 = vadd.f32 %v908, %v1103
    %v1170 = vadd.f32 %v913, %v1108
    %v1171 = vadd.f32 %v918, %v1113
    %v1172 = vadd.f32 %v923, %v1118
    %v1173 = vadd.f32 %v928, %v1123
    %v1174 = vadd.f32 %v933, %v1128
    %v1175 = vadd.f32 %v938, %v1133
    %v1176 = vadd.f32 %v943, %v1138
    %v1177 = vadd.f32 %v948, %v1143
    %v1178 = vadd.f32 %v953, %v1148
    %v1179 = vadd.f32 %v958, %v1153
    %v1180 = vadd.f32 %v963, %v1158
    %v1181 = vadd.f32 %v968, %v1163
    %v1182 = vld [vmem:[%s4] sm:$0x1]
    %v1184 = vlaneseq
    %v1185 = vshrl.u32 %v1184, 7
    %v1186 = vsub.s32 0, %v1185
    %v1187 = vrot.slane %v1182, %v1186
    %v1189 = vadd.f32 %v1166, %v1187
    %v1190 = vadd.f32 %v1167, %v1187
    %v1191 = vadd.f32 %v1168, %v1187
    %v1192 = vadd.f32 %v1169, %v1187
    %v1193 = vadd.f32 %v1170, %v1187
    %v1194 = vadd.f32 %v1171, %v1187
    %v1195 = vadd.f32 %v1172, %v1187
    %v1196 = vadd.f32 %v1173, %v1187
    %v1197 = vadd.f32 %v1174, %v1187
    %v1198 = vadd.f32 %v1175, %v1187
    %v1199 = vadd.f32 %v1176, %v1187
    %v1200 = vadd.f32 %v1177, %v1187
    %v1201 = vadd.f32 %v1178, %v1187
    %v1202 = vadd.f32 %v1179, %v1187
    %v1203 = vadd.f32 %v1180, %v1187
    %v1204 = vadd.f32 %v1181, %v1187
    %v1205 = vmax.f32 %v1189, 0.0
    %v1206 = vmax.f32 %v1190, 0.0
    %v1207 = vmax.f32 %v1191, 0.0
    %v1208 = vmax.f32 %v1192, 0.0
    %v1209 = vmax.f32 %v1193, 0.0
    %v1210 = vmax.f32 %v1194, 0.0
    %v1211 = vmax.f32 %v1195, 0.0
    %v1212 = vmax.f32 %v1196, 0.0
    %v1213 = vmax.f32 %v1197, 0.0
    %v1214 = vmax.f32 %v1198, 0.0
    %v1215 = vmax.f32 %v1199, 0.0
    %v1216 = vmax.f32 %v1200, 0.0
    %v1217 = vmax.f32 %v1201, 0.0
    %v1218 = vmax.f32 %v1202, 0.0
    %v1219 = vmax.f32 %v1203, 0.0
    %v1220 = vmax.f32 %v1204, 0.0
    %vm1221 = vcmask 261120
    %1222 = vst.msk [vmem:[#allocation2 + $0x8] sm:$0xff] %vm1221, %v1205
    %1223 = vst.msk [vmem:[#allocation2 + $0x10] sm:$0xff] %vm1221, %v1206
    %1224 = vst.msk [vmem:[#allocation2 + $0x18] sm:$0xff] %vm1221, %v1207
    %1225 = vst.msk [vmem:[#allocation2 + $0x20] sm:$0xff] %vm1221, %v1208
    %1226 = vst.msk [vmem:[#allocation2 + $0x28] sm:$0xff] %vm1221, %v1209
    %1227 = vst.msk [vmem:[#allocation2 + $0x30] sm:$0xff] %vm1221, %v1210
    %1228 = vst.msk [vmem:[#allocation2 + $0x38] sm:$0xff] %vm1221, %v1211
    %1229 = vst.msk [vmem:[#allocation2 + $0x40] sm:$0xff] %vm1221, %v1212
    %1230 = vst.msk [vmem:[#allocation2 + $0x48] sm:$0xff] %vm1221, %v1213
    %1231 = vst.msk [vmem:[#allocation2 + $0x50] sm:$0xff] %vm1221, %v1214
    %1232 = vst.msk [vmem:[#allocation2 + $0x58] sm:$0xff] %vm1221, %v1215
    %1233 = vst.msk [vmem:[#allocation2 + $0x60] sm:$0xff] %vm1221, %v1216
    %1234 = vst.msk [vmem:[#allocation2 + $0x68] sm:$0xff] %vm1221, %v1217
    %1235 = vst.msk [vmem:[#allocation2 + $0x70] sm:$0xff] %vm1221, %v1218
    %1236 = vst.msk [vmem:[#allocation2 + $0x78] sm:$0xff] %vm1221, %v1219
    %1237 = vst.msk [vmem:[#allocation2 + $0x80] sm:$0xff] %vm1221, %v1220
    %v1238 = vld [vmem:[#allocation2] sm:$0xff]
    %v1239 = vld [vmem:[#allocation2 + $0x8] sm:$0xff]
    %v1240 = vld [vmem:[#allocation2 + $0x10] sm:$0xff]
    %v1241 = vld [vmem:[#allocation2 + $0x18] sm:$0xff]
    %v1242 = vld [vmem:[#allocation2 + $0x20] sm:$0xff]
    %v1243 = vld [vmem:[#allocation2 + $0x28] sm:$0xff]
    %v1244 = vld [vmem:[#allocation2 + $0x30] sm:$0xff]
    %v1245 = vld [vmem:[#allocation2 + $0x38] sm:$0xff]
    %v1246 = vld [vmem:[#allocation2 + $0x40] sm:$0xff]
    %v1247 = vld [vmem:[#allocation2 + $0x48] sm:$0xff]
    %v1248 = vld [vmem:[#allocation2 + $0x50] sm:$0xff]
    %v1249 = vld [vmem:[#allocation2 + $0x58] sm:$0xff]
    %v1250 = vld [vmem:[#allocation2 + $0x60] sm:$0xff]
    %v1251 = vld [vmem:[#allocation2 + $0x68] sm:$0xff]
    %v1252 = vld [vmem:[#allocation2 + $0x70] sm:$0xff]
    %v1253 = vld [vmem:[#allocation2 + $0x78] sm:$0xff]
    %v1254 = vpack.c.bf16 %v1239, %v1238
    %v1255 = vpack.c.bf16 %v1241, %v1240
    %v1256 = vpack.c.bf16 %v1243, %v1242
    %v1257 = vpack.c.bf16 %v1245, %v1244
    %v1258 = vpack.c.bf16 %v1247, %v1246
    %v1259 = vpack.c.bf16 %v1249, %v1248
    %v1260 = vpack.c.bf16 %v1251, %v1250
    %v1261 = vpack.c.bf16 %v1253, %v1252
    %v1262 = vld [vmem:[#allocation2 + $0x10] sm:$0xff]
    %v1263 = vld [vmem:[#allocation2 + $0x18] sm:$0xff]
    %v1264 = vld [vmem:[#allocation2 + $0x20] sm:$0xff]
    %v1265 = vld [vmem:[#allocation2 + $0x28] sm:$0xff]
    %v1266 = vld [vmem:[#allocation2 + $0x30] sm:$0xff]
    %v1267 = vld [vmem:[#allocation2 + $0x38] sm:$0xff]
    %v1268 = vld [vmem:[#allocation2 + $0x40] sm:$0xff]
    %v1269 = vld [vmem:[#allocation2 + $0x48] sm:$0xff]
    %v1270 = vld [vmem:[#allocation2 + $0x50] sm:$0xff]
    %v1271 = vld [vmem:[#allocation2 + $0x58] sm:$0xff]
    %v1272 = vld [vmem:[#allocation2 + $0x60] sm:$0xff]
    %v1273 = vld [vmem:[#allocation2 + $0x68] sm:$0xff]
    %v1274 = vld [vmem:[#allocation2 + $0x70] sm:$0xff]
    %v1275 = vld [vmem:[#allocation2 + $0x78] sm:$0xff]
    %v1276 = vld [vmem:[#allocation2 + $0x80] sm:$0xff]
    %v1277 = vld [vmem:[#allocation2 + $0x88] sm:$0xff]
    %v1278 = vpack.c.bf16 %v1263, %v1262
    %v1279 = vpack.c.bf16 %v1265, %v1264
    %v1280 = vpack.c.bf16 %v1267, %v1266
    %v1281 = vpack.c.bf16 %v1269, %v1268
    %v1282 = vpack.c.bf16 %v1271, %v1270
    %v1283 = vpack.c.bf16 %v1273, %v1272
    %v1284 = vpack.c.bf16 %v1275, %v1274
    %v1285 = vpack.c.bf16 %v1277, %v1276
    %v1286 = vld [vmem:[%s5] sm:$0xf]
    %v1287 = vld [vmem:[%s5 + $0x4] sm:$0xf]
    %v1288 = vld [vmem:[%s5 + $0x8] sm:$0xf]
    %v1289 = vld [vmem:[%s5 + $0xc] sm:$0xf]
    %v1290 = vpack.c.bf16 %v1206, %v1205
    %v1291 = vpack.c.bf16 %v1208, %v1207
    %v1292 = vpack.c.bf16 %v1210, %v1209
    %v1293 = vpack.c.bf16 %v1212, %v1211
    %v1294 = vpack.c.bf16 %v1214, %v1213
    %v1295 = vpack.c.bf16 %v1216, %v1215
    %v1296 = vpack.c.bf16 %v1218, %v1217
    %v1297 = vpack.c.bf16 %v1220, %v1219
    %s1298 = scalar_lea.vmem %s5, 16
    %v1299 = vld [vmem:[%s1298] sm:$0xf]
    %v1300 = vld [vmem:[%s1298 + $0x4] sm:$0xf]
    %v1301 = vld [vmem:[%s1298 + $0x8] sm:$0xf]
    %v1302 = vld [vmem:[%s1298 + $0xc] sm:$0xf]
    %v1307 = vunpack.c.l.b16 %v1299
    %v1308 = vunpack.c.l.b16 %v1300
    %v1309 = vunpack.c.l.b16 %v1301
    %v1310 = vunpack.c.l.b16 %v1302
    %v1311 = vpack.c.b16 %v1308, %v1307
    %v1312 = vpack.c.b16 %v1310, %v1309
    %v1316 = vsel %vm1221, %v1290, 0
    %v1319 = vsel %vm1221, %v1291, 0
    %v1322 = vsel %vm1221, %v1292, 0
    %v1325 = vsel %vm1221, %v1293, 0
    %v1328 = vsel %vm1221, %v1294, 0
    %v1331 = vsel %vm1221, %v1295, 0
    %v1334 = vsel %vm1221, %v1296, 0
    %v1337 = vsel %vm1221, %v1297, 0
    %1339 = vmatprep.subr.bf16.mxu0 0
    %1340 = vmatpush1.bf16.msra.mxu0 %v1311
    %1341 = vmatprep.subr.bf16.mxu0 0
    %1342 = vmatpush1.bf16.msra.mxu0 %v1312
    %1343 = vmatprep.subr.bf16.mxu0 0
    %1344 = vmatpush1.bf16.msra.mxu0 0
    %1345 = vmatprep.subr.bf16.mxu0 0
    %1346 = vmatpush1.bf16.msra.mxu0 0
    %1347 = vmatprep.subr.bf16.mxu0 0
    %1348 = vmatpush1.bf16.msra.mxu0 0
    %1349 = vmatprep.subr.bf16.mxu0 0
    %1350 = vmatpush1.bf16.msra.mxu0 0
    %1351 = vmatprep.subr.bf16.mxu0 0
    %1352 = vmatpush1.bf16.msra.mxu0 0
    %1353 = vmatprep.subr.bf16.mxu0 0
    %1354 = vmatpush1.bf16.msra.mxu0 0
    %1355 = vmatprep.subr.bf16.mxu0 0
    %1356 = vmatpush1.bf16.msra.mxu0 0
    %1357 = vmatprep.subr.bf16.mxu0 0
    %1358 = vmatpush1.bf16.msra.mxu0 0
    %1359 = vmatprep.subr.bf16.mxu0 0
    %1360 = vmatpush1.bf16.msra.mxu0 0
    %1361 = vmatprep.subr.bf16.mxu0 0
    %1362 = vmatpush1.bf16.msra.mxu0 0
    %1363 = vmatprep.subr.bf16.mxu0 0
    %1364 = vmatpush1.bf16.msra.mxu0 0
    %1365 = vmatprep.subr.bf16.mxu0 0
    %1366 = vmatpush1.bf16.msra.mxu0 0
    %1367 = vmatprep.subr.bf16.mxu0 0
    %1368 = vmatpush1.bf16.msra.mxu0 0
    %1369 = vmatprep.subr.bf16.mxu0 0
    %1370 = vmatpush1.bf16.msra.mxu0 0
    %1371 = vmatprep.mubr.bf16.mxu0 0
    %1372 = vmatmul.mubr.bf16.gmra.mrb[0].mxu0 %v1316
    %v1373 = vpop.f32.mrb[0].mxu0
    %v1374 = vadd.f32 0.0, %v1373
    %v1375 = vpop.f32.mrb[0].mxu0
    %v1376 = vpop.f32.mrb[0].mxu0
    %v1377 = vadd.f32 0.0, %v1376
    %v1378 = vpop.f32.mrb[0].mxu0
    %1379 = vmatprep.mubr.bf16.mxu0 0
    %1380 = vmatmul.mubr.bf16.gmra.mrb[0].mxu0 %v1319
    %v1381 = vpop.f32.mrb[0].mxu0
    %v1382 = vadd.f32 0.0, %v1381
    %v1383 = vpop.f32.mrb[0].mxu0
    %v1384 = vpop.f32.mrb[0].mxu0
    %v1385 = vadd.f32 0.0, %v1384
    %v1386 = vpop.f32.mrb[0].mxu0
    %1387 = vmatprep.mubr.bf16.mxu0 0
    %1388 = vmatmul.mubr.bf16.gmra.mrb[0].mxu0 %v1322
    %v1389 = vpop.f32.mrb[0].mxu0
    %v1390 = vadd.f32 0.0, %v1389
    %v1391 = vpop.f32.mrb[0].mxu0
    %v1392 = vpop.f32.mrb[0].mxu0
    %v1393 = vadd.f32 0.0, %v1392
    %v1394 = vpop.f32.mrb[0].mxu0
    %1395 = vmatprep.mubr.bf16.mxu0 0
    %1396 = vmatmul.mubr.bf16.gmra.mrb[0].mxu0 %v1325
    %v1397 = vpop.f32.mrb[0].mxu0
    %v1398 = vadd.f32 0.0, %v1397
    %v1399 = vpop.f32.mrb[0].mxu0
    %v1400 = vpop.f32.mrb[0].mxu0
    %v1401 = vadd.f32 0.0, %v1400
    %v1402 = vpop.f32.mrb[0].mxu0
    %1403 = vmatprep.mubr.bf16.mxu0 0
    %1404 = vmatmul.mubr.bf16.gmra.mrb[0].mxu0 %v1328
    %v1405 = vpop.f32.mrb[0].mxu0
    %v1406 = vadd.f32 0.0, %v1405
    %v1407 = vpop.f32.mrb[0].mxu0
    %v1408 = vpop.f32.mrb[0].mxu0
    %v1409 = vadd.f32 0.0, %v1408
    %v1410 = vpop.f32.mrb[0].mxu0
    %1411 = vmatprep.mubr.bf16.mxu0 0
    %1412 = vmatmul.mubr.bf16.gmra.mrb[0].mxu0 %v1331
    %v1413 = vpop.f32.mrb[0].mxu0
    %v1414 = vadd.f32 0.0, %v1413
    %v1415 = vpop.f32.mrb[0].mxu0
    %v1416 = vpop.f32.mrb[0].mxu0
    %v1417 = vadd.f32 0.0, %v1416
    %v1418 = vpop.f32.mrb[0].mxu0
    %1419 = vmatprep.mubr.bf16.mxu0 0
    %1420 = vmatmul.mubr.bf16.gmra.mrb[0].mxu0 %v1334
    %v1421 = vpop.f32.mrb[0].mxu0
    %v1422 = vadd.f32 0.0, %v1421
    %v1423 = vpop.f32.mrb[0].mxu0
    %v1424 = vpop.f32.mrb[0].mxu0
    %v1425 = vadd.f32 0.0, %v1424
    %v1426 = vpop.f32.mrb[0].mxu0
    %1427 = vmatprep.mubr.bf16.mxu0 0
    %1428 = vmatmul.mubr.bf16.gmra.mrb[0].mxu0 %v1337
    %v1429 = vpop.f32.mrb[0].mxu0
    %v1430 = vadd.f32 0.0, %v1429
    %v1431 = vpop.f32.mrb[0].mxu0
    %v1432 = vpop.f32.mrb[0].mxu0
    %v1433 = vadd.f32 0.0, %v1432
    %v1434 = vpop.f32.mrb[0].mxu0
    %1435 = vdwg.mxu0
    %v1440 = vunpack.c.l.b16 %v1286
    %v1441 = vunpack.c.l.b16 %v1287
    %v1442 = vunpack.c.l.b16 %v1288
    %v1443 = vunpack.c.l.b16 %v1289
    %v1444 = vpack.c.b16 %v1441, %v1440
    %v1445 = vpack.c.b16 %v1443, %v1442
    %v1449 = vsel %vm1221, %v1254, 0
    %v1452 = vsel %vm1221, %v1255, 0
    %v1455 = vsel %vm1221, %v1256, 0
    %v1458 = vsel %vm1221, %v1257, 0
    %v1461 = vsel %vm1221, %v1258, 0
    %v1464 = vsel %vm1221, %v1259, 0
    %v1467 = vsel %vm1221, %v1260, 0
    %v1470 = vsel %vm1221, %v1261, 0
    %1472 = vmatprep.subr.bf16.mxu0 0
    %1473 = vmatpush1.bf16.msra.mxu0 %v1444
    %1474 = vmatprep.subr.bf16.mxu0 0
    %1475 = vmatpush1.bf16.msra.mxu0 %v1445
    %1476 = vmatprep.subr.bf16.mxu0 0
    %1477 = vmatpush1.bf16.msra.mxu0 0
    %1478 = vmatprep.subr.bf16.mxu0 0
    %1479 = vmatpush1.bf16.msra.mxu0 0
    %1480 = vmatprep.subr.bf16.mxu0 0
    %1481 = vmatpush1.bf16.msra.mxu0 0
    %1482 = vmatprep.subr.bf16.mxu0 0
    %1483 = vmatpush1.bf16.msra.mxu0 0
    %1484 = vmatprep.subr.bf16.mxu0 0
    %1485 = vmatpush1.bf16.msra.mxu0 0
    %1486 = vmatprep.subr.bf16.mxu0 0
    %1487 = vmatpush1.bf16.msra.mxu0 0
    %1488 = vmatprep.subr.bf16.mxu0 0
    %1489 = vmatpush1.bf16.msra.mxu0 0
    %1490 = vmatprep.subr.bf16.mxu0 0
    %1491 = vmatpush1.bf16.msra.mxu0 0
    %1492 = vmatprep.subr.bf16.mxu0 0
    %1493 = vmatpush1.bf16.msra.mxu0 0
    %1494 = vmatprep.subr.bf16.mxu0 0
    %1495 = vmatpush1.bf16.msra.mxu0 0
    %1496 = vmatprep.subr.bf16.mxu0 0
    %1497 = vmatpush1.bf16.msra.mxu0 0
    %1498 = vmatprep.subr.bf16.mxu0 0
    %1499 = vmatpush1.bf16.msra.mxu0 0
    %1500 = vmatprep.subr.bf16.mxu0 0
    %1501 = vmatpush1.bf16.msra.mxu0 0
    %1502 = vmatprep.subr.bf16.mxu0 0
    %1503 = vmatpush1.bf16.msra.mxu0 0
    %1504 = vmatprep.mubr.bf16.mxu0 0
    %1505 = vmatmul.mubr.bf16.gmra.mrb[0].mxu0 %v1449
    %v1506 = vpop.f32.mrb[0].mxu0
    %v1507 = vadd.f32 %v1374, %v1506
    %v1508 = vpop.f32.mrb[0].mxu0
    %v1509 = vpop.f32.mrb[0].mxu0
    %v1510 = vadd.f32 %v1377, %v1509
    %v1511 = vpop.f32.mrb[0].mxu0
    %1512 = vmatprep.mubr.bf16.mxu0 0
    %1513 = vmatmul.mubr.bf16.gmra.mrb[0].mxu0 %v1452
    %v1514 = vpop.f32.mrb[0].mxu0
    %v1515 = vadd.f32 %v1382, %v1514
    %v1516 = vpop.f32.mrb[0].mxu0
    %v1517 = vpop.f32.mrb[0].mxu0
    %v1518 = vadd.f32 %v1385, %v1517
    %v1519 = vpop.f32.mrb[0].mxu0
    %1520 = vmatprep.mubr.bf16.mxu0 0
    %1521 = vmatmul.mubr.bf16.gmra.mrb[0].mxu0 %v1455
    %v1522 = vpop.f32.mrb[0].mxu0
    %v1523 = vadd.f32 %v1390, %v1522
    %v1524 = vpop.f32.mrb[0].mxu0
    %v1525 = vpop.f32.mrb[0].mxu0
    %v1526 = vadd.f32 %v1393, %v1525
    %v1527 = vpop.f32.mrb[0].mxu0
    %1528 = vmatprep.mubr.bf16.mxu0 0
    %1529 = vmatmul.mubr.bf16.gmra.mrb[0].mxu0 %v1458
    %v1530 = vpop.f32.mrb[0].mxu0
    %v1531 = vadd.f32 %v1398, %v1530
    %v1532 = vpop.f32.mrb[0].mxu0
    %v1533 = vpop.f32.mrb[0].mxu0
    %v1534 = vadd.f32 %v1401, %v1533
    %v1535 = vpop.f32.mrb[0].mxu0
    %1536 = vmatprep.mubr.bf16.mxu0 0
    %1537 = vmatmul.mubr.bf16.gmra.mrb[0].mxu0 %v1461
    %v1538 = vpop.f32.mrb[0].mxu0
    %v1539 = vadd.f32 %v1406, %v1538
    %v1540 = vpop.f32.mrb[0].mxu0
    %v1541 = vpop.f32.mrb[0].mxu0
    %v1542 = vadd.f32 %v1409, %v1541
    %v1543 = vpop.f32.mrb[0].mxu0
    %1544 = vmatprep.mubr.bf16.mxu0 0
    %1545 = vmatmul.mubr.bf16.gmra.mrb[0].mxu0 %v1464
    %v1546 = vpop.f32.mrb[0].mxu0
    %v1547 = vadd.f32 %v1414, %v1546
    %v1548 = vpop.f32.mrb[0].mxu0
    %v1549 = vpop.f32.mrb[0].mxu0
    %v1550 = vadd.f32 %v1417, %v1549
    %v1551 = vpop.f32.mrb[0].mxu0
    %1552 = vmatprep.mubr.bf16.mxu0 0
    %1553 = vmatmul.mubr.bf16.gmra.mrb[0].mxu0 %v1467
    %v1554 = vpop.f32.mrb[0].mxu0
    %v1555 = vadd.f32 %v1422, %v1554
    %v1556 = vpop.f32.mrb[0].mxu0
    %v1557 = vpop.f32.mrb[0].mxu0
    %v1558 = vadd.f32 %v1425, %v1557
    %v1559 = vpop.f32.mrb[0].mxu0
    %1560 = vmatprep.mubr.bf16.mxu0 0
    %1561 = vmatmul.mubr.bf16.gmra.mrb[0].mxu0 %v1470
    %v1562 = vpop.f32.mrb[0].mxu0
    %v1563 = vadd.f32 %v1430, %v1562
    %v1564 = vpop.f32.mrb[0].mxu0
    %v1565 = vpop.f32.mrb[0].mxu0
    %v1566 = vadd.f32 %v1433, %v1565
    %v1567 = vpop.f32.mrb[0].mxu0
    %1568 = vdwg.mxu0
    %s1569 = scalar_lea.vmem %s5, 32
    %v1570 = vld [vmem:[%s1569] sm:$0xf]
    %v1571 = vld [vmem:[%s1569 + $0x4] sm:$0xf]
    %v1572 = vld [vmem:[%s1569 + $0x8] sm:$0xf]
    %v1573 = vld [vmem:[%s1569 + $0xc] sm:$0xf]
    %v1578 = vunpack.c.l.b16 %v1570
    %v1579 = vunpack.c.l.b16 %v1571
    %v1580 = vunpack.c.l.b16 %v1572
    %v1581 = vunpack.c.l.b16 %v1573
    %v1582 = vpack.c.b16 %v1579, %v1578
    %v1583 = vpack.c.b16 %v1581, %v1580
    %v1587 = vsel %vm1221, %v1278, 0
    %v1590 = vsel %vm1221, %v1279, 0
    %v1593 = vsel %vm1221, %v1280, 0
    %v1596 = vsel %vm1221, %v1281, 0
    %v1599 = vsel %vm1221, %v1282, 0
    %v1602 = vsel %vm1221, %v1283, 0
    %v1605 = vsel %vm1221, %v1284, 0
    %v1608 = vsel %vm1221, %v1285, 0
    %1610 = vmatprep.subr.bf16.mxu0 0
    %1611 = vmatpush1.bf16.msra.mxu0 %v1582
    %1612 = vmatprep.subr.bf16.mxu0 0
    %1613 = vmatpush1.bf16.msra.mxu0 %v1583
    %1614 = vmatprep.subr.bf16.mxu0 0
    %1615 = vmatpush1.bf16.msra.mxu0 0
    %1616 = vmatprep.subr.bf16.mxu0 0
    %1617 = vmatpush1.bf16.msra.mxu0 0
    %1618 = vmatprep.subr.bf16.mxu0 0
    %1619 = vmatpush1.bf16.msra.mxu0 0
    %1620 = vmatprep.subr.bf16.mxu0 0
    %1621 = vmatpush1.bf16.msra.mxu0 0
    %1622 = vmatprep.subr.bf16.mxu0 0
    %1623 = vmatpush1.bf16.msra.mxu0 0
    %1624 = vmatprep.subr.bf16.mxu0 0
    %1625 = vmatpush1.bf16.msra.mxu0 0
    %1626 = vmatprep.subr.bf16.mxu0 0
    %1627 = vmatpush1.bf16.msra.mxu0 0
    %1628 = vmatprep.subr.bf16.mxu0 0
    %1629 = vmatpush1.bf16.msra.mxu0 0
    %1630 = vmatprep.subr.bf16.mxu0 0
    %1631 = vmatpush1.bf16.msra.mxu0 0
    %1632 = vmatprep.subr.bf16.mxu0 0
    %1633 = vmatpush1.bf16.msra.mxu0 0
    %1634 = vmatprep.subr.bf16.mxu0 0
    %1635 = vmatpush1.bf16.msra.mxu0 0
    %1636 = vmatprep.subr.bf16.mxu0 0
    %1637 = vmatpush1.bf16.msra.mxu0 0
    %1638 = vmatprep.subr.bf16.mxu0 0
    %1639 = vmatpush1.bf16.msra.mxu0 0
    %1640 = vmatprep.subr.bf16.mxu0 0
    %1641 = vmatpush1.bf16.msra.mxu0 0
    %1642 = vmatprep.mubr.bf16.mxu0 0
    %1643 = vmatmul.mubr.bf16.gmra.mrb[0].mxu0 %v1587
    %v1644 = vpop.f32.mrb[0].mxu0
    %v1645 = vadd.f32 0.0, %v1644
    %v1646 = vpop.f32.mrb[0].mxu0
    %v1647 = vpop.f32.mrb[0].mxu0
    %v1648 = vadd.f32 0.0, %v1647
    %v1649 = vpop.f32.mrb[0].mxu0
    %1650 = vmatprep.mubr.bf16.mxu0 0
    %1651 = vmatmul.mubr.bf16.gmra.mrb[0].mxu0 %v1590
    %v1652 = vpop.f32.mrb[0].mxu0
    %v1653 = vadd.f32 0.0, %v1652
    %v1654 = vpop.f32.mrb[0].mxu0
    %v1655 = vpop.f32.mrb[0].mxu0
    %v1656 = vadd.f32 0.0, %v1655
    %v1657 = vpop.f32.mrb[0].mxu0
    %1658 = vmatprep.mubr.bf16.mxu0 0
    %1659 = vmatmul.mubr.bf16.gmra.mrb[0].mxu0 %v1593
    %v1660 = vpop.f32.mrb[0].mxu0
    %v1661 = vadd.f32 0.0, %v1660
    %v1662 = vpop.f32.mrb[0].mxu0
    %v1663 = vpop.f32.mrb[0].mxu0
    %v1664 = vadd.f32 0.0, %v1663
    %v1665 = vpop.f32.mrb[0].mxu0
    %1666 = vmatprep.mubr.bf16.mxu0 0
    %1667 = vmatmul.mubr.bf16.gmra.mrb[0].mxu0 %v1596
    %v1668 = vpop.f32.mrb[0].mxu0
    %v1669 = vadd.f32 0.0, %v1668
    %v1670 = vpop.f32.mrb[0].mxu0
    %v1671 = vpop.f32.mrb[0].mxu0
    %v1672 = vadd.f32 0.0, %v1671
    %v1673 = vpop.f32.mrb[0].mxu0
    %1674 = vmatprep.mubr.bf16.mxu0 0
    %1675 = vmatmul.mubr.bf16.gmra.mrb[0].mxu0 %v1599
    %v1676 = vpop.f32.mrb[0].mxu0
    %v1677 = vadd.f32 0.0, %v1676
    %v1678 = vpop.f32.mrb[0].mxu0
    %v1679 = vpop.f32.mrb[0].mxu0
    %v1680 = vadd.f32 0.0, %v1679
    %v1681 = vpop.f32.mrb[0].mxu0
    %1682 = vmatprep.mubr.bf16.mxu0 0
    %1683 = vmatmul.mubr.bf16.gmra.mrb[0].mxu0 %v1602
    %v1684 = vpop.f32.mrb[0].mxu0
    %v1685 = vadd.f32 0.0, %v1684
    %v1686 = vpop.f32.mrb[0].mxu0
    %v1687 = vpop.f32.mrb[0].mxu0
    %v1688 = vadd.f32 0.0, %v1687
    %v1689 = vpop.f32.mrb[0].mxu0
    %1690 = vmatprep.mubr.bf16.mxu0 0
    %1691 = vmatmul.mubr.bf16.gmra.mrb[0].mxu0 %v1605
    %v1692 = vpop.f32.mrb[0].mxu0
    %v1693 = vadd.f32 0.0, %v1692
    %v1694 = vpop.f32.mrb[0].mxu0
    %v1695 = vpop.f32.mrb[0].mxu0
    %v1696 = vadd.f32 0.0, %v1695
    %v1697 = vpop.f32.mrb[0].mxu0
    %1698 = vmatprep.mubr.bf16.mxu0 0
    %1699 = vmatmul.mubr.bf16.gmra.mrb[0].mxu0 %v1608
    %v1700 = vpop.f32.mrb[0].mxu0
    %v1701 = vadd.f32 0.0, %v1700
    %v1702 = vpop.f32.mrb[0].mxu0
    %v1703 = vpop.f32.mrb[0].mxu0
    %v1704 = vadd.f32 0.0, %v1703
    %v1705 = vpop.f32.mrb[0].mxu0
    %1706 = vdwg.mxu0
    %v1707 = vadd.f32 %v1507, %v1645
    %v1708 = vadd.f32 %v1510, %v1648
    %v1709 = vadd.f32 %v1515, %v1653
    %v1710 = vadd.f32 %v1518, %v1656
    %v1711 = vadd.f32 %v1523, %v1661
    %v1712 = vadd.f32 %v1526, %v1664
    %v1713 = vadd.f32 %v1531, %v1669
    %v1714 = vadd.f32 %v1534, %v1672
    %v1715 = vadd.f32 %v1539, %v1677
    %v1716 = vadd.f32 %v1542, %v1680
    %v1717 = vadd.f32 %v1547, %v1685
    %v1718 = vadd.f32 %v1550, %v1688
    %v1719 = vadd.f32 %v1555, %v1693
    %v1720 = vadd.f32 %v1558, %v1696
    %v1721 = vadd.f32 %v1563, %v1701
    %v1722 = vadd.f32 %v1566, %v1704
    %v1723 = vld [vmem:[%s6] sm:$0x1]
    %v1725 = vlaneseq
    %v1726 = vshrl.u32 %v1725, 7
    %v1727 = vsub.s32 0, %v1726
    %v1728 = vrot.slane %v1723, %v1727
    %v1730 = vadd.f32 %v1707, %v1728
    %v1731 = vadd.f32 %v1708, %v1728
    %v1732 = vadd.f32 %v1709, %v1728
    %v1733 = vadd.f32 %v1710, %v1728
    %v1734 = vadd.f32 %v1711, %v1728
    %v1735 = vadd.f32 %v1712, %v1728
    %v1736 = vadd.f32 %v1713, %v1728
    %v1737 = vadd.f32 %v1714, %v1728
    %v1738 = vadd.f32 %v1715, %v1728
    %v1739 = vadd.f32 %v1716, %v1728
    %v1740 = vadd.f32 %v1717, %v1728
    %v1741 = vadd.f32 %v1718, %v1728
    %v1742 = vadd.f32 %v1719, %v1728
    %v1743 = vadd.f32 %v1720, %v1728
    %v1744 = vadd.f32 %v1721, %v1728
    %v1745 = vadd.f32 %v1722, %v1728
    %v1746 = vmax.f32 %v1730, 0.0
    %v1747 = vmax.f32 %v1731, 0.0
    %v1748 = vmax.f32 %v1732, 0.0
    %v1749 = vmax.f32 %v1733, 0.0
    %v1750 = vmax.f32 %v1734, 0.0
    %v1751 = vmax.f32 %v1735, 0.0
    %v1752 = vmax.f32 %v1736, 0.0
    %v1753 = vmax.f32 %v1737, 0.0
    %v1754 = vmax.f32 %v1738, 0.0
    %v1755 = vmax.f32 %v1739, 0.0
    %v1756 = vmax.f32 %v1740, 0.0
    %v1757 = vmax.f32 %v1741, 0.0
    %v1758 = vmax.f32 %v1742, 0.0
    %v1759 = vmax.f32 %v1743, 0.0
    %v1760 = vmax.f32 %v1744, 0.0
    %v1761 = vmax.f32 %v1745, 0.0
    %vm1762 = vcmask 523264
    %1763 = vst.msk [vmem:[#allocation2 + $0x8] sm:$0xff] %vm1762, %v1746
    %1764 = vst.msk [vmem:[#allocation2 + $0x10] sm:$0xff] %vm1762, %v1747
    %1765 = vst.msk [vmem:[#allocation2 + $0x18] sm:$0xff] %vm1762, %v1748
    %1766 = vst.msk [vmem:[#allocation2 + $0x20] sm:$0xff] %vm1762, %v1749
    %1767 = vst.msk [vmem:[#allocation2 + $0x28] sm:$0xff] %vm1762, %v1750
    %1768 = vst.msk [vmem:[#allocation2 + $0x30] sm:$0xff] %vm1762, %v1751
    %1769 = vst.msk [vmem:[#allocation2 + $0x38] sm:$0xff] %vm1762, %v1752
    %1770 = vst.msk [vmem:[#allocation2 + $0x40] sm:$0xff] %vm1762, %v1753
    %1771 = vst.msk [vmem:[#allocation2 + $0x48] sm:$0xff] %vm1762, %v1754
    %1772 = vst.msk [vmem:[#allocation2 + $0x50] sm:$0xff] %vm1762, %v1755
    %1773 = vst.msk [vmem:[#allocation2 + $0x58] sm:$0xff] %vm1762, %v1756
    %1774 = vst.msk [vmem:[#allocation2 + $0x60] sm:$0xff] %vm1762, %v1757
    %1775 = vst.msk [vmem:[#allocation2 + $0x68] sm:$0xff] %vm1762, %v1758
    %1776 = vst.msk [vmem:[#allocation2 + $0x70] sm:$0xff] %vm1762, %v1759
    %1777 = vst.msk [vmem:[#allocation2 + $0x78] sm:$0xff] %vm1762, %v1760
    %1778 = vst.msk [vmem:[#allocation2 + $0x80] sm:$0xff] %vm1762, %v1761
    %v1779 = vld [vmem:[#allocation2] sm:$0xff]
    %v1780 = vld [vmem:[#allocation2 + $0x8] sm:$0xff]
    %v1781 = vld [vmem:[#allocation2 + $0x10] sm:$0xff]
    %v1782 = vld [vmem:[#allocation2 + $0x18] sm:$0xff]
    %v1783 = vld [vmem:[#allocation2 + $0x20] sm:$0xff]
    %v1784 = vld [vmem:[#allocation2 + $0x28] sm:$0xff]
    %v1785 = vld [vmem:[#allocation2 + $0x30] sm:$0xff]
    %v1786 = vld [vmem:[#allocation2 + $0x38] sm:$0xff]
    %v1787 = vld [vmem:[#allocation2 + $0x40] sm:$0xff]
    %v1788 = vld [vmem:[#allocation2 + $0x48] sm:$0xff]
    %v1789 = vld [vmem:[#allocation2 + $0x50] sm:$0xff]
    %v1790 = vld [vmem:[#allocation2 + $0x58] sm:$0xff]
    %v1791 = vld [vmem:[#allocation2 + $0x60] sm:$0xff]
    %v1792 = vld [vmem:[#allocation2 + $0x68] sm:$0xff]
    %v1793 = vld [vmem:[#allocation2 + $0x70] sm:$0xff]
    %v1794 = vld [vmem:[#allocation2 + $0x78] sm:$0xff]
    %v1795 = vpack.c.bf16 %v1780, %v1779
    %v1796 = vpack.c.bf16 %v1782, %v1781
    %v1797 = vpack.c.bf16 %v1784, %v1783
    %v1798 = vpack.c.bf16 %v1786, %v1785
    %v1799 = vpack.c.bf16 %v1788, %v1787
    %v1800 = vpack.c.bf16 %v1790, %v1789
    %v1801 = vpack.c.bf16 %v1792, %v1791
    %v1802 = vpack.c.bf16 %v1794, %v1793
    %v1803 = vld [vmem:[#allocation2 + $0x10] sm:$0xff]
    %v1804 = vld [vmem:[#allocation2 + $0x18] sm:$0xff]
    %v1805 = vld [vmem:[#allocation2 + $0x20] sm:$0xff]
    %v1806 = vld [vmem:[#allocation2 + $0x28] sm:$0xff]
    %v1807 = vld [vmem:[#allocation2 + $0x30] sm:$0xff]
    %v1808 = vld [vmem:[#allocation2 + $0x38] sm:$0xff]
    %v1809 = vld [vmem:[#allocation2 + $0x40] sm:$0xff]
    %v1810 = vld [vmem:[#allocation2 + $0x48] sm:$0xff]
    %v1811 = vld [vmem:[#allocation2 + $0x50] sm:$0xff]
    %v1812 = vld [vmem:[#allocation2 + $0x58] sm:$0xff]
    %v1813 = vld [vmem:[#allocation2 + $0x60] sm:$0xff]
    %v1814 = vld [vmem:[#allocation2 + $0x68] sm:$0xff]
    %v1815 = vld [vmem:[#allocation2 + $0x70] sm:$0xff]
    %v1816 = vld [vmem:[#allocation2 + $0x78] sm:$0xff]
    %v1817 = vld [vmem:[#allocation2 + $0x80] sm:$0xff]
    %v1818 = vld [vmem:[#allocation2 + $0x88] sm:$0xff]
    %v1819 = vpack.c.bf16 %v1804, %v1803
    %v1820 = vpack.c.bf16 %v1806, %v1805
    %v1821 = vpack.c.bf16 %v1808, %v1807
    %v1822 = vpack.c.bf16 %v1810, %v1809
    %v1823 = vpack.c.bf16 %v1812, %v1811
    %v1824 = vpack.c.bf16 %v1814, %v1813
    %v1825 = vpack.c.bf16 %v1816, %v1815
    %v1826 = vpack.c.bf16 %v1818, %v1817
    %v1827 = vld [vmem:[%s7] sm:$0xf]
    %v1828 = vld [vmem:[%s7 + $0x4] sm:$0xf]
    %v1829 = vld [vmem:[%s7 + $0x8] sm:$0xf]
    %v1830 = vld [vmem:[%s7 + $0xc] sm:$0xf]
    %v1831 = vld [vmem:[%s7 + $0x10] sm:$0xf]
    %v1832 = vld [vmem:[%s7 + $0x14] sm:$0xf]
    %v1833 = vld [vmem:[%s7 + $0x18] sm:$0xf]
    %v1834 = vld [vmem:[%s7 + $0x1c] sm:$0xf]
    %v1835 = vpack.c.bf16 %v1747, %v1746
    %v1836 = vpack.c.bf16 %v1749, %v1748
    %v1837 = vpack.c.bf16 %v1751, %v1750
    %v1838 = vpack.c.bf16 %v1753, %v1752
    %v1839 = vpack.c.bf16 %v1755, %v1754
    %v1840 = vpack.c.bf16 %v1757, %v1756
    %v1841 = vpack.c.bf16 %v1759, %v1758
    %v1842 = vpack.c.bf16 %v1761, %v1760
    %s1843 = scalar_lea.vmem %s7, 32
    %v1844 = vld [vmem:[%s1843] sm:$0xf]
    %v1845 = vld [vmem:[%s1843 + $0x4] sm:$0xf]
    %v1846 = vld [vmem:[%s1843 + $0x8] sm:$0xf]
    %v1847 = vld [vmem:[%s1843 + $0xc] sm:$0xf]
    %v1848 = vld [vmem:[%s1843 + $0x10] sm:$0xf]
    %v1849 = vld [vmem:[%s1843 + $0x14] sm:$0xf]
    %v1850 = vld [vmem:[%s1843 + $0x18] sm:$0xf]
    %v1851 = vld [vmem:[%s1843 + $0x1c] sm:$0xf]
    %v1860 = vunpack.c.l.b16 %v1844
    %v1861 = vunpack.c.l.b16 %v1845
    %v1862 = vunpack.c.l.b16 %v1846
    %v1863 = vunpack.c.l.b16 %v1847
    %v1864 = vunpack.c.l.b16 %v1848
    %v1865 = vunpack.c.l.b16 %v1849
    %v1866 = vunpack.c.l.b16 %v1850
    %v1867 = vunpack.c.l.b16 %v1851
    %v1868 = vpack.c.b16 %v1861, %v1860
    %v1869 = vpack.c.b16 %v1863, %v1862
    %v1870 = vpack.c.b16 %v1865, %v1864
    %v1871 = vpack.c.b16 %v1867, %v1866
    %v1877 = vsel %vm1762, %v1835, 0
    %v1880 = vsel %vm1762, %v1836, 0
    %v1883 = vsel %vm1762, %v1837, 0
    %v1886 = vsel %vm1762, %v1838, 0
    %v1889 = vsel %vm1762, %v1839, 0
    %v1892 = vsel %vm1762, %v1840, 0
    %v1895 = vsel %vm1762, %v1841, 0
    %v1898 = vsel %vm1762, %v1842, 0
    %1900 = vmatprep.subr.bf16.mxu0 0
    %1901 = vmatpush1.bf16.msra.mxu0 %v1868
    %1902 = vmatprep.subr.bf16.mxu0 0
    %1903 = vmatpush1.bf16.msra.mxu0 %v1869
    %1904 = vmatprep.subr.bf16.mxu0 0
    %1905 = vmatpush1.bf16.msra.mxu0 %v1870
    %1906 = vmatprep.subr.bf16.mxu0 0
    %1907 = vmatpush1.bf16.msra.mxu0 %v1871
    %1908 = vmatprep.subr.bf16.mxu0 0
    %1909 = vmatpush1.bf16.msra.mxu0 0
    %1910 = vmatprep.subr.bf16.mxu0 0
    %1911 = vmatpush1.bf16.msra.mxu0 0
    %1912 = vmatprep.subr.bf16.mxu0 0
    %1913 = vmatpush1.bf16.msra.mxu0 0
    %1914 = vmatprep.subr.bf16.mxu0 0
    %1915 = vmatpush1.bf16.msra.mxu0 0
    %1916 = vmatprep.subr.bf16.mxu0 0
    %1917 = vmatpush1.bf16.msra.mxu0 0
    %1918 = vmatprep.subr.bf16.mxu0 0
    %1919 = vmatpush1.bf16.msra.mxu0 0
    %1920 = vmatprep.subr.bf16.mxu0 0
    %1921 = vmatpush1.bf16.msra.mxu0 0
    %1922 = vmatprep.subr.bf16.mxu0 0
    %1923 = vmatpush1.bf16.msra.mxu0 0
    %1924 = vmatprep.subr.bf16.mxu0 0
    %1925 = vmatpush1.bf16.msra.mxu0 0
    %1926 = vmatprep.subr.bf16.mxu0 0
    %1927 = vmatpush1.bf16.msra.mxu0 0
    %1928 = vmatprep.subr.bf16.mxu0 0
    %1929 = vmatpush1.bf16.msra.mxu0 0
    %1930 = vmatprep.subr.bf16.mxu0 0
    %1931 = vmatpush1.bf16.msra.mxu0 0
    %1932 = vmatprep.mubr.bf16.mxu0 0
    %1933 = vmatmul.mubr.bf16.gmra.mrb[0].mxu0 %v1877
    %v1934 = vpop.f32.mrb[0].mxu0
    %v1935 = vadd.f32 0.0, %v1934
    %v1936 = vpop.f32.mrb[0].mxu0
    %v1937 = vpop.f32.mrb[0].mxu0
    %v1938 = vadd.f32 0.0, %v1937
    %v1939 = vpop.f32.mrb[0].mxu0
    %1940 = vmatprep.mubr.bf16.mxu0 0
    %1941 = vmatmul.mubr.bf16.gmra.mrb[0].mxu0 %v1880
    %v1942 = vpop.f32.mrb[0].mxu0
    %v1943 = vadd.f32 0.0, %v1942
    %v1944 = vpop.f32.mrb[0].mxu0
    %v1945 = vpop.f32.mrb[0].mxu0
    %v1946 = vadd.f32 0.0, %v1945
    %v1947 = vpop.f32.mrb[0].mxu0
    %1948 = vmatprep.mubr.bf16.mxu0 0
    %1949 = vmatmul.mubr.bf16.gmra.mrb[0].mxu0 %v1883
    %v1950 = vpop.f32.mrb[0].mxu0
    %v1951 = vadd.f32 0.0, %v1950
    %v1952 = vpop.f32.mrb[0].mxu0
    %v1953 = vpop.f32.mrb[0].mxu0
    %v1954 = vadd.f32 0.0, %v1953
    %v1955 = vpop.f32.mrb[0].mxu0
    %1956 = vmatprep.mubr.bf16.mxu0 0
    %1957 = vmatmul.mubr.bf16.gmra.mrb[0].mxu0 %v1886
    %v1958 = vpop.f32.mrb[0].mxu0
    %v1959 = vadd.f32 0.0, %v1958
    %v1960 = vpop.f32.mrb[0].mxu0
    %v1961 = vpop.f32.mrb[0].mxu0
    %v1962 = vadd.f32 0.0, %v1961
    %v1963 = vpop.f32.mrb[0].mxu0
    %1964 = vmatprep.mubr.bf16.mxu0 0
    %1965 = vmatmul.mubr.bf16.gmra.mrb[0].mxu0 %v1889
    %v1966 = vpop.f32.mrb[0].mxu0
    %v1967 = vadd.f32 0.0, %v1966
    %v1968 = vpop.f32.mrb[0].mxu0
    %v1969 = vpop.f32.mrb[0].mxu0
    %v1970 = vadd.f32 0.0, %v1969
    %v1971 = vpop.f32.mrb[0].mxu0
    %1972 = vmatprep.mubr.bf16.mxu0 0
    %1973 = vmatmul.mubr.bf16.gmra.mrb[0].mxu0 %v1892
    %v1974 = vpop.f32.mrb[0].mxu0
    %v1975 = vadd.f32 0.0, %v1974
    %v1976 = vpop.f32.mrb[0].mxu0
    %v1977 = vpop.f32.mrb[0].mxu0
    %v1978 = vadd.f32 0.0, %v1977
    %v1979 = vpop.f32.mrb[0].mxu0
    %1980 = vmatprep.mubr.bf16.mxu0 0
    %1981 = vmatmul.mubr.bf16.gmra.mrb[0].mxu0 %v1895
    %v1982 = vpop.f32.mrb[0].mxu0
    %v1983 = vadd.f32 0.0, %v1982
    %v1984 = vpop.f32.mrb[0].mxu0
    %v1985 = vpop.f32.mrb[0].mxu0
    %v1986 = vadd.f32 0.0, %v1985
    %v1987 = vpop.f32.mrb[0].mxu0
    %1988 = vmatprep.mubr.bf16.mxu0 0
    %1989 = vmatmul.mubr.bf16.gmra.mrb[0].mxu0 %v1898
    %v1990 = vpop.f32.mrb[0].mxu0
    %v1991 = vadd.f32 0.0, %v1990
    %v1992 = vpop.f32.mrb[0].mxu0
    %v1993 = vpop.f32.mrb[0].mxu0
    %v1994 = vadd.f32 0.0, %v1993
    %v1995 = vpop.f32.mrb[0].mxu0
    %1996 = vdwg.mxu0
    %v2005 = vunpack.c.l.b16 %v1827
    %v2006 = vunpack.c.l.b16 %v1828
    %v2007 = vunpack.c.l.b16 %v1829
    %v2008 = vunpack.c.l.b16 %v1830
    %v2009 = vunpack.c.l.b16 %v1831
    %v2010 = vunpack.c.l.b16 %v1832
    %v2011 = vunpack.c.l.b16 %v1833
    %v2012 = vunpack.c.l.b16 %v1834
    %v2013 = vpack.c.b16 %v2006, %v2005
    %v2014 = vpack.c.b16 %v2008, %v2007
    %v2015 = vpack.c.b16 %v2010, %v2009
    %v2016 = vpack.c.b16 %v2012, %v2011
    %v2022 = vsel %vm1762, %v1795, 0
    %v2025 = vsel %vm1762, %v1796, 0
    %v2028 = vsel %vm1762, %v1797, 0
    %v2031 = vsel %vm1762, %v1798, 0
    %v2034 = vsel %vm1762, %v1799, 0
    %v2037 = vsel %vm1762, %v1800, 0
    %v2040 = vsel %vm1762, %v1801, 0
    %v2043 = vsel %vm1762, %v1802, 0
    %2045 = vmatprep.subr.bf16.mxu0 0
    %2046 = vmatpush1.bf16.msra.mxu0 %v2013
    %2047 = vmatprep.subr.bf16.mxu0 0
    %2048 = vmatpush1.bf16.msra.mxu0 %v2014
    %2049 = vmatprep.subr.bf16.mxu0 0
    %2050 = vmatpush1.bf16.msra.mxu0 %v2015
    %2051 = vmatprep.subr.bf16.mxu0 0
    %2052 = vmatpush1.bf16.msra.mxu0 %v2016
    %2053 = vmatprep.subr.bf16.mxu0 0
    %2054 = vmatpush1.bf16.msra.mxu0 0
    %2055 = vmatprep.subr.bf16.mxu0 0
    %2056 = vmatpush1.bf16.msra.mxu0 0
    %2057 = vmatprep.subr.bf16.mxu0 0
    %2058 = vmatpush1.bf16.msra.mxu0 0
    %2059 = vmatprep.subr.bf16.mxu0 0
    %2060 = vmatpush1.bf16.msra.mxu0 0
    %2061 = vmatprep.subr.bf16.mxu0 0
    %2062 = vmatpush1.bf16.msra.mxu0 0
    %2063 = vmatprep.subr.bf16.mxu0 0
    %2064 = vmatpush1.bf16.msra.mxu0 0
    %2065 = vmatprep.subr.bf16.mxu0 0
    %2066 = vmatpush1.bf16.msra.mxu0 0
    %2067 = vmatprep.subr.bf16.mxu0 0
    %2068 = vmatpush1.bf16.msra.mxu0 0
    %2069 = vmatprep.subr.bf16.mxu0 0
    %2070 = vmatpush1.bf16.msra.mxu0 0
    %2071 = vmatprep.subr.bf16.mxu0 0
    %2072 = vmatpush1.bf16.msra.mxu0 0
    %2073 = vmatprep.subr.bf16.mxu0 0
    %2074 = vmatpush1.bf16.msra.mxu0 0
    %2075 = vmatprep.subr.bf16.mxu0 0
    %2076 = vmatpush1.bf16.msra.mxu0 0
    %2077 = vmatprep.mubr.bf16.mxu0 0
    %2078 = vmatmul.mubr.bf16.gmra.mrb[0].mxu0 %v2022
    %v2079 = vpop.f32.mrb[0].mxu0
    %v2080 = vadd.f32 %v1935, %v2079
    %v2081 = vpop.f32.mrb[0].mxu0
    %v2082 = vpop.f32.mrb[0].mxu0
    %v2083 = vadd.f32 %v1938, %v2082
    %v2084 = vpop.f32.mrb[0].mxu0
    %2085 = vmatprep.mubr.bf16.mxu0 0
    %2086 = vmatmul.mubr.bf16.gmra.mrb[0].mxu0 %v2025
    %v2087 = vpop.f32.mrb[0].mxu0
    %v2088 = vadd.f32 %v1943, %v2087
    %v2089 = vpop.f32.mrb[0].mxu0
    %v2090 = vpop.f32.mrb[0].mxu0
    %v2091 = vadd.f32 %v1946, %v2090
    %v2092 = vpop.f32.mrb[0].mxu0
    %2093 = vmatprep.mubr.bf16.mxu0 0
    %2094 = vmatmul.mubr.bf16.gmra.mrb[0].mxu0 %v2028
    %v2095 = vpop.f32.mrb[0].mxu0
    %v2096 = vadd.f32 %v1951, %v2095
    %v2097 = vpop.f32.mrb[0].mxu0
    %v2098 = vpop.f32.mrb[0].mxu0
    %v2099 = vadd.f32 %v1954, %v2098
    %v2100 = vpop.f32.mrb[0].mxu0
    %2101 = vmatprep.mubr.bf16.mxu0 0
    %2102 = vmatmul.mubr.bf16.gmra.mrb[0].mxu0 %v2031
    %v2103 = vpop.f32.mrb[0].mxu0
    %v2104 = vadd.f32 %v1959, %v2103
    %v2105 = vpop.f32.mrb[0].mxu0
    %v2106 = vpop.f32.mrb[0].mxu0
    %v2107 = vadd.f32 %v1962, %v2106
    %v2108 = vpop.f32.mrb[0].mxu0
    %2109 = vmatprep.mubr.bf16.mxu0 0
    %2110 = vmatmul.mubr.bf16.gmra.mrb[0].mxu0 %v2034
    %v2111 = vpop.f32.mrb[0].mxu0
    %v2112 = vadd.f32 %v1967, %v2111
    %v2113 = vpop.f32.mrb[0].mxu0
    %v2114 = vpop.f32.mrb[0].mxu0
    %v2115 = vadd.f32 %v1970, %v2114
    %v2116 = vpop.f32.mrb[0].mxu0
    %2117 = vmatprep.mubr.bf16.mxu0 0
    %2118 = vmatmul.mubr.bf16.gmra.mrb[0].mxu0 %v2037
    %v2119 = vpop.f32.mrb[0].mxu0
    %v2120 = vadd.f32 %v1975, %v2119
    %v2121 = vpop.f32.mrb[0].mxu0
    %v2122 = vpop.f32.mrb[0].mxu0
    %v2123 = vadd.f32 %v1978, %v2122
    %v2124 = vpop.f32.mrb[0].mxu0
    %2125 = vmatprep.mubr.bf16.mxu0 0
    %2126 = vmatmul.mubr.bf16.gmra.mrb[0].mxu0 %v2040
    %v2127 = vpop.f32.mrb[0].mxu0
    %v2128 = vadd.f32 %v1983, %v2127
    %v2129 = vpop.f32.mrb[0].mxu0
    %v2130 = vpop.f32.mrb[0].mxu0
    %v2131 = vadd.f32 %v1986, %v2130
    %v2132 = vpop.f32.mrb[0].mxu0
    %2133 = vmatprep.mubr.bf16.mxu0 0
    %2134 = vmatmul.mubr.bf16.gmra.mrb[0].mxu0 %v2043
    %v2135 = vpop.f32.mrb[0].mxu0
    %v2136 = vadd.f32 %v1991, %v2135
    %v2137 = vpop.f32.mrb[0].mxu0
    %v2138 = vpop.f32.mrb[0].mxu0
    %v2139 = vadd.f32 %v1994, %v2138
    %v2140 = vpop.f32.mrb[0].mxu0
    %2141 = vdwg.mxu0
    %s2142 = scalar_lea.vmem %s7, 64
    %v2143 = vld [vmem:[%s2142] sm:$0xf]
    %v2144 = vld [vmem:[%s2142 + $0x4] sm:$0xf]
    %v2145 = vld [vmem:[%s2142 + $0x8] sm:$0xf]
    %v2146 = vld [vmem:[%s2142 + $0xc] sm:$0xf]
    %v2147 = vld [vmem:[%s2142 + $0x10] sm:$0xf]
    %v2148 = vld [vmem:[%s2142 + $0x14] sm:$0xf]
    %v2149 = vld [vmem:[%s2142 + $0x18] sm:$0xf]
    %v2150 = vld [vmem:[%s2142 + $0x1c] sm:$0xf]
    %v2159 = vunpack.c.l.b16 %v2143
    %v2160 = vunpack.c.l.b16 %v2144
    %v2161 = vunpack.c.l.b16 %v2145
    %v2162 = vunpack.c.l.b16 %v2146
    %v2163 = vunpack.c.l.b16 %v2147
    %v2164 = vunpack.c.l.b16 %v2148
    %v2165 = vunpack.c.l.b16 %v2149
    %v2166 = vunpack.c.l.b16 %v2150
    %v2167 = vpack.c.b16 %v2160, %v2159
    %v2168 = vpack.c.b16 %v2162, %v2161
    %v2169 = vpack.c.b16 %v2164, %v2163
    %v2170 = vpack.c.b16 %v2166, %v2165
    %v2176 = vsel %vm1762, %v1819, 0
    %v2179 = vsel %vm1762, %v1820, 0
    %v2182 = vsel %vm1762, %v1821, 0
    %v2185 = vsel %vm1762, %v1822, 0
    %v2188 = vsel %vm1762, %v1823, 0
    %v2191 = vsel %vm1762, %v1824, 0
    %v2194 = vsel %vm1762, %v1825, 0
    %v2197 = vsel %vm1762, %v1826, 0
    %2199 = vmatprep.subr.bf16.mxu0 0
    %2200 = vmatpush1.bf16.msra.mxu0 %v2167
    %2201 = vmatprep.subr.bf16.mxu0 0
    %2202 = vmatpush1.bf16.msra.mxu0 %v2168
    %2203 = vmatprep.subr.bf16.mxu0 0
    %2204 = vmatpush1.bf16.msra.mxu0 %v2169
    %2205 = vmatprep.subr.bf16.mxu0 0
    %2206 = vmatpush1.bf16.msra.mxu0 %v2170
    %2207 = vmatprep.subr.bf16.mxu0 0
    %2208 = vmatpush1.bf16.msra.mxu0 0
    %2209 = vmatprep.subr.bf16.mxu0 0
    %2210 = vmatpush1.bf16.msra.mxu0 0
    %2211 = vmatprep.subr.bf16.mxu0 0
    %2212 = vmatpush1.bf16.msra.mxu0 0
    %2213 = vmatprep.subr.bf16.mxu0 0
    %2214 = vmatpush1.bf16.msra.mxu0 0
    %2215 = vmatprep.subr.bf16.mxu0 0
    %2216 = vmatpush1.bf16.msra.mxu0 0
    %2217 = vmatprep.subr.bf16.mxu0 0
    %2218 = vmatpush1.bf16.msra.mxu0 0
    %2219 = vmatprep.subr.bf16.mxu0 0
    %2220 = vmatpush1.bf16.msra.mxu0 0
    %2221 = vmatprep.subr.bf16.mxu0 0
    %2222 = vmatpush1.bf16.msra.mxu0 0
    %2223 = vmatprep.subr.bf16.mxu0 0
    %2224 = vmatpush1.bf16.msra.mxu0 0
    %2225 = vmatprep.subr.bf16.mxu0 0
    %2226 = vmatpush1.bf16.msra.mxu0 0
    %2227 = vmatprep.subr.bf16.mxu0 0
    %2228 = vmatpush1.bf16.msra.mxu0 0
    %2229 = vmatprep.subr.bf16.mxu0 0
    %2230 = vmatpush1.bf16.msra.mxu0 0
    %2231 = vmatprep.mubr.bf16.mxu0 0
    %2232 = vmatmul.mubr.bf16.gmra.mrb[0].mxu0 %v2176
    %v2233 = vpop.f32.mrb[0].mxu0
    %v2234 = vadd.f32 0.0, %v2233
    %v2235 = vpop.f32.mrb[0].mxu0
    %v2236 = vpop.f32.mrb[0].mxu0
    %v2237 = vadd.f32 0.0, %v2236
    %v2238 = vpop.f32.mrb[0].mxu0
    %2239 = vmatprep.mubr.bf16.mxu0 0
    %2240 = vmatmul.mubr.bf16.gmra.mrb[0].mxu0 %v2179
    %v2241 = vpop.f32.mrb[0].mxu0
    %v2242 = vadd.f32 0.0, %v2241
    %v2243 = vpop.f32.mrb[0].mxu0
    %v2244 = vpop.f32.mrb[0].mxu0
    %v2245 = vadd.f32 0.0, %v2244
    %v2246 = vpop.f32.mrb[0].mxu0
    %2247 = vmatprep.mubr.bf16.mxu0 0
    %2248 = vmatmul.mubr.bf16.gmra.mrb[0].mxu0 %v2182
    %v2249 = vpop.f32.mrb[0].mxu0
    %v2250 = vadd.f32 0.0, %v2249
    %v2251 = vpop.f32.mrb[0].mxu0
    %v2252 = vpop.f32.mrb[0].mxu0
    %v2253 = vadd.f32 0.0, %v2252
    %v2254 = vpop.f32.mrb[0].mxu0
    %2255 = vmatprep.mubr.bf16.mxu0 0
    %2256 = vmatmul.mubr.bf16.gmra.mrb[0].mxu0 %v2185
    %v2257 = vpop.f32.mrb[0].mxu0
    %v2258 = vadd.f32 0.0, %v2257
    %v2259 = vpop.f32.mrb[0].mxu0
    %v2260 = vpop.f32.mrb[0].mxu0
    %v2261 = vadd.f32 0.0, %v2260
    %v2262 = vpop.f32.mrb[0].mxu0
    %2263 = vmatprep.mubr.bf16.mxu0 0
    %2264 = vmatmul.mubr.bf16.gmra.mrb[0].mxu0 %v2188
    %v2265 = vpop.f32.mrb[0].mxu0
    %v2266 = vadd.f32 0.0, %v2265
    %v2267 = vpop.f32.mrb[0].mxu0
    %v2268 = vpop.f32.mrb[0].mxu0
    %v2269 = vadd.f32 0.0, %v2268
    %v2270 = vpop.f32.mrb[0].mxu0
    %2271 = vmatprep.mubr.bf16.mxu0 0
    %2272 = vmatmul.mubr.bf16.gmra.mrb[0].mxu0 %v2191
    %v2273 = vpop.f32.mrb[0].mxu0
    %v2274 = vadd.f32 0.0, %v2273
    %v2275 = vpop.f32.mrb[0].mxu0
    %v2276 = vpop.f32.mrb[0].mxu0
    %v2277 = vadd.f32 0.0, %v2276
    %v2278 = vpop.f32.mrb[0].mxu0
    %2279 = vmatprep.mubr.bf16.mxu0 0
    %2280 = vmatmul.mubr.bf16.gmra.mrb[0].mxu0 %v2194
    %v2281 = vpop.f32.mrb[0].mxu0
    %v2282 = vadd.f32 0.0, %v2281
    %v2283 = vpop.f32.mrb[0].mxu0
    %v2284 = vpop.f32.mrb[0].mxu0
    %v2285 = vadd.f32 0.0, %v2284
    %v2286 = vpop.f32.mrb[0].mxu0
    %2287 = vmatprep.mubr.bf16.mxu0 0
    %2288 = vmatmul.mubr.bf16.gmra.mrb[0].mxu0 %v2197
    %v2289 = vpop.f32.mrb[0].mxu0
    %v2290 = vadd.f32 0.0, %v2289
    %v2291 = vpop.f32.mrb[0].mxu0
    %v2292 = vpop.f32.mrb[0].mxu0
    %v2293 = vadd.f32 0.0, %v2292
    %v2294 = vpop.f32.mrb[0].mxu0
    %2295 = vdwg.mxu0
    %v2296 = vadd.f32 %v2080, %v2234
    %v2297 = vadd.f32 %v2083, %v2237
    %v2298 = vadd.f32 %v2088, %v2242
    %v2299 = vadd.f32 %v2091, %v2245
    %v2300 = vadd.f32 %v2096, %v2250
    %v2301 = vadd.f32 %v2099, %v2253
    %v2302 = vadd.f32 %v2104, %v2258
    %v2303 = vadd.f32 %v2107, %v2261
    %v2304 = vadd.f32 %v2112, %v2266
    %v2305 = vadd.f32 %v2115, %v2269
    %v2306 = vadd.f32 %v2120, %v2274
    %v2307 = vadd.f32 %v2123, %v2277
    %v2308 = vadd.f32 %v2128, %v2282
    %v2309 = vadd.f32 %v2131, %v2285
    %v2310 = vadd.f32 %v2136, %v2290
    %v2311 = vadd.f32 %v2139, %v2293
    %v2312 = vld [vmem:[%s8] sm:$0x1]
    %v2314 = vlaneseq
    %v2315 = vshrl.u32 %v2314, 7
    %v2316 = vsub.s32 0, %v2315
    %v2317 = vrot.slane %v2312, %v2316
    %v2319 = vadd.f32 %v2296, %v2317
    %v2320 = vadd.f32 %v2297, %v2317
    %v2321 = vadd.f32 %v2298, %v2317
    %v2322 = vadd.f32 %v2299, %v2317
    %v2323 = vadd.f32 %v2300, %v2317
    %v2324 = vadd.f32 %v2301, %v2317
    %v2325 = vadd.f32 %v2302, %v2317
    %v2326 = vadd.f32 %v2303, %v2317
    %v2327 = vadd.f32 %v2304, %v2317
    %v2328 = vadd.f32 %v2305, %v2317
    %v2329 = vadd.f32 %v2306, %v2317
    %v2330 = vadd.f32 %v2307, %v2317
    %v2331 = vadd.f32 %v2308, %v2317
    %v2332 = vadd.f32 %v2309, %v2317
    %v2333 = vadd.f32 %v2310, %v2317
    %v2334 = vadd.f32 %v2311, %v2317
    %v2335 = vmax.f32 %v2319, 0.0
    %v2336 = vmax.f32 %v2320, 0.0
    %v2337 = vmax.f32 %v2321, 0.0
    %v2338 = vmax.f32 %v2322, 0.0
    %v2339 = vmax.f32 %v2323, 0.0
    %v2340 = vmax.f32 %v2324, 0.0
    %v2341 = vmax.f32 %v2325, 0.0
    %v2342 = vmax.f32 %v2326, 0.0
    %v2343 = vmax.f32 %v2327, 0.0
    %v2344 = vmax.f32 %v2328, 0.0
    %v2345 = vmax.f32 %v2329, 0.0
    %v2346 = vmax.f32 %v2330, 0.0
    %v2347 = vmax.f32 %v2331, 0.0
    %v2348 = vmax.f32 %v2332, 0.0
    %v2349 = vmax.f32 %v2333, 0.0
    %v2350 = vmax.f32 %v2334, 0.0
    %s2351 = smul.u32 4, 16
    %s2352 = smul.u32 %s2351, 16
    %s2353 = smul.u32 %s2352, 2
    %s2354 = sshll.u32 %s2353, 4
    %2355 = dma.done [#allocation4], %s2354
    %v2356 = vpack.c.bf16 %v2335, %v2335
    %v2357 = vld [vmem:[#allocation3] sm:$0xff]
    %v2358 = vld [vmem:[#allocation3 + $0x8] sm:$0xff]
    %v2359 = vld [vmem:[#allocation3 + $0x10] sm:$0xff]
    %v2360 = vld [vmem:[#allocation3 + $0x18] sm:$0xff]
    %v2361 = vld [vmem:[#allocation3 + $0x20] sm:$0xff]
    %v2362 = vld [vmem:[#allocation3 + $0x28] sm:$0xff]
    %v2363 = vld [vmem:[#allocation3 + $0x30] sm:$0xff]
    %v2364 = vld [vmem:[#allocation3 + $0x38] sm:$0xff]
    %v2365 = vld [vmem:[#allocation3 + $0x40] sm:$0xff]
    %v2366 = vld [vmem:[#allocation3 + $0x48] sm:$0xff]
    %v2367 = vld [vmem:[#allocation3 + $0x50] sm:$0xff]
    %v2368 = vld [vmem:[#allocation3 + $0x58] sm:$0xff]
    %v2369 = vld [vmem:[#allocation3 + $0x60] sm:$0xff]
    %v2370 = vld [vmem:[#allocation3 + $0x68] sm:$0xff]
    %v2371 = vld [vmem:[#allocation3 + $0x70] sm:$0xff]
    %v2372 = vld [vmem:[#allocation3 + $0x78] sm:$0xff]
    %v2373 = vpack.c.bf16 %v2336, %v2336
    %s2374 = scalar_lea.vmem [#allocation3], 128
    %v2375 = vld [vmem:[%s2374] sm:$0xff]
    %v2376 = vld [vmem:[%s2374 + $0x8] sm:$0xff]
    %v2377 = vld [vmem:[%s2374 + $0x10] sm:$0xff]
    %v2378 = vld [vmem:[%s2374 + $0x18] sm:$0xff]
    %v2379 = vld [vmem:[%s2374 + $0x20] sm:$0xff]
    %v2380 = vld [vmem:[%s2374 + $0x28] sm:$0xff]
    %v2381 = vld [vmem:[%s2374 + $0x30] sm:$0xff]
    %v2382 = vld [vmem:[%s2374 + $0x38] sm:$0xff]
    %v2383 = vld [vmem:[%s2374 + $0x40] sm:$0xff]
    %v2384 = vld [vmem:[%s2374 + $0x48] sm:$0xff]
    %v2385 = vld [vmem:[%s2374 + $0x50] sm:$0xff]
    %v2386 = vld [vmem:[%s2374 + $0x58] sm:$0xff]
    %v2387 = vld [vmem:[%s2374 + $0x60] sm:$0xff]
    %v2388 = vld [vmem:[%s2374 + $0x68] sm:$0xff]
    %v2389 = vld [vmem:[%s2374 + $0x70] sm:$0xff]
    %v2390 = vld [vmem:[%s2374 + $0x78] sm:$0xff]
    %v2391 = vpack.c.bf16 %v2337, %v2337
    %s2392 = scalar_lea.vmem [#allocation3], 256
    %v2393 = vld [vmem:[%s2392] sm:$0xff]
    %v2394 = vld [vmem:[%s2392 + $0x8] sm:$0xff]
    %v2395 = vld [vmem:[%s2392 + $0x10] sm:$0xff]
    %v2396 = vld [vmem:[%s2392 + $0x18] sm:$0xff]
    %v2397 = vld [vmem:[%s2392 + $0x20] sm:$0xff]
    %v2398 = vld [vmem:[%s2392 + $0x28] sm:$0xff]
    %v2399 = vld [vmem:[%s2392 + $0x30] sm:$0xff]
    %v2400 = vld [vmem:[%s2392 + $0x38] sm:$0xff]
    %v2401 = vld [vmem:[%s2392 + $0x40] sm:$0xff]
    %v2402 = vld [vmem:[%s2392 + $0x48] sm:$0xff]
    %v2403 = vld [vmem:[%s2392 + $0x50] sm:$0xff]
    %v2404 = vld [vmem:[%s2392 + $0x58] sm:$0xff]
    %v2405 = vld [vmem:[%s2392 + $0x60] sm:$0xff]
    %v2406 = vld [vmem:[%s2392 + $0x68] sm:$0xff]
    %v2407 = vld [vmem:[%s2392 + $0x70] sm:$0xff]
    %v2408 = vld [vmem:[%s2392 + $0x78] sm:$0xff]
    %v2409 = vpack.c.bf16 %v2338, %v2338
    %s2410 = scalar_lea.vmem [#allocation3], 384
    %v2411 = vld [vmem:[%s2410] sm:$0xff]
    %v2412 = vld [vmem:[%s2410 + $0x8] sm:$0xff]
    %v2413 = vld [vmem:[%s2410 + $0x10] sm:$0xff]
    %v2414 = vld [vmem:[%s2410 + $0x18] sm:$0xff]
    %v2415 = vld [vmem:[%s2410 + $0x20] sm:$0xff]
    %v2416 = vld [vmem:[%s2410 + $0x28] sm:$0xff]
    %v2417 = vld [vmem:[%s2410 + $0x30] sm:$0xff]
    %v2418 = vld [vmem:[%s2410 + $0x38] sm:$0xff]
    %v2419 = vld [vmem:[%s2410 + $0x40] sm:$0xff]
    %v2420 = vld [vmem:[%s2410 + $0x48] sm:$0xff]
    %v2421 = vld [vmem:[%s2410 + $0x50] sm:$0xff]
    %v2422 = vld [vmem:[%s2410 + $0x58] sm:$0xff]
    %v2423 = vld [vmem:[%s2410 + $0x60] sm:$0xff]
    %v2424 = vld [vmem:[%s2410 + $0x68] sm:$0xff]
    %v2425 = vld [vmem:[%s2410 + $0x70] sm:$0xff]
    %v2426 = vld [vmem:[%s2410 + $0x78] sm:$0xff]
    %v2427 = vpack.c.bf16 %v2339, %v2339
    %s2428 = scalar_lea.vmem [#allocation3], 512
    %v2429 = vld [vmem:[%s2428] sm:$0xff]
    %v2430 = vld [vmem:[%s2428 + $0x8] sm:$0xff]
    %v2431 = vld [vmem:[%s2428 + $0x10] sm:$0xff]
    %v2432 = vld [vmem:[%s2428 + $0x18] sm:$0xff]
    %v2433 = vld [vmem:[%s2428 + $0x20] sm:$0xff]
    %v2434 = vld [vmem:[%s2428 + $0x28] sm:$0xff]
    %v2435 = vld [vmem:[%s2428 + $0x30] sm:$0xff]
    %v2436 = vld [vmem:[%s2428 + $0x38] sm:$0xff]
    %v2437 = vld [vmem:[%s2428 + $0x40] sm:$0xff]
    %v2438 = vld [vmem:[%s2428 + $0x48] sm:$0xff]
    %v2439 = vld [vmem:[%s2428 + $0x50] sm:$0xff]
    %v2440 = vld [vmem:[%s2428 + $0x58] sm:$0xff]
    %v2441 = vld [vmem:[%s2428 + $0x60] sm:$0xff]
    %v2442 = vld [vmem:[%s2428 + $0x68] sm:$0xff]
    %v2443 = vld [vmem:[%s2428 + $0x70] sm:$0xff]
    %v2444 = vld [vmem:[%s2428 + $0x78] sm:$0xff]
    %2445 = vmatprep.subr.bf16.mxu0 %v2430
    %2446 = vmatpush1.bf16.msra.mxu0 %v2429
    %2447 = vmatprep.subr.bf16.mxu0 %v2432
    %2448 = vmatpush1.bf16.msra.mxu0 %v2431
    %2449 = vmatprep.subr.bf16.mxu0 %v2434
    %2450 = vmatpush1.bf16.msra.mxu0 %v2433
    %2451 = vmatprep.subr.bf16.mxu0 %v2436
    %2452 = vmatpush1.bf16.msra.mxu0 %v2435
    %2453 = vmatprep.subr.bf16.mxu0 %v2438
    %2454 = vmatpush1.bf16.msra.mxu0 %v2437
    %2455 = vmatprep.subr.bf16.mxu0 %v2440
    %2456 = vmatpush1.bf16.msra.mxu0 %v2439
    %2457 = vmatprep.subr.bf16.mxu0 %v2442
    %2458 = vmatpush1.bf16.msra.mxu0 %v2441
    %2459 = vmatprep.subr.bf16.mxu0 %v2444
    %2460 = vmatpush1.bf16.msra.mxu0 %v2443
    %2461 = vmatprep.subr.bf16.mxu0 0
    %2462 = vmatpush1.bf16.msra.mxu0 0
    %2463 = vmatprep.subr.bf16.mxu0 0
    %2464 = vmatpush1.bf16.msra.mxu0 0
    %2465 = vmatprep.subr.bf16.mxu0 0
    %2466 = vmatpush1.bf16.msra.mxu0 0
    %2467 = vmatprep.subr.bf16.mxu0 0
    %2468 = vmatpush1.bf16.msra.mxu0 0
    %2469 = vmatprep.subr.bf16.mxu0 0
    %2470 = vmatpush1.bf16.msra.mxu0 0
    %2471 = vmatprep.subr.bf16.mxu0 0
    %2472 = vmatpush1.bf16.msra.mxu0 0
    %2473 = vmatprep.subr.bf16.mxu0 0
    %2474 = vmatpush1.bf16.msra.mxu0 0
    %2475 = vmatprep.subr.bf16.mxu0 0
    %2476 = vmatpush1.bf16.msra.mxu0 0
    %2477 = vmatprep.mubr.bf16.mxu0 0
    %2478 = vmatmul.mubr.bf16.gmra.mrb[0].mxu0 %v2427
    %v2479 = vpop.f32.mrb[0].mxu0
    %v2480 = vadd.f32 0.0, %v2479
    %v2481 = vpop.f32.mrb[0].mxu0
    %v2482 = vadd.f32 0.0, %v2481
    %v2483 = vpop.f32.mrb[0].mxu0
    %v2484 = vpop.f32.mrb[0].mxu0
    %2485 = vdwg.mxu0
    %2486 = vmatprep.subr.bf16.mxu0 %v2358
    %2487 = vmatpush1.bf16.msra.mxu0 %v2357
    %2488 = vmatprep.subr.bf16.mxu0 %v2360
    %2489 = vmatpush1.bf16.msra.mxu0 %v2359
    %2490 = vmatprep.subr.bf16.mxu0 %v2362
    %2491 = vmatpush1.bf16.msra.mxu0 %v2361
    %2492 = vmatprep.subr.bf16.mxu0 %v2364
    %2493 = vmatpush1.bf16.msra.mxu0 %v2363
    %2494 = vmatprep.subr.bf16.mxu0 %v2366
    %2495 = vmatpush1.bf16.msra.mxu0 %v2365
    %2496 = vmatprep.subr.bf16.mxu0 %v2368
    %2497 = vmatpush1.bf16.msra.mxu0 %v2367
    %2498 = vmatprep.subr.bf16.mxu0 %v2370
    %2499 = vmatpush1.bf16.msra.mxu0 %v2369
    %2500 = vmatprep.subr.bf16.mxu0 %v2372
    %2501 = vmatpush1.bf16.msra.mxu0 %v2371
    %2502 = vmatprep.subr.bf16.mxu0 0
    %2503 = vmatpush1.bf16.msra.mxu0 0
    %2504 = vmatprep.subr.bf16.mxu0 0
    %2505 = vmatpush1.bf16.msra.mxu0 0
    %2506 = vmatprep.subr.bf16.mxu0 0
    %2507 = vmatpush1.bf16.msra.mxu0 0
    %2508 = vmatprep.subr.bf16.mxu0 0
    %2509 = vmatpush1.bf16.msra.mxu0 0
    %2510 = vmatprep.subr.bf16.mxu0 0
    %2511 = vmatpush1.bf16.msra.mxu0 0
    %2512 = vmatprep.subr.bf16.mxu0 0
    %2513 = vmatpush1.bf16.msra.mxu0 0
    %2514 = vmatprep.subr.bf16.mxu0 0
    %2515 = vmatpush1.bf16.msra.mxu0 0
    %2516 = vmatprep.subr.bf16.mxu0 0
    %2517 = vmatpush1.bf16.msra.mxu0 0
    %2518 = vmatprep.mubr.bf16.mxu0 0
    %2519 = vmatmul.mubr.bf16.gmra.mrb[0].mxu0 %v2356
    %v2520 = vpop.f32.mrb[0].mxu0
    %v2521 = vadd.f32 %v2480, %v2520
    %v2522 = vpop.f32.mrb[0].mxu0
    %v2523 = vadd.f32 %v2482, %v2522
    %v2524 = vpop.f32.mrb[0].mxu0
    %v2525 = vpop.f32.mrb[0].mxu0
    %2526 = vdwg.mxu0
    %v2527 = vpack.c.bf16 %v2340, %v2340
    %s2528 = scalar_lea.vmem [#allocation3], 640
    %v2529 = vld [vmem:[%s2528] sm:$0xff]
    %v2530 = vld [vmem:[%s2528 + $0x8] sm:$0xff]
    %v2531 = vld [vmem:[%s2528 + $0x10] sm:$0xff]
    %v2532 = vld [vmem:[%s2528 + $0x18] sm:$0xff]
    %v2533 = vld [vmem:[%s2528 + $0x20] sm:$0xff]
    %v2534 = vld [vmem:[%s2528 + $0x28] sm:$0xff]
    %v2535 = vld [vmem:[%s2528 + $0x30] sm:$0xff]
    %v2536 = vld [vmem:[%s2528 + $0x38] sm:$0xff]
    %v2537 = vld [vmem:[%s2528 + $0x40] sm:$0xff]
    %v2538 = vld [vmem:[%s2528 + $0x48] sm:$0xff]
    %v2539 = vld [vmem:[%s2528 + $0x50] sm:$0xff]
    %v2540 = vld [vmem:[%s2528 + $0x58] sm:$0xff]
    %v2541 = vld [vmem:[%s2528 + $0x60] sm:$0xff]
    %v2542 = vld [vmem:[%s2528 + $0x68] sm:$0xff]
    %v2543 = vld [vmem:[%s2528 + $0x70] sm:$0xff]
    %v2544 = vld [vmem:[%s2528 + $0x78] sm:$0xff]
    %2545 = vmatprep.subr.bf16.mxu0 %v2530
    %2546 = vmatpush1.bf16.msra.mxu0 %v2529
    %2547 = vmatprep.subr.bf16.mxu0 %v2532
    %2548 = vmatpush1.bf16.msra.mxu0 %v2531
    %2549 = vmatprep.subr.bf16.mxu0 %v2534
    %2550 = vmatpush1.bf16.msra.mxu0 %v2533
    %2551 = vmatprep.subr.bf16.mxu0 %v2536
    %2552 = vmatpush1.bf16.msra.mxu0 %v2535
    %2553 = vmatprep.subr.bf16.mxu0 %v2538
    %2554 = vmatpush1.bf16.msra.mxu0 %v2537
    %2555 = vmatprep.subr.bf16.mxu0 %v2540
    %2556 = vmatpush1.bf16.msra.mxu0 %v2539
    %2557 = vmatprep.subr.bf16.mxu0 %v2542
    %2558 = vmatpush1.bf16.msra.mxu0 %v2541
    %2559 = vmatprep.subr.bf16.mxu0 %v2544
    %2560 = vmatpush1.bf16.msra.mxu0 %v2543
    %2561 = vmatprep.subr.bf16.mxu0 0
    %2562 = vmatpush1.bf16.msra.mxu0 0
    %2563 = vmatprep.subr.bf16.mxu0 0
    %2564 = vmatpush1.bf16.msra.mxu0 0
    %2565 = vmatprep.subr.bf16.mxu0 0
    %2566 = vmatpush1.bf16.msra.mxu0 0
    %2567 = vmatprep.subr.bf16.mxu0 0
    %2568 = vmatpush1.bf16.msra.mxu0 0
    %2569 = vmatprep.subr.bf16.mxu0 0
    %2570 = vmatpush1.bf16.msra.mxu0 0
    %2571 = vmatprep.subr.bf16.mxu0 0
    %2572 = vmatpush1.bf16.msra.mxu0 0
    %2573 = vmatprep.subr.bf16.mxu0 0
    %2574 = vmatpush1.bf16.msra.mxu0 0
    %2575 = vmatprep.subr.bf16.mxu0 0
    %2576 = vmatpush1.bf16.msra.mxu0 0
    %2577 = vmatprep.mubr.bf16.mxu0 0
    %2578 = vmatmul.mubr.bf16.gmra.mrb[0].mxu0 %v2527
    %v2579 = vpop.f32.mrb[0].mxu0
    %v2580 = vadd.f32 0.0, %v2579
    %v2581 = vpop.f32.mrb[0].mxu0
    %v2582 = vadd.f32 0.0, %v2581
    %v2583 = vpop.f32.mrb[0].mxu0
    %v2584 = vpop.f32.mrb[0].mxu0
    %2585 = vdwg.mxu0
    %2586 = vmatprep.subr.bf16.mxu0 %v2376
    %2587 = vmatpush1.bf16.msra.mxu0 %v2375
    %2588 = vmatprep.subr.bf16.mxu0 %v2378
    %2589 = vmatpush1.bf16.msra.mxu0 %v2377
    %2590 = vmatprep.subr.bf16.mxu0 %v2380
    %2591 = vmatpush1.bf16.msra.mxu0 %v2379
    %2592 = vmatprep.subr.bf16.mxu0 %v2382
    %2593 = vmatpush1.bf16.msra.mxu0 %v2381
    %2594 = vmatprep.subr.bf16.mxu0 %v2384
    %2595 = vmatpush1.bf16.msra.mxu0 %v2383
    %2596 = vmatprep.subr.bf16.mxu0 %v2386
    %2597 = vmatpush1.bf16.msra.mxu0 %v2385
    %2598 = vmatprep.subr.bf16.mxu0 %v2388
    %2599 = vmatpush1.bf16.msra.mxu0 %v2387
    %2600 = vmatprep.subr.bf16.mxu0 %v2390
    %2601 = vmatpush1.bf16.msra.mxu0 %v2389
    %2602 = vmatprep.subr.bf16.mxu0 0
    %2603 = vmatpush1.bf16.msra.mxu0 0
    %2604 = vmatprep.subr.bf16.mxu0 0
    %2605 = vmatpush1.bf16.msra.mxu0 0
    %2606 = vmatprep.subr.bf16.mxu0 0
    %2607 = vmatpush1.bf16.msra.mxu0 0
    %2608 = vmatprep.subr.bf16.mxu0 0
    %2609 = vmatpush1.bf16.msra.mxu0 0
    %2610 = vmatprep.subr.bf16.mxu0 0
    %2611 = vmatpush1.bf16.msra.mxu0 0
    %2612 = vmatprep.subr.bf16.mxu0 0
    %2613 = vmatpush1.bf16.msra.mxu0 0
    %2614 = vmatprep.subr.bf16.mxu0 0
    %2615 = vmatpush1.bf16.msra.mxu0 0
    %2616 = vmatprep.subr.bf16.mxu0 0
    %2617 = vmatpush1.bf16.msra.mxu0 0
    %2618 = vmatprep.mubr.bf16.mxu0 0
    %2619 = vmatmul.mubr.bf16.gmra.mrb[0].mxu0 %v2373
    %v2620 = vpop.f32.mrb[0].mxu0
    %v2621 = vadd.f32 %v2580, %v2620
    %v2622 = vpop.f32.mrb[0].mxu0
    %v2623 = vadd.f32 %v2582, %v2622
    %v2624 = vpop.f32.mrb[0].mxu0
    %v2625 = vpop.f32.mrb[0].mxu0
    %2626 = vdwg.mxu0
    %v2627 = vpack.c.bf16 %v2341, %v2341
    %s2628 = scalar_lea.vmem [#allocation3], 768
    %v2629 = vld [vmem:[%s2628] sm:$0xff]
    %v2630 = vld [vmem:[%s2628 + $0x8] sm:$0xff]
    %v2631 = vld [vmem:[%s2628 + $0x10] sm:$0xff]
    %v2632 = vld [vmem:[%s2628 + $0x18] sm:$0xff]
    %v2633 = vld [vmem:[%s2628 + $0x20] sm:$0xff]
    %v2634 = vld [vmem:[%s2628 + $0x28] sm:$0xff]
    %v2635 = vld [vmem:[%s2628 + $0x30] sm:$0xff]
    %v2636 = vld [vmem:[%s2628 + $0x38] sm:$0xff]
    %v2637 = vld [vmem:[%s2628 + $0x40] sm:$0xff]
    %v2638 = vld [vmem:[%s2628 + $0x48] sm:$0xff]
    %v2639 = vld [vmem:[%s2628 + $0x50] sm:$0xff]
    %v2640 = vld [vmem:[%s2628 + $0x58] sm:$0xff]
    %v2641 = vld [vmem:[%s2628 + $0x60] sm:$0xff]
    %v2642 = vld [vmem:[%s2628 + $0x68] sm:$0xff]
    %v2643 = vld [vmem:[%s2628 + $0x70] sm:$0xff]
    %v2644 = vld [vmem:[%s2628 + $0x78] sm:$0xff]
    %2645 = vmatprep.subr.bf16.mxu0 %v2630
    %2646 = vmatpush1.bf16.msra.mxu0 %v2629
    %2647 = vmatprep.subr.bf16.mxu0 %v2632
    %2648 = vmatpush1.bf16.msra.mxu0 %v2631
    %2649 = vmatprep.subr.bf16.mxu0 %v2634
    %2650 = vmatpush1.bf16.msra.mxu0 %v2633
    %2651 = vmatprep.subr.bf16.mxu0 %v2636
    %2652 = vmatpush1.bf16.msra.mxu0 %v2635
    %2653 = vmatprep.subr.bf16.mxu0 %v2638
    %2654 = vmatpush1.bf16.msra.mxu0 %v2637
    %2655 = vmatprep.subr.bf16.mxu0 %v2640
    %2656 = vmatpush1.bf16.msra.mxu0 %v2639
    %2657 = vmatprep.subr.bf16.mxu0 %v2642
    %2658 = vmatpush1.bf16.msra.mxu0 %v2641
    %2659 = vmatprep.subr.bf16.mxu0 %v2644
    %2660 = vmatpush1.bf16.msra.mxu0 %v2643
    %2661 = vmatprep.subr.bf16.mxu0 0
    %2662 = vmatpush1.bf16.msra.mxu0 0
    %2663 = vmatprep.subr.bf16.mxu0 0
    %2664 = vmatpush1.bf16.msra.mxu0 0
    %2665 = vmatprep.subr.bf16.mxu0 0
    %2666 = vmatpush1.bf16.msra.mxu0 0
    %2667 = vmatprep.subr.bf16.mxu0 0
    %2668 = vmatpush1.bf16.msra.mxu0 0
    %2669 = vmatprep.subr.bf16.mxu0 0
    %2670 = vmatpush1.bf16.msra.mxu0 0
    %2671 = vmatprep.subr.bf16.mxu0 0
    %2672 = vmatpush1.bf16.msra.mxu0 0
    %2673 = vmatprep.subr.bf16.mxu0 0
    %2674 = vmatpush1.bf16.msra.mxu0 0
    %2675 = vmatprep.subr.bf16.mxu0 0
    %2676 = vmatpush1.bf16.msra.mxu0 0
    %2677 = vmatprep.mubr.bf16.mxu0 0
    %2678 = vmatmul.mubr.bf16.gmra.mrb[0].mxu0 %v2627
    %v2679 = vpop.f32.mrb[0].mxu0
    %v2680 = vadd.f32 0.0, %v2679
    %v2681 = vpop.f32.mrb[0].mxu0
    %v2682 = vadd.f32 0.0, %v2681
    %v2683 = vpop.f32.mrb[0].mxu0
    %v2684 = vpop.f32.mrb[0].mxu0
    %2685 = vdwg.mxu0
    %2686 = vmatprep.subr.bf16.mxu0 %v2394
    %2687 = vmatpush1.bf16.msra.mxu0 %v2393
    %2688 = vmatprep.subr.bf16.mxu0 %v2396
    %2689 = vmatpush1.bf16.msra.mxu0 %v2395
    %2690 = vmatprep.subr.bf16.mxu0 %v2398
    %2691 = vmatpush1.bf16.msra.mxu0 %v2397
    %2692 = vmatprep.subr.bf16.mxu0 %v2400
    %2693 = vmatpush1.bf16.msra.mxu0 %v2399
    %2694 = vmatprep.subr.bf16.mxu0 %v2402
    %2695 = vmatpush1.bf16.msra.mxu0 %v2401
    %2696 = vmatprep.subr.bf16.mxu0 %v2404
    %2697 = vmatpush1.bf16.msra.mxu0 %v2403
    %2698 = vmatprep.subr.bf16.mxu0 %v2406
    %2699 = vmatpush1.bf16.msra.mxu0 %v2405
    %2700 = vmatprep.subr.bf16.mxu0 %v2408
    %2701 = vmatpush1.bf16.msra.mxu0 %v2407
    %2702 = vmatprep.subr.bf16.mxu0 0
    %2703 = vmatpush1.bf16.msra.mxu0 0
    %2704 = vmatprep.subr.bf16.mxu0 0
    %2705 = vmatpush1.bf16.msra.mxu0 0
    %2706 = vmatprep.subr.bf16.mxu0 0
    %2707 = vmatpush1.bf16.msra.mxu0 0
    %2708 = vmatprep.subr.bf16.mxu0 0
    %2709 = vmatpush1.bf16.msra.mxu0 0
    %2710 = vmatprep.subr.bf16.mxu0 0
    %2711 = vmatpush1.bf16.msra.mxu0 0
    %2712 = vmatprep.subr.bf16.mxu0 0
    %2713 = vmatpush1.bf16.msra.mxu0 0
    %2714 = vmatprep.subr.bf16.mxu0 0
    %2715 = vmatpush1.bf16.msra.mxu0 0
    %2716 = vmatprep.subr.bf16.mxu0 0
    %2717 = vmatpush1.bf16.msra.mxu0 0
    %2718 = vmatprep.mubr.bf16.mxu0 0
    %2719 = vmatmul.mubr.bf16.gmra.mrb[0].mxu0 %v2391
    %v2720 = vpop.f32.mrb[0].mxu0
    %v2721 = vadd.f32 %v2680, %v2720
    %v2722 = vpop.f32.mrb[0].mxu0
    %v2723 = vadd.f32 %v2682, %v2722
    %v2724 = vpop.f32.mrb[0].mxu0
    %v2725 = vpop.f32.mrb[0].mxu0
    %2726 = vdwg.mxu0
    %v2727 = vpack.c.bf16 %v2342, %v2342
    %s2728 = scalar_lea.vmem [#allocation3], 896
    %v2729 = vld [vmem:[%s2728] sm:$0xff]
    %v2730 = vld [vmem:[%s2728 + $0x8] sm:$0xff]
    %v2731 = vld [vmem:[%s2728 + $0x10] sm:$0xff]
    %v2732 = vld [vmem:[%s2728 + $0x18] sm:$0xff]
    %v2733 = vld [vmem:[%s2728 + $0x20] sm:$0xff]
    %v2734 = vld [vmem:[%s2728 + $0x28] sm:$0xff]
    %v2735 = vld [vmem:[%s2728 + $0x30] sm:$0xff]
    %v2736 = vld [vmem:[%s2728 + $0x38] sm:$0xff]
    %v2737 = vld [vmem:[%s2728 + $0x40] sm:$0xff]
    %v2738 = vld [vmem:[%s2728 + $0x48] sm:$0xff]
    %v2739 = vld [vmem:[%s2728 + $0x50] sm:$0xff]
    %v2740 = vld [vmem:[%s2728 + $0x58] sm:$0xff]
    %v2741 = vld [vmem:[%s2728 + $0x60] sm:$0xff]
    %v2742 = vld [vmem:[%s2728 + $0x68] sm:$0xff]
    %v2743 = vld [vmem:[%s2728 + $0x70] sm:$0xff]
    %v2744 = vld [vmem:[%s2728 + $0x78] sm:$0xff]
    %2745 = vmatprep.subr.bf16.mxu0 %v2730
    %2746 = vmatpush1.bf16.msra.mxu0 %v2729
    %2747 = vmatprep.subr.bf16.mxu0 %v2732
    %2748 = vmatpush1.bf16.msra.mxu0 %v2731
    %2749 = vmatprep.subr.bf16.mxu0 %v2734
    %2750 = vmatpush1.bf16.msra.mxu0 %v2733
    %2751 = vmatprep.subr.bf16.mxu0 %v2736
    %2752 = vmatpush1.bf16.msra.mxu0 %v2735
    %2753 = vmatprep.subr.bf16.mxu0 %v2738
    %2754 = vmatpush1.bf16.msra.mxu0 %v2737
    %2755 = vmatprep.subr.bf16.mxu0 %v2740
    %2756 = vmatpush1.bf16.msra.mxu0 %v2739
    %2757 = vmatprep.subr.bf16.mxu0 %v2742
    %2758 = vmatpush1.bf16.msra.mxu0 %v2741
    %2759 = vmatprep.subr.bf16.mxu0 %v2744
    %2760 = vmatpush1.bf16.msra.mxu0 %v2743
    %2761 = vmatprep.subr.bf16.mxu0 0
    %2762 = vmatpush1.bf16.msra.mxu0 0
    %2763 = vmatprep.subr.bf16.mxu0 0
    %2764 = vmatpush1.bf16.msra.mxu0 0
    %2765 = vmatprep.subr.bf16.mxu0 0
    %2766 = vmatpush1.bf16.msra.mxu0 0
    %2767 = vmatprep.subr.bf16.mxu0 0
    %2768 = vmatpush1.bf16.msra.mxu0 0
    %2769 = vmatprep.subr.bf16.mxu0 0
    %2770 = vmatpush1.bf16.msra.mxu0 0
    %2771 = vmatprep.subr.bf16.mxu0 0
    %2772 = vmatpush1.bf16.msra.mxu0 0
    %2773 = vmatprep.subr.bf16.mxu0 0
    %2774 = vmatpush1.bf16.msra.mxu0 0
    %2775 = vmatprep.subr.bf16.mxu0 0
    %2776 = vmatpush1.bf16.msra.mxu0 0
    %2777 = vmatprep.mubr.bf16.mxu0 0
    %2778 = vmatmul.mubr.bf16.gmra.mrb[0].mxu0 %v2727
    %v2779 = vpop.f32.mrb[0].mxu0
    %v2780 = vadd.f32 0.0, %v2779
    %v2781 = vpop.f32.mrb[0].mxu0
    %v2782 = vadd.f32 0.0, %v2781
    %v2783 = vpop.f32.mrb[0].mxu0
    %v2784 = vpop.f32.mrb[0].mxu0
    %2785 = vdwg.mxu0
    %2786 = vmatprep.subr.bf16.mxu0 %v2412
    %2787 = vmatpush1.bf16.msra.mxu0 %v2411
    %2788 = vmatprep.subr.bf16.mxu0 %v2414
    %2789 = vmatpush1.bf16.msra.mxu0 %v2413
    %2790 = vmatprep.subr.bf16.mxu0 %v2416
    %2791 = vmatpush1.bf16.msra.mxu0 %v2415
    %2792 = vmatprep.subr.bf16.mxu0 %v2418
    %2793 = vmatpush1.bf16.msra.mxu0 %v2417
    %2794 = vmatprep.subr.bf16.mxu0 %v2420
    %2795 = vmatpush1.bf16.msra.mxu0 %v2419
    %2796 = vmatprep.subr.bf16.mxu0 %v2422
    %2797 = vmatpush1.bf16.msra.mxu0 %v2421
    %2798 = vmatprep.subr.bf16.mxu0 %v2424
    %2799 = vmatpush1.bf16.msra.mxu0 %v2423
    %2800 = vmatprep.subr.bf16.mxu0 %v2426
    %2801 = vmatpush1.bf16.msra.mxu0 %v2425
    %2802 = vmatprep.subr.bf16.mxu0 0
    %2803 = vmatpush1.bf16.msra.mxu0 0
    %2804 = vmatprep.subr.bf16.mxu0 0
    %2805 = vmatpush1.bf16.msra.mxu0 0
    %2806 = vmatprep.subr.bf16.mxu0 0
    %2807 = vmatpush1.bf16.msra.mxu0 0
    %2808 = vmatprep.subr.bf16.mxu0 0
    %2809 = vmatpush1.bf16.msra.mxu0 0
    %2810 = vmatprep.subr.bf16.mxu0 0
    %2811 = vmatpush1.bf16.msra.mxu0 0
    %2812 = vmatprep.subr.bf16.mxu0 0
    %2813 = vmatpush1.bf16.msra.mxu0 0
    %2814 = vmatprep.subr.bf16.mxu0 0
    %2815 = vmatpush1.bf16.msra.mxu0 0
    %2816 = vmatprep.subr.bf16.mxu0 0
    %2817 = vmatpush1.bf16.msra.mxu0 0
    %2818 = vmatprep.mubr.bf16.mxu0 0
    %2819 = vmatmul.mubr.bf16.gmra.mrb[0].mxu0 %v2409
    %v2820 = vpop.f32.mrb[0].mxu0
    %v2821 = vadd.f32 %v2780, %v2820
    %v2822 = vpop.f32.mrb[0].mxu0
    %v2823 = vadd.f32 %v2782, %v2822
    %v2824 = vpop.f32.mrb[0].mxu0
    %v2825 = vpop.f32.mrb[0].mxu0
    %2826 = vdwg.mxu0
    %v2827 = vpack.c.bf16 %v2343, %v2343
    %s2828 = scalar_lea.vmem [#allocation3], 1024
    %v2829 = vld [vmem:[%s2828] sm:$0xff]
    %v2830 = vld [vmem:[%s2828 + $0x8] sm:$0xff]
    %v2831 = vld [vmem:[%s2828 + $0x10] sm:$0xff]
    %v2832 = vld [vmem:[%s2828 + $0x18] sm:$0xff]
    %v2833 = vld [vmem:[%s2828 + $0x20] sm:$0xff]
    %v2834 = vld [vmem:[%s2828 + $0x28] sm:$0xff]
    %v2835 = vld [vmem:[%s2828 + $0x30] sm:$0xff]
    %v2836 = vld [vmem:[%s2828 + $0x38] sm:$0xff]
    %v2837 = vld [vmem:[%s2828 + $0x40] sm:$0xff]
    %v2838 = vld [vmem:[%s2828 + $0x48] sm:$0xff]
    %v2839 = vld [vmem:[%s2828 + $0x50] sm:$0xff]
    %v2840 = vld [vmem:[%s2828 + $0x58] sm:$0xff]
    %v2841 = vld [vmem:[%s2828 + $0x60] sm:$0xff]
    %v2842 = vld [vmem:[%s2828 + $0x68] sm:$0xff]
    %v2843 = vld [vmem:[%s2828 + $0x70] sm:$0xff]
    %v2844 = vld [vmem:[%s2828 + $0x78] sm:$0xff]
    %2845 = vmatprep.subr.bf16.mxu0 %v2830
    %2846 = vmatpush1.bf16.msra.mxu0 %v2829
    %2847 = vmatprep.subr.bf16.mxu0 %v2832
    %2848 = vmatpush1.bf16.msra.mxu0 %v2831
    %2849 = vmatprep.subr.bf16.mxu0 %v2834
    %2850 = vmatpush1.bf16.msra.mxu0 %v2833
    %2851 = vmatprep.subr.bf16.mxu0 %v2836
    %2852 = vmatpush1.bf16.msra.mxu0 %v2835
    %2853 = vmatprep.subr.bf16.mxu0 %v2838
    %2854 = vmatpush1.bf16.msra.mxu0 %v2837
    %2855 = vmatprep.subr.bf16.mxu0 %v2840
    %2856 = vmatpush1.bf16.msra.mxu0 %v2839
    %2857 = vmatprep.subr.bf16.mxu0 %v2842
    %2858 = vmatpush1.bf16.msra.mxu0 %v2841
    %2859 = vmatprep.subr.bf16.mxu0 %v2844
    %2860 = vmatpush1.bf16.msra.mxu0 %v2843
    %2861 = vmatprep.subr.bf16.mxu0 0
    %2862 = vmatpush1.bf16.msra.mxu0 0
    %2863 = vmatprep.subr.bf16.mxu0 0
    %2864 = vmatpush1.bf16.msra.mxu0 0
    %2865 = vmatprep.subr.bf16.mxu0 0
    %2866 = vmatpush1.bf16.msra.mxu0 0
    %2867 = vmatprep.subr.bf16.mxu0 0
    %2868 = vmatpush1.bf16.msra.mxu0 0
    %2869 = vmatprep.subr.bf16.mxu0 0
    %2870 = vmatpush1.bf16.msra.mxu0 0
    %2871 = vmatprep.subr.bf16.mxu0 0
    %2872 = vmatpush1.bf16.msra.mxu0 0
    %2873 = vmatprep.subr.bf16.mxu0 0
    %2874 = vmatpush1.bf16.msra.mxu0 0
    %2875 = vmatprep.subr.bf16.mxu0 0
    %2876 = vmatpush1.bf16.msra.mxu0 0
    %2877 = vmatprep.mubr.bf16.mxu0 0
    %2878 = vmatmul.mubr.bf16.gmra.mrb[0].mxu0 %v2827
    %v2879 = vpop.f32.mrb[0].mxu0
    %v2880 = vadd.f32 0.0, %v2879
    %v2881 = vpop.f32.mrb[0].mxu0
    %v2882 = vadd.f32 0.0, %v2881
    %v2883 = vpop.f32.mrb[0].mxu0
    %v2884 = vpop.f32.mrb[0].mxu0
    %2885 = vdwg.mxu0
    %v2886 = vadd.f32 %v2521, %v2880
    %v2887 = vadd.f32 %v2523, %v2882
    %v2888 = vpack.c.bf16 %v2344, %v2344
    %s2889 = scalar_lea.vmem [#allocation3], 1152
    %v2890 = vld [vmem:[%s2889] sm:$0xff]
    %v2891 = vld [vmem:[%s2889 + $0x8] sm:$0xff]
    %v2892 = vld [vmem:[%s2889 + $0x10] sm:$0xff]
    %v2893 = vld [vmem:[%s2889 + $0x18] sm:$0xff]
    %v2894 = vld [vmem:[%s2889 + $0x20] sm:$0xff]
    %v2895 = vld [vmem:[%s2889 + $0x28] sm:$0xff]
    %v2896 = vld [vmem:[%s2889 + $0x30] sm:$0xff]
    %v2897 = vld [vmem:[%s2889 + $0x38] sm:$0xff]
    %v2898 = vld [vmem:[%s2889 + $0x40] sm:$0xff]
    %v2899 = vld [vmem:[%s2889 + $0x48] sm:$0xff]
    %v2900 = vld [vmem:[%s2889 + $0x50] sm:$0xff]
    %v2901 = vld [vmem:[%s2889 + $0x58] sm:$0xff]
    %v2902 = vld [vmem:[%s2889 + $0x60] sm:$0xff]
    %v2903 = vld [vmem:[%s2889 + $0x68] sm:$0xff]
    %v2904 = vld [vmem:[%s2889 + $0x70] sm:$0xff]
    %v2905 = vld [vmem:[%s2889 + $0x78] sm:$0xff]
    %2906 = vmatprep.subr.bf16.mxu0 %v2891
    %2907 = vmatpush1.bf16.msra.mxu0 %v2890
    %2908 = vmatprep.subr.bf16.mxu0 %v2893
    %2909 = vmatpush1.bf16.msra.mxu0 %v2892
    %2910 = vmatprep.subr.bf16.mxu0 %v2895
    %2911 = vmatpush1.bf16.msra.mxu0 %v2894
    %2912 = vmatprep.subr.bf16.mxu0 %v2897
    %2913 = vmatpush1.bf16.msra.mxu0 %v2896
    %2914 = vmatprep.subr.bf16.mxu0 %v2899
    %2915 = vmatpush1.bf16.msra.mxu0 %v2898
    %2916 = vmatprep.subr.bf16.mxu0 %v2901
    %2917 = vmatpush1.bf16.msra.mxu0 %v2900
    %2918 = vmatprep.subr.bf16.mxu0 %v2903
    %2919 = vmatpush1.bf16.msra.mxu0 %v2902
    %2920 = vmatprep.subr.bf16.mxu0 %v2905
    %2921 = vmatpush1.bf16.msra.mxu0 %v2904
    %2922 = vmatprep.subr.bf16.mxu0 0
    %2923 = vmatpush1.bf16.msra.mxu0 0
    %2924 = vmatprep.subr.bf16.mxu0 0
    %2925 = vmatpush1.bf16.msra.mxu0 0
    %2926 = vmatprep.subr.bf16.mxu0 0
    %2927 = vmatpush1.bf16.msra.mxu0 0
    %2928 = vmatprep.subr.bf16.mxu0 0
    %2929 = vmatpush1.bf16.msra.mxu0 0
    %2930 = vmatprep.subr.bf16.mxu0 0
    %2931 = vmatpush1.bf16.msra.mxu0 0
    %2932 = vmatprep.subr.bf16.mxu0 0
    %2933 = vmatpush1.bf16.msra.mxu0 0
    %2934 = vmatprep.subr.bf16.mxu0 0
    %2935 = vmatpush1.bf16.msra.mxu0 0
    %2936 = vmatprep.subr.bf16.mxu0 0
    %2937 = vmatpush1.bf16.msra.mxu0 0
    %2938 = vmatprep.mubr.bf16.mxu0 0
    %2939 = vmatmul.mubr.bf16.gmra.mrb[0].mxu0 %v2888
    %v2940 = vpop.f32.mrb[0].mxu0
    %v2941 = vadd.f32 0.0, %v2940
    %v2942 = vpop.f32.mrb[0].mxu0
    %v2943 = vadd.f32 0.0, %v2942
    %v2944 = vpop.f32.mrb[0].mxu0
    %v2945 = vpop.f32.mrb[0].mxu0
    %2946 = vdwg.mxu0
    %v2947 = vadd.f32 %v2621, %v2941
    %v2948 = vadd.f32 %v2623, %v2943
    %v2949 = vpack.c.bf16 %v2345, %v2345
    %s2950 = scalar_lea.vmem [#allocation3], 1280
    %v2951 = vld [vmem:[%s2950] sm:$0xff]
    %v2952 = vld [vmem:[%s2950 + $0x8] sm:$0xff]
    %v2953 = vld [vmem:[%s2950 + $0x10] sm:$0xff]
    %v2954 = vld [vmem:[%s2950 + $0x18] sm:$0xff]
    %v2955 = vld [vmem:[%s2950 + $0x20] sm:$0xff]
    %v2956 = vld [vmem:[%s2950 + $0x28] sm:$0xff]
    %v2957 = vld [vmem:[%s2950 + $0x30] sm:$0xff]
    %v2958 = vld [vmem:[%s2950 + $0x38] sm:$0xff]
    %v2959 = vld [vmem:[%s2950 + $0x40] sm:$0xff]
    %v2960 = vld [vmem:[%s2950 + $0x48] sm:$0xff]
    %v2961 = vld [vmem:[%s2950 + $0x50] sm:$0xff]
    %v2962 = vld [vmem:[%s2950 + $0x58] sm:$0xff]
    %v2963 = vld [vmem:[%s2950 + $0x60] sm:$0xff]
    %v2964 = vld [vmem:[%s2950 + $0x68] sm:$0xff]
    %v2965 = vld [vmem:[%s2950 + $0x70] sm:$0xff]
    %v2966 = vld [vmem:[%s2950 + $0x78] sm:$0xff]
    %2967 = vmatprep.subr.bf16.mxu0 %v2952
    %2968 = vmatpush1.bf16.msra.mxu0 %v2951
    %2969 = vmatprep.subr.bf16.mxu0 %v2954
    %2970 = vmatpush1.bf16.msra.mxu0 %v2953
    %2971 = vmatprep.subr.bf16.mxu0 %v2956
    %2972 = vmatpush1.bf16.msra.mxu0 %v2955
    %2973 = vmatprep.subr.bf16.mxu0 %v2958
    %2974 = vmatpush1.bf16.msra.mxu0 %v2957
    %2975 = vmatprep.subr.bf16.mxu0 %v2960
    %2976 = vmatpush1.bf16.msra.mxu0 %v2959
    %2977 = vmatprep.subr.bf16.mxu0 %v2962
    %2978 = vmatpush1.bf16.msra.mxu0 %v2961
    %2979 = vmatprep.subr.bf16.mxu0 %v2964
    %2980 = vmatpush1.bf16.msra.mxu0 %v2963
    %2981 = vmatprep.subr.bf16.mxu0 %v2966
    %2982 = vmatpush1.bf16.msra.mxu0 %v2965
    %2983 = vmatprep.subr.bf16.mxu0 0
    %2984 = vmatpush1.bf16.msra.mxu0 0
    %2985 = vmatprep.subr.bf16.mxu0 0
    %2986 = vmatpush1.bf16.msra.mxu0 0
    %2987 = vmatprep.subr.bf16.mxu0 0
    %2988 = vmatpush1.bf16.msra.mxu0 0
    %2989 = vmatprep.subr.bf16.mxu0 0
    %2990 = vmatpush1.bf16.msra.mxu0 0
    %2991 = vmatprep.subr.bf16.mxu0 0
    %2992 = vmatpush1.bf16.msra.mxu0 0
    %2993 = vmatprep.subr.bf16.mxu0 0
    %2994 = vmatpush1.bf16.msra.mxu0 0
    %2995 = vmatprep.subr.bf16.mxu0 0
    %2996 = vmatpush1.bf16.msra.mxu0 0
    %2997 = vmatprep.subr.bf16.mxu0 0
    %2998 = vmatpush1.bf16.msra.mxu0 0
    %2999 = vmatprep.mubr.bf16.mxu0 0
    %3000 = vmatmul.mubr.bf16.gmra.mrb[0].mxu0 %v2949
    %v3001 = vpop.f32.mrb[0].mxu0
    %v3002 = vadd.f32 0.0, %v3001
    %v3003 = vpop.f32.mrb[0].mxu0
    %v3004 = vadd.f32 0.0, %v3003
    %v3005 = vpop.f32.mrb[0].mxu0
    %v3006 = vpop.f32.mrb[0].mxu0
    %3007 = vdwg.mxu0
    %v3008 = vadd.f32 %v2721, %v3002
    %v3009 = vadd.f32 %v2723, %v3004
    %v3010 = vpack.c.bf16 %v2346, %v2346
    %s3011 = scalar_lea.vmem [#allocation3], 1408
    %v3012 = vld [vmem:[%s3011] sm:$0xff]
    %v3013 = vld [vmem:[%s3011 + $0x8] sm:$0xff]
    %v3014 = vld [vmem:[%s3011 + $0x10] sm:$0xff]
    %v3015 = vld [vmem:[%s3011 + $0x18] sm:$0xff]
    %v3016 = vld [vmem:[%s3011 + $0x20] sm:$0xff]
    %v3017 = vld [vmem:[%s3011 + $0x28] sm:$0xff]
    %v3018 = vld [vmem:[%s3011 + $0x30] sm:$0xff]
    %v3019 = vld [vmem:[%s3011 + $0x38] sm:$0xff]
    %v3020 = vld [vmem:[%s3011 + $0x40] sm:$0xff]
    %v3021 = vld [vmem:[%s3011 + $0x48] sm:$0xff]
    %v3022 = vld [vmem:[%s3011 + $0x50] sm:$0xff]
    %v3023 = vld [vmem:[%s3011 + $0x58] sm:$0xff]
    %v3024 = vld [vmem:[%s3011 + $0x60] sm:$0xff]
    %v3025 = vld [vmem:[%s3011 + $0x68] sm:$0xff]
    %v3026 = vld [vmem:[%s3011 + $0x70] sm:$0xff]
    %v3027 = vld [vmem:[%s3011 + $0x78] sm:$0xff]
    %3028 = vmatprep.subr.bf16.mxu0 %v3013
    %3029 = vmatpush1.bf16.msra.mxu0 %v3012
    %3030 = vmatprep.subr.bf16.mxu0 %v3015
    %3031 = vmatpush1.bf16.msra.mxu0 %v3014
    %3032 = vmatprep.subr.bf16.mxu0 %v3017
    %3033 = vmatpush1.bf16.msra.mxu0 %v3016
    %3034 = vmatprep.subr.bf16.mxu0 %v3019
    %3035 = vmatpush1.bf16.msra.mxu0 %v3018
    %3036 = vmatprep.subr.bf16.mxu0 %v3021
    %3037 = vmatpush1.bf16.msra.mxu0 %v3020
    %3038 = vmatprep.subr.bf16.mxu0 %v3023
    %3039 = vmatpush1.bf16.msra.mxu0 %v3022
    %3040 = vmatprep.subr.bf16.mxu0 %v3025
    %3041 = vmatpush1.bf16.msra.mxu0 %v3024
    %3042 = vmatprep.subr.bf16.mxu0 %v3027
    %3043 = vmatpush1.bf16.msra.mxu0 %v3026
    %3044 = vmatprep.subr.bf16.mxu0 0
    %3045 = vmatpush1.bf16.msra.mxu0 0
    %3046 = vmatprep.subr.bf16.mxu0 0
    %3047 = vmatpush1.bf16.msra.mxu0 0
    %3048 = vmatprep.subr.bf16.mxu0 0
    %3049 = vmatpush1.bf16.msra.mxu0 0
    %3050 = vmatprep.subr.bf16.mxu0 0
    %3051 = vmatpush1.bf16.msra.mxu0 0
    %3052 = vmatprep.subr.bf16.mxu0 0
    %3053 = vmatpush1.bf16.msra.mxu0 0
    %3054 = vmatprep.subr.bf16.mxu0 0
    %3055 = vmatpush1.bf16.msra.mxu0 0
    %3056 = vmatprep.subr.bf16.mxu0 0
    %3057 = vmatpush1.bf16.msra.mxu0 0
    %3058 = vmatprep.subr.bf16.mxu0 0
    %3059 = vmatpush1.bf16.msra.mxu0 0
    %3060 = vmatprep.mubr.bf16.mxu0 0
    %3061 = vmatmul.mubr.bf16.gmra.mrb[0].mxu0 %v3010
    %v3062 = vpop.f32.mrb[0].mxu0
    %v3063 = vadd.f32 0.0, %v3062
    %v3064 = vpop.f32.mrb[0].mxu0
    %v3065 = vadd.f32 0.0, %v3064
    %v3066 = vpop.f32.mrb[0].mxu0
    %v3067 = vpop.f32.mrb[0].mxu0
    %3068 = vdwg.mxu0
    %v3069 = vadd.f32 %v2821, %v3063
    %v3070 = vadd.f32 %v2823, %v3065
    %v3071 = vpack.c.bf16 %v2347, %v2347
    %s3072 = scalar_lea.vmem [#allocation3], 1536
    %v3073 = vld [vmem:[%s3072] sm:$0xff]
    %v3074 = vld [vmem:[%s3072 + $0x8] sm:$0xff]
    %v3075 = vld [vmem:[%s3072 + $0x10] sm:$0xff]
    %v3076 = vld [vmem:[%s3072 + $0x18] sm:$0xff]
    %v3077 = vld [vmem:[%s3072 + $0x20] sm:$0xff]
    %v3078 = vld [vmem:[%s3072 + $0x28] sm:$0xff]
    %v3079 = vld [vmem:[%s3072 + $0x30] sm:$0xff]
    %v3080 = vld [vmem:[%s3072 + $0x38] sm:$0xff]
    %v3081 = vld [vmem:[%s3072 + $0x40] sm:$0xff]
    %v3082 = vld [vmem:[%s3072 + $0x48] sm:$0xff]
    %v3083 = vld [vmem:[%s3072 + $0x50] sm:$0xff]
    %v3084 = vld [vmem:[%s3072 + $0x58] sm:$0xff]
    %v3085 = vld [vmem:[%s3072 + $0x60] sm:$0xff]
    %v3086 = vld [vmem:[%s3072 + $0x68] sm:$0xff]
    %v3087 = vld [vmem:[%s3072 + $0x70] sm:$0xff]
    %v3088 = vld [vmem:[%s3072 + $0x78] sm:$0xff]
    %3089 = vmatprep.subr.bf16.mxu0 %v3074
    %3090 = vmatpush1.bf16.msra.mxu0 %v3073
    %3091 = vmatprep.subr.bf16.mxu0 %v3076
    %3092 = vmatpush1.bf16.msra.mxu0 %v3075
    %3093 = vmatprep.subr.bf16.mxu0 %v3078
    %3094 = vmatpush1.bf16.msra.mxu0 %v3077
    %3095 = vmatprep.subr.bf16.mxu0 %v3080
    %3096 = vmatpush1.bf16.msra.mxu0 %v3079
    %3097 = vmatprep.subr.bf16.mxu0 %v3082
    %3098 = vmatpush1.bf16.msra.mxu0 %v3081
    %3099 = vmatprep.subr.bf16.mxu0 %v3084
    %3100 = vmatpush1.bf16.msra.mxu0 %v3083
    %3101 = vmatprep.subr.bf16.mxu0 %v3086
    %3102 = vmatpush1.bf16.msra.mxu0 %v3085
    %3103 = vmatprep.subr.bf16.mxu0 %v3088
    %3104 = vmatpush1.bf16.msra.mxu0 %v3087
    %3105 = vmatprep.subr.bf16.mxu0 0
    %3106 = vmatpush1.bf16.msra.mxu0 0
    %3107 = vmatprep.subr.bf16.mxu0 0
    %3108 = vmatpush1.bf16.msra.mxu0 0
    %3109 = vmatprep.subr.bf16.mxu0 0
    %3110 = vmatpush1.bf16.msra.mxu0 0
    %3111 = vmatprep.subr.bf16.mxu0 0
    %3112 = vmatpush1.bf16.msra.mxu0 0
    %3113 = vmatprep.subr.bf16.mxu0 0
    %3114 = vmatpush1.bf16.msra.mxu0 0
    %3115 = vmatprep.subr.bf16.mxu0 0
    %3116 = vmatpush1.bf16.msra.mxu0 0
    %3117 = vmatprep.subr.bf16.mxu0 0
    %3118 = vmatpush1.bf16.msra.mxu0 0
    %3119 = vmatprep.subr.bf16.mxu0 0
    %3120 = vmatpush1.bf16.msra.mxu0 0
    %3121 = vmatprep.mubr.bf16.mxu0 0
    %3122 = vmatmul.mubr.bf16.gmra.mrb[0].mxu0 %v3071
    %v3123 = vpop.f32.mrb[0].mxu0
    %v3124 = vadd.f32 0.0, %v3123
    %v3125 = vpop.f32.mrb[0].mxu0
    %v3126 = vadd.f32 0.0, %v3125
    %v3127 = vpop.f32.mrb[0].mxu0
    %v3128 = vpop.f32.mrb[0].mxu0
    %3129 = vdwg.mxu0
    %v3130 = vadd.f32 %v2886, %v3124
    %v3131 = vadd.f32 %v2887, %v3126
    %v3132 = vpack.c.bf16 %v2348, %v2348
    %s3133 = scalar_lea.vmem [#allocation3], 1664
    %v3134 = vld [vmem:[%s3133] sm:$0xff]
    %v3135 = vld [vmem:[%s3133 + $0x8] sm:$0xff]
    %v3136 = vld [vmem:[%s3133 + $0x10] sm:$0xff]
    %v3137 = vld [vmem:[%s3133 + $0x18] sm:$0xff]
    %v3138 = vld [vmem:[%s3133 + $0x20] sm:$0xff]
    %v3139 = vld [vmem:[%s3133 + $0x28] sm:$0xff]
    %v3140 = vld [vmem:[%s3133 + $0x30] sm:$0xff]
    %v3141 = vld [vmem:[%s3133 + $0x38] sm:$0xff]
    %v3142 = vld [vmem:[%s3133 + $0x40] sm:$0xff]
    %v3143 = vld [vmem:[%s3133 + $0x48] sm:$0xff]
    %v3144 = vld [vmem:[%s3133 + $0x50] sm:$0xff]
    %v3145 = vld [vmem:[%s3133 + $0x58] sm:$0xff]
    %v3146 = vld [vmem:[%s3133 + $0x60] sm:$0xff]
    %v3147 = vld [vmem:[%s3133 + $0x68] sm:$0xff]
    %v3148 = vld [vmem:[%s3133 + $0x70] sm:$0xff]
    %v3149 = vld [vmem:[%s3133 + $0x78] sm:$0xff]
    %3150 = vmatprep.subr.bf16.mxu0 %v3135
    %3151 = vmatpush1.bf16.msra.mxu0 %v3134
    %3152 = vmatprep.subr.bf16.mxu0 %v3137
    %3153 = vmatpush1.bf16.msra.mxu0 %v3136
    %3154 = vmatprep.subr.bf16.mxu0 %v3139
    %3155 = vmatpush1.bf16.msra.mxu0 %v3138
    %3156 = vmatprep.subr.bf16.mxu0 %v3141
    %3157 = vmatpush1.bf16.msra.mxu0 %v3140
    %3158 = vmatprep.subr.bf16.mxu0 %v3143
    %3159 = vmatpush1.bf16.msra.mxu0 %v3142
    %3160 = vmatprep.subr.bf16.mxu0 %v3145
    %3161 = vmatpush1.bf16.msra.mxu0 %v3144
    %3162 = vmatprep.subr.bf16.mxu0 %v3147
    %3163 = vmatpush1.bf16.msra.mxu0 %v3146
    %3164 = vmatprep.subr.bf16.mxu0 %v3149
    %3165 = vmatpush1.bf16.msra.mxu0 %v3148
    %3166 = vmatprep.subr.bf16.mxu0 0
    %3167 = vmatpush1.bf16.msra.mxu0 0
    %3168 = vmatprep.subr.bf16.mxu0 0
    %3169 = vmatpush1.bf16.msra.mxu0 0
    %3170 = vmatprep.subr.bf16.mxu0 0
    %3171 = vmatpush1.bf16.msra.mxu0 0
    %3172 = vmatprep.subr.bf16.mxu0 0
    %3173 = vmatpush1.bf16.msra.mxu0 0
    %3174 = vmatprep.subr.bf16.mxu0 0
    %3175 = vmatpush1.bf16.msra.mxu0 0
    %3176 = vmatprep.subr.bf16.mxu0 0
    %3177 = vmatpush1.bf16.msra.mxu0 0
    %3178 = vmatprep.subr.bf16.mxu0 0
    %3179 = vmatpush1.bf16.msra.mxu0 0
    %3180 = vmatprep.subr.bf16.mxu0 0
    %3181 = vmatpush1.bf16.msra.mxu0 0
    %3182 = vmatprep.mubr.bf16.mxu0 0
    %3183 = vmatmul.mubr.bf16.gmra.mrb[0].mxu0 %v3132
    %v3184 = vpop.f32.mrb[0].mxu0
    %v3185 = vadd.f32 0.0, %v3184
    %v3186 = vpop.f32.mrb[0].mxu0
    %v3187 = vadd.f32 0.0, %v3186
    %v3188 = vpop.f32.mrb[0].mxu0
    %v3189 = vpop.f32.mrb[0].mxu0
    %3190 = vdwg.mxu0
    %v3191 = vadd.f32 %v2947, %v3185
    %v3192 = vadd.f32 %v2948, %v3187
    %v3193 = vpack.c.bf16 %v2349, %v2349
    %s3194 = scalar_lea.vmem [#allocation3], 1792
    %v3195 = vld [vmem:[%s3194] sm:$0xff]
    %v3196 = vld [vmem:[%s3194 + $0x8] sm:$0xff]
    %v3197 = vld [vmem:[%s3194 + $0x10] sm:$0xff]
    %v3198 = vld [vmem:[%s3194 + $0x18] sm:$0xff]
    %v3199 = vld [vmem:[%s3194 + $0x20] sm:$0xff]
    %v3200 = vld [vmem:[%s3194 + $0x28] sm:$0xff]
    %v3201 = vld [vmem:[%s3194 + $0x30] sm:$0xff]
    %v3202 = vld [vmem:[%s3194 + $0x38] sm:$0xff]
    %v3203 = vld [vmem:[%s3194 + $0x40] sm:$0xff]
    %v3204 = vld [vmem:[%s3194 + $0x48] sm:$0xff]
    %v3205 = vld [vmem:[%s3194 + $0x50] sm:$0xff]
    %v3206 = vld [vmem:[%s3194 + $0x58] sm:$0xff]
    %v3207 = vld [vmem:[%s3194 + $0x60] sm:$0xff]
    %v3208 = vld [vmem:[%s3194 + $0x68] sm:$0xff]
    %v3209 = vld [vmem:[%s3194 + $0x70] sm:$0xff]
    %v3210 = vld [vmem:[%s3194 + $0x78] sm:$0xff]
    %3211 = vmatprep.subr.bf16.mxu0 %v3196
    %3212 = vmatpush1.bf16.msra.mxu0 %v3195
    %3213 = vmatprep.subr.bf16.mxu0 %v3198
    %3214 = vmatpush1.bf16.msra.mxu0 %v3197
    %3215 = vmatprep.subr.bf16.mxu0 %v3200
    %3216 = vmatpush1.bf16.msra.mxu0 %v3199
    %3217 = vmatprep.subr.bf16.mxu0 %v3202
    %3218 = vmatpush1.bf16.msra.mxu0 %v3201
    %3219 = vmatprep.subr.bf16.mxu0 %v3204
    %3220 = vmatpush1.bf16.msra.mxu0 %v3203
    %3221 = vmatprep.subr.bf16.mxu0 %v3206
    %3222 = vmatpush1.bf16.msra.mxu0 %v3205
    %3223 = vmatprep.subr.bf16.mxu0 %v3208
    %3224 = vmatpush1.bf16.msra.mxu0 %v3207
    %3225 = vmatprep.subr.bf16.mxu0 %v3210
    %3226 = vmatpush1.bf16.msra.mxu0 %v3209
    %3227 = vmatprep.subr.bf16.mxu0 0
    %3228 = vmatpush1.bf16.msra.mxu0 0
    %3229 = vmatprep.subr.bf16.mxu0 0
    %3230 = vmatpush1.bf16.msra.mxu0 0
    %3231 = vmatprep.subr.bf16.mxu0 0
    %3232 = vmatpush1.bf16.msra.mxu0 0
    %3233 = vmatprep.subr.bf16.mxu0 0
    %3234 = vmatpush1.bf16.msra.mxu0 0
    %3235 = vmatprep.subr.bf16.mxu0 0
    %3236 = vmatpush1.bf16.msra.mxu0 0
    %3237 = vmatprep.subr.bf16.mxu0 0
    %3238 = vmatpush1.bf16.msra.mxu0 0
    %3239 = vmatprep.subr.bf16.mxu0 0
    %3240 = vmatpush1.bf16.msra.mxu0 0
    %3241 = vmatprep.subr.bf16.mxu0 0
    %3242 = vmatpush1.bf16.msra.mxu0 0
    %3243 = vmatprep.mubr.bf16.mxu0 0
    %3244 = vmatmul.mubr.bf16.gmra.mrb[0].mxu0 %v3193
    %v3245 = vpop.f32.mrb[0].mxu0
    %v3246 = vadd.f32 0.0, %v3245
    %v3247 = vpop.f32.mrb[0].mxu0
    %v3248 = vadd.f32 0.0, %v3247
    %v3249 = vpop.f32.mrb[0].mxu0
    %v3250 = vpop.f32.mrb[0].mxu0
    %3251 = vdwg.mxu0
    %v3252 = vadd.f32 %v3008, %v3246
    %v3253 = vadd.f32 %v3009, %v3248
    %v3254 = vpack.c.bf16 %v2350, %v2350
    %s3255 = scalar_lea.vmem [#allocation3], 1920
    %v3256 = vld [vmem:[%s3255] sm:$0xff]
    %v3257 = vld [vmem:[%s3255 + $0x8] sm:$0xff]
    %v3258 = vld [vmem:[%s3255 + $0x10] sm:$0xff]
    %v3259 = vld [vmem:[%s3255 + $0x18] sm:$0xff]
    %v3260 = vld [vmem:[%s3255 + $0x20] sm:$0xff]
    %v3261 = vld [vmem:[%s3255 + $0x28] sm:$0xff]
    %v3262 = vld [vmem:[%s3255 + $0x30] sm:$0xff]
    %v3263 = vld [vmem:[%s3255 + $0x38] sm:$0xff]
    %v3264 = vld [vmem:[%s3255 + $0x40] sm:$0xff]
    %v3265 = vld [vmem:[%s3255 + $0x48] sm:$0xff]
    %v3266 = vld [vmem:[%s3255 + $0x50] sm:$0xff]
    %v3267 = vld [vmem:[%s3255 + $0x58] sm:$0xff]
    %v3268 = vld [vmem:[%s3255 + $0x60] sm:$0xff]
    %v3269 = vld [vmem:[%s3255 + $0x68] sm:$0xff]
    %v3270 = vld [vmem:[%s3255 + $0x70] sm:$0xff]
    %v3271 = vld [vmem:[%s3255 + $0x78] sm:$0xff]
    %3272 = vmatprep.subr.bf16.mxu0 %v3257
    %3273 = vmatpush1.bf16.msra.mxu0 %v3256
    %3274 = vmatprep.subr.bf16.mxu0 %v3259
    %3275 = vmatpush1.bf16.msra.mxu0 %v3258
    %3276 = vmatprep.subr.bf16.mxu0 %v3261
    %3277 = vmatpush1.bf16.msra.mxu0 %v3260
    %3278 = vmatprep.subr.bf16.mxu0 %v3263
    %3279 = vmatpush1.bf16.msra.mxu0 %v3262
    %3280 = vmatprep.subr.bf16.mxu0 %v3265
    %3281 = vmatpush1.bf16.msra.mxu0 %v3264
    %3282 = vmatprep.subr.bf16.mxu0 %v3267
    %3283 = vmatpush1.bf16.msra.mxu0 %v3266
    %3284 = vmatprep.subr.bf16.mxu0 %v3269
    %3285 = vmatpush1.bf16.msra.mxu0 %v3268
    %3286 = vmatprep.subr.bf16.mxu0 %v3271
    %3287 = vmatpush1.bf16.msra.mxu0 %v3270
    %3288 = vmatprep.subr.bf16.mxu0 0
    %3289 = vmatpush1.bf16.msra.mxu0 0
    %3290 = vmatprep.subr.bf16.mxu0 0
    %3291 = vmatpush1.bf16.msra.mxu0 0
    %3292 = vmatprep.subr.bf16.mxu0 0
    %3293 = vmatpush1.bf16.msra.mxu0 0
    %3294 = vmatprep.subr.bf16.mxu0 0
    %3295 = vmatpush1.bf16.msra.mxu0 0
    %3296 = vmatprep.subr.bf16.mxu0 0
    %3297 = vmatpush1.bf16.msra.mxu0 0
    %3298 = vmatprep.subr.bf16.mxu0 0
    %3299 = vmatpush1.bf16.msra.mxu0 0
    %3300 = vmatprep.subr.bf16.mxu0 0
    %3301 = vmatpush1.bf16.msra.mxu0 0
    %3302 = vmatprep.subr.bf16.mxu0 0
    %3303 = vmatpush1.bf16.msra.mxu0 0
    %3304 = vmatprep.mubr.bf16.mxu0 0
    %3305 = vmatmul.mubr.bf16.gmra.mrb[0].mxu0 %v3254
    %v3306 = vpop.f32.mrb[0].mxu0
    %v3307 = vadd.f32 0.0, %v3306
    %v3308 = vpop.f32.mrb[0].mxu0
    %v3309 = vadd.f32 0.0, %v3308
    %v3310 = vpop.f32.mrb[0].mxu0
    %v3311 = vpop.f32.mrb[0].mxu0
    %3312 = vdwg.mxu0
    %v3313 = vadd.f32 %v3069, %v3307
    %v3314 = vadd.f32 %v3070, %v3309
    %v3315 = vadd.f32 %v3130, %v3191
    %v3316 = vadd.f32 %v3131, %v3192
    %v3317 = vadd.f32 %v3315, %v3252
    %v3318 = vadd.f32 %v3316, %v3253
    %v3319 = vadd.f32 %v3317, %v3313
    %v3320 = vadd.f32 %v3318, %v3314
    %v3321 = vld [vmem:[%s10] sm:$0x3]
    %v3323 = vlaneseq
    %v3324 = vshrl.u32 %v3323, 7
    %v3325 = vsub.s32 0, %v3324
    %v3326 = vrot.slane %v3321, %v3325
    %v3327 = vlaneseq
    %v3328 = vshrl.u32 %v3327, 7
    %v3329 = vsub.s32 1, %v3328
    %v3330 = vrot.slane %v3321, %v3329
    %v3333 = vadd.f32 %v3319, %v3326
    %v3334 = vadd.f32 %v3320, %v3330
    %v3335 = vmax.f32 %v3333, 0.0
    %v3336 = vmax.f32 %v3334, 0.0
    %v3337 = vpack.c.bf16 %v3335, %v3335
    %v3338 = vpack.c.bf16 %v3336, %v3336
    %v3339 = vld [vmem:[%s11] sm:$0xff]
    %v3340 = vld [vmem:[%s11 + $0x8] sm:$0xff]
    %v3341 = vld [vmem:[%s11 + $0x10] sm:$0xff]
    %v3342 = vld [vmem:[%s11 + $0x18] sm:$0xff]
    %v3343 = vld [vmem:[%s11 + $0x20] sm:$0xff]
    %v3344 = vld [vmem:[%s11 + $0x28] sm:$0xff]
    %v3345 = vld [vmem:[%s11 + $0x30] sm:$0xff]
    %v3346 = vld [vmem:[%s11 + $0x38] sm:$0xff]
    %v3347 = vld [vmem:[%s11 + $0x40] sm:$0xff]
    %v3348 = vld [vmem:[%s11 + $0x48] sm:$0xff]
    %v3349 = vld [vmem:[%s11 + $0x50] sm:$0xff]
    %v3350 = vld [vmem:[%s11 + $0x58] sm:$0xff]
    %v3351 = vld [vmem:[%s11 + $0x60] sm:$0xff]
    %v3352 = vld [vmem:[%s11 + $0x68] sm:$0xff]
    %v3353 = vld [vmem:[%s11 + $0x70] sm:$0xff]
    %v3354 = vld [vmem:[%s11 + $0x78] sm:$0xff]
    %v3355 = vld [vmem:[%s11 + $0x80] sm:$0xff]
    %v3356 = vld [vmem:[%s11 + $0x88] sm:$0xff]
    %v3357 = vld [vmem:[%s11 + $0x90] sm:$0xff]
    %v3358 = vld [vmem:[%s11 + $0x98] sm:$0xff]
    %v3359 = vld [vmem:[%s11 + $0xa0] sm:$0xff]
    %v3360 = vld [vmem:[%s11 + $0xa8] sm:$0xff]
    %v3361 = vld [vmem:[%s11 + $0xb0] sm:$0xff]
    %v3362 = vld [vmem:[%s11 + $0xb8] sm:$0xff]
    %v3363 = vld [vmem:[%s11 + $0xc0] sm:$0xff]
    %v3364 = vld [vmem:[%s11 + $0xc8] sm:$0xff]
    %v3365 = vld [vmem:[%s11 + $0xd0] sm:$0xff]
    %v3366 = vld [vmem:[%s11 + $0xd8] sm:$0xff]
    %v3367 = vld [vmem:[%s11 + $0xe0] sm:$0xff]
    %v3368 = vld [vmem:[%s11 + $0xe8] sm:$0xff]
    %v3369 = vld [vmem:[%s11 + $0xf0] sm:$0xff]
    %v3370 = vld [vmem:[%s11 + $0xf8] sm:$0xff]
    %v3371 = vld [vmem:[%s12] sm:$0x3]
    %v3373 = vlaneseq
    %v3374 = vshrl.u32 %v3373, 7
    %v3375 = vsub.s32 0, %v3374
    %v3376 = vrot.slane %v3371, %v3375
    %v3377 = vlaneseq
    %v3378 = vshrl.u32 %v3377, 7
    %v3379 = vsub.s32 1, %v3378
    %v3380 = vrot.slane %v3371, %v3379
    %v3415 = vunpack.c.l.b16 %v3339
    %v3416 = vunpack.c.h.b16 %v3339
    %v3417 = vunpack.c.l.b16 %v3340
    %v3418 = vunpack.c.h.b16 %v3340
    %v3419 = vunpack.c.l.b16 %v3341
    %v3420 = vunpack.c.h.b16 %v3341
    %v3421 = vunpack.c.l.b16 %v3342
    %v3422 = vunpack.c.h.b16 %v3342
    %v3423 = vunpack.c.l.b16 %v3343
    %v3424 = vunpack.c.h.b16 %v3343
    %v3425 = vunpack.c.l.b16 %v3344
    %v3426 = vunpack.c.h.b16 %v3344
    %v3427 = vunpack.c.l.b16 %v3345
    %v3428 = vunpack.c.h.b16 %v3345
    %v3429 = vunpack.c.l.b16 %v3346
    %v3430 = vunpack.c.h.b16 %v3346
    %v3431 = vunpack.c.l.b16 %v3347
    %v3432 = vunpack.c.h.b16 %v3347
    %v3433 = vunpack.c.l.b16 %v3348
    %v3434 = vunpack.c.h.b16 %v3348
    %v3435 = vunpack.c.l.b16 %v3349
    %v3436 = vunpack.c.h.b16 %v3349
    %v3437 = vunpack.c.l.b16 %v3350
    %v3438 = vunpack.c.h.b16 %v3350
    %v3439 = vunpack.c.l.b16 %v3351
    %v3440 = vunpack.c.h.b16 %v3351
    %v3441 = vunpack.c.l.b16 %v3352
    %v3442 = vunpack.c.h.b16 %v3352
    %v3443 = vunpack.c.l.b16 %v3353
    %v3444 = vunpack.c.h.b16 %v3353
    %v3445 = vunpack.c.l.b16 %v3354
    %v3446 = vunpack.c.h.b16 %v3354
    %v3447 = vunpack.c.l.b16 %v3355
    %v3448 = vunpack.c.h.b16 %v3355
    %v3449 = vunpack.c.l.b16 %v3356
    %v3450 = vunpack.c.h.b16 %v3356
    %v3451 = vunpack.c.l.b16 %v3357
    %v3452 = vunpack.c.h.b16 %v3357
    %v3453 = vunpack.c.l.b16 %v3358
    %v3454 = vunpack.c.h.b16 %v3358
    %v3455 = vunpack.c.l.b16 %v3359
    %v3456 = vunpack.c.h.b16 %v3359
    %v3457 = vunpack.c.l.b16 %v3360
    %v3458 = vunpack.c.h.b16 %v3360
    %v3459 = vunpack.c.l.b16 %v3361
    %v3460 = vunpack.c.h.b16 %v3361
    %v3461 = vunpack.c.l.b16 %v3362
    %v3462 = vunpack.c.h.b16 %v3362
    %v3463 = vunpack.c.l.b16 %v3363
    %v3464 = vunpack.c.h.b16 %v3363
    %v3465 = vunpack.c.l.b16 %v3364
    %v3466 = vunpack.c.h.b16 %v3364
    %v3467 = vunpack.c.l.b16 %v3365
    %v3468 = vunpack.c.h.b16 %v3365
    %v3469 = vunpack.c.l.b16 %v3366
    %v3470 = vunpack.c.h.b16 %v3366
    %v3471 = vunpack.c.l.b16 %v3367
    %v3472 = vunpack.c.h.b16 %v3367
    %v3473 = vunpack.c.l.b16 %v3368
    %v3474 = vunpack.c.h.b16 %v3368
    %v3475 = vunpack.c.l.b16 %v3369
    %v3476 = vunpack.c.h.b16 %v3369
    %v3477 = vunpack.c.l.b16 %v3370
    %v3478 = vunpack.c.h.b16 %v3370
    %v3479 = vpack.c.b16 %v3417, %v3415
    %v3480 = vpack.c.b16 %v3418, %v3416
    %v3481 = vpack.c.b16 %v3421, %v3419
    %v3482 = vpack.c.b16 %v3422, %v3420
    %v3483 = vpack.c.b16 %v3425, %v3423
    %v3484 = vpack.c.b16 %v3426, %v3424
    %v3485 = vpack.c.b16 %v3429, %v3427
    %v3486 = vpack.c.b16 %v3430, %v3428
    %v3487 = vpack.c.b16 %v3433, %v3431
    %v3488 = vpack.c.b16 %v3434, %v3432
    %v3489 = vpack.c.b16 %v3437, %v3435
    %v3490 = vpack.c.b16 %v3438, %v3436
    %v3491 = vpack.c.b16 %v3441, %v3439
    %v3492 = vpack.c.b16 %v3442, %v3440
    %v3493 = vpack.c.b16 %v3445, %v3443
    %v3494 = vpack.c.b16 %v3446, %v3444
    %v3495 = vpack.c.b16 %v3449, %v3447
    %v3496 = vpack.c.b16 %v3450, %v3448
    %v3497 = vpack.c.b16 %v3453, %v3451
    %v3498 = vpack.c.b16 %v3454, %v3452
    %v3499 = vpack.c.b16 %v3457, %v3455
    %v3500 = vpack.c.b16 %v3458, %v3456
    %v3501 = vpack.c.b16 %v3461, %v3459
    %v3502 = vpack.c.b16 %v3462, %v3460
    %v3503 = vpack.c.b16 %v3465, %v3463
    %v3504 = vpack.c.b16 %v3466, %v3464
    %v3505 = vpack.c.b16 %v3469, %v3467
    %v3506 = vpack.c.b16 %v3470, %v3468
    %v3507 = vpack.c.b16 %v3473, %v3471
    %v3508 = vpack.c.b16 %v3474, %v3472
    %v3509 = vpack.c.b16 %v3477, %v3475
    %v3510 = vpack.c.b16 %v3478, %v3476
    %3543 = vmatprep.subr.bf16.mxu0 %v3480
    %3544 = vmatpush1.bf16.msra.mxu0 %v3479
    %3545 = vmatprep.subr.bf16.mxu0 %v3482
    %3546 = vmatpush1.bf16.msra.mxu0 %v3481
    %3547 = vmatprep.subr.bf16.mxu0 %v3484
    %3548 = vmatpush1.bf16.msra.mxu0 %v3483
    %3549 = vmatprep.subr.bf16.mxu0 %v3486
    %3550 = vmatpush1.bf16.msra.mxu0 %v3485
    %3551 = vmatprep.subr.bf16.mxu0 %v3488
    %3552 = vmatpush1.bf16.msra.mxu0 %v3487
    %3553 = vmatprep.subr.bf16.mxu0 %v3490
    %3554 = vmatpush1.bf16.msra.mxu0 %v3489
    %3555 = vmatprep.subr.bf16.mxu0 %v3492
    %3556 = vmatpush1.bf16.msra.mxu0 %v3491
    %3557 = vmatprep.subr.bf16.mxu0 %v3494
    %3558 = vmatpush1.bf16.msra.mxu0 %v3493
    %3559 = vmatprep.subr.bf16.mxu0 %v3496
    %3560 = vmatpush1.bf16.msra.mxu0 %v3495
    %3561 = vmatprep.subr.bf16.mxu0 %v3498
    %3562 = vmatpush1.bf16.msra.mxu0 %v3497
    %3563 = vmatprep.subr.bf16.mxu0 %v3500
    %3564 = vmatpush1.bf16.msra.mxu0 %v3499
    %3565 = vmatprep.subr.bf16.mxu0 %v3502
    %3566 = vmatpush1.bf16.msra.mxu0 %v3501
    %3567 = vmatprep.subr.bf16.mxu0 %v3504
    %3568 = vmatpush1.bf16.msra.mxu0 %v3503
    %3569 = vmatprep.subr.bf16.mxu0 %v3506
    %3570 = vmatpush1.bf16.msra.mxu0 %v3505
    %3571 = vmatprep.subr.bf16.mxu0 %v3508
    %3572 = vmatpush1.bf16.msra.mxu0 %v3507
    %3573 = vmatprep.subr.bf16.mxu0 %v3510
    %3574 = vmatpush1.bf16.msra.mxu0 %v3509
    %3575 = vmatprep.mubr.bf16.mxu0 %v3338
    %3576 = vmatmul.mubr.bf16.gmra.mrb[0].mxu0 %v3337
    %v3577 = vpop.f32.mrb[0].mxu0
    %v3578 = vadd.f32 %v3376, %v3577
    %v3579 = vpop.f32.mrb[0].mxu0
    %v3580 = vadd.f32 %v3380, %v3579
    %v3581 = vpop.f32.mrb[0].mxu0
    %v3582 = vpop.f32.mrb[0].mxu0
    %3583 = vdwg.mxu0
    %v3584 = vmax.f32 %v3578, 0.0
    %v3585 = vmax.f32 %v3580, 0.0
    %v3586 = vld [vmem:[%s13] sm:$0xff]
    %v3587 = vld [vmem:[%s13 + $0x8] sm:$0xff]
    %v3588 = vld [vmem:[%s13 + $0x10] sm:$0xff]
    %v3589 = vld [vmem:[%s13 + $0x18] sm:$0xff]
    %v3590 = vld [vmem:[%s13 + $0x20] sm:$0xff]
    %v3591 = vld [vmem:[%s13 + $0x28] sm:$0xff]
    %v3592 = vld [vmem:[%s13 + $0x30] sm:$0xff]
    %v3593 = vld [vmem:[%s13 + $0x38] sm:$0xff]
    %v3594 = vld [vmem:[%s13 + $0x40] sm:$0xff]
    %v3595 = vld [vmem:[%s13 + $0x48] sm:$0xff]
    %v3596 = vld [vmem:[%s13 + $0x50] sm:$0xff]
    %v3597 = vld [vmem:[%s13 + $0x58] sm:$0xff]
    %v3598 = vld [vmem:[%s13 + $0x60] sm:$0xff]
    %v3599 = vld [vmem:[%s13 + $0x68] sm:$0xff]
    %v3600 = vld [vmem:[%s13 + $0x70] sm:$0xff]
    %v3601 = vld [vmem:[%s13 + $0x78] sm:$0xff]
    %v3602 = vld [vmem:[%s13 + $0x80] sm:$0xff]
    %v3603 = vld [vmem:[%s13 + $0x88] sm:$0xff]
    %v3604 = vld [vmem:[%s13 + $0x90] sm:$0xff]
    %v3605 = vld [vmem:[%s13 + $0x98] sm:$0xff]
    %v3606 = vld [vmem:[%s13 + $0xa0] sm:$0xff]
    %v3607 = vld [vmem:[%s13 + $0xa8] sm:$0xff]
    %v3608 = vld [vmem:[%s13 + $0xb0] sm:$0xff]
    %v3609 = vld [vmem:[%s13 + $0xb8] sm:$0xff]
    %v3610 = vld [vmem:[%s13 + $0xc0] sm:$0xff]
    %v3611 = vld [vmem:[%s13 + $0xc8] sm:$0xff]
    %v3612 = vld [vmem:[%s13 + $0xd0] sm:$0xff]
    %v3613 = vld [vmem:[%s13 + $0xd8] sm:$0xff]
    %v3614 = vld [vmem:[%s13 + $0xe0] sm:$0xff]
    %v3615 = vld [vmem:[%s13 + $0xe8] sm:$0xff]
    %v3616 = vld [vmem:[%s13 + $0xf0] sm:$0xff]
    %v3617 = vld [vmem:[%s13 + $0xf8] sm:$0xff]
    %v3618 = vld [vmem:[%s14] sm:$0x1]
    %v3620 = vlaneseq
    %v3621 = vshrl.u32 %v3620, 7
    %v3622 = vsub.s32 0, %v3621
    %v3623 = vrot.slane %v3618, %v3622
    %3625 = vmatprep.subr.mxu0 0.0
    %3626 = vmatpush1.msra.mxu0 %v3586
    %3627 = vmatprep.subr.mxu0 0.0
    %3628 = vmatpush1.msra.mxu0 %v3587
    %3629 = vmatprep.subr.mxu0 0.0
    %3630 = vmatpush1.msra.mxu0 %v3588
    %3631 = vmatprep.subr.mxu0 0.0
    %3632 = vmatpush1.msra.mxu0 %v3589
    %3633 = vmatprep.subr.mxu0 0.0
    %3634 = vmatpush1.msra.mxu0 %v3590
    %3635 = vmatprep.subr.mxu0 0.0
    %3636 = vmatpush1.msra.mxu0 %v3591
    %3637 = vmatprep.subr.mxu0 0.0
    %3638 = vmatpush1.msra.mxu0 %v3592
    %3639 = vmatprep.subr.mxu0 0.0
    %3640 = vmatpush1.msra.mxu0 %v3593
    %3641 = vmatprep.subr.mxu0 0.0
    %3642 = vmatpush1.msra.mxu0 %v3594
    %3643 = vmatprep.subr.mxu0 0.0
    %3644 = vmatpush1.msra.mxu0 %v3595
    %3645 = vmatprep.subr.mxu0 0.0
    %3646 = vmatpush1.msra.mxu0 %v3596
    %3647 = vmatprep.subr.mxu0 0.0
    %3648 = vmatpush1.msra.mxu0 %v3597
    %3649 = vmatprep.subr.mxu0 0.0
    %3650 = vmatpush1.msra.mxu0 %v3598
    %3651 = vmatprep.subr.mxu0 0.0
    %3652 = vmatpush1.msra.mxu0 %v3599
    %3653 = vmatprep.subr.mxu0 0.0
    %3654 = vmatpush1.msra.mxu0 %v3600
    %3655 = vmatprep.subr.mxu0 0.0
    %3656 = vmatpush1.msra.mxu0 %v3601
    %3657 = vmatprep.subr.mxu0 0.0
    %3658 = vmatpush1.msra.mxu0 %v3602
    %3659 = vmatprep.subr.mxu0 0.0
    %3660 = vmatpush1.msra.mxu0 %v3603
    %3661 = vmatprep.subr.mxu0 0.0
    %3662 = vmatpush1.msra.mxu0 %v3604
    %3663 = vmatprep.subr.mxu0 0.0
    %3664 = vmatpush1.msra.mxu0 %v3605
    %3665 = vmatprep.subr.mxu0 0.0
    %3666 = vmatpush1.msra.mxu0 %v3606
    %3667 = vmatprep.subr.mxu0 0.0
    %3668 = vmatpush1.msra.mxu0 %v3607
    %3669 = vmatprep.subr.mxu0 0.0
    %3670 = vmatpush1.msra.mxu0 %v3608
    %3671 = vmatprep.subr.mxu0 0.0
    %3672 = vmatpush1.msra.mxu0 %v3609
    %3673 = vmatprep.subr.mxu0 0.0
    %3674 = vmatpush1.msra.mxu0 %v3610
    %3675 = vmatprep.subr.mxu0 0.0
    %3676 = vmatpush1.msra.mxu0 %v3611
    %3677 = vmatprep.subr.mxu0 0.0
    %3678 = vmatpush1.msra.mxu0 %v3612
    %3679 = vmatprep.subr.mxu0 0.0
    %3680 = vmatpush1.msra.mxu0 %v3613
    %3681 = vmatprep.subr.mxu0 0.0
    %3682 = vmatpush1.msra.mxu0 %v3614
    %3683 = vmatprep.subr.mxu0 0.0
    %3684 = vmatpush1.msra.mxu0 %v3615
    %3685 = vmatprep.subr.mxu0 0.0
    %3686 = vmatpush1.msra.mxu0 %v3616
    %3687 = vmatprep.subr.mxu0 0.0
    %3688 = vmatpush1.msra.mxu0 %v3617
    %3689 = vmatprep.mubr.f32.mxu0 %v3585
    %3690 = vmatmul.mubr.f32.gmra.mrb[0].mxu0 %v3584
    %v3691 = vpop.f32.mrb[0].mxu0
    %v3692 = vadd.f32 %v3623, %v3691
    %v3693 = vpop.f32.mrb[0].mxu0
    %3694 = vdwg.mxu0
    %v3695 = vmax.f32 %v3692, 0.0
    %3696 = vst.msk [vmem:[%s15] sm:$0xff] %vm533, %v3695
    // Predicated region
    $region58: #{pallas_forward.1} parent=1 // pred_check
      _
    $region59: #{pallas_forward.1} parent=1 // pred_check_branch
      %3698 = sbr.rel (0) target = $region61
    $region60: #{pallas_forward.1} parent=1 // pred_region
      _
    $region61: #{pallas_forward.1} parent=1 // pred_fallthru
      _
    // Predicated region
    $region62: #{pallas_forward.1} parent=1 // pred_check
      _
    $region63: #{pallas_forward.1} parent=1 // pred_check_branch
      %3700 = sbr.rel (0) target = $region65
    $region64: #{pallas_forward.1} parent=1 // pred_region
      _
    $region65: #{pallas_forward.1} parent=1 // pred_fallthru
      _
  %3701 = vsyncmov [#allocation4]
  %s3702 = vpop.sfrf %3701
  %p3703 = scmp.eq.s32.totalorder %s3702, 0
  %p3704 = pneg %p3703
  %3706 = shalt.err (%p3704)

</llo_original>
